<compile_context>
chip_gen: v7x
topology: tpu7x:2x2x1
jax: 0.10.0
libtpu: 0.0.40
codegen_flags: <defaults>
</compile_context>

<pallas_src>
import functools

import jax
import jax.numpy as jnp
from jax.experimental import pallas as pl
from jax.experimental.pallas import tpu as pltpu

_TIME_BLOCK = 8
_VMEM_LIMIT_BYTES = 32 * 1024 * 1024


def _round_up(x, m):
    return (x + m - 1) // m * m


# ----------------------------------------------------------------------------
# Tiled matmul + bias kernel (used for the hoisted input projection and the
# final vocab projection).
# ----------------------------------------------------------------------------
def _matmul_bias_kernel(x_ref, w_ref, b_ref, o_ref):
    o_ref[...] = (
        jnp.dot(x_ref[...], w_ref[...], preferred_element_type=jnp.float32)
        + b_ref[...]
    ).astype(o_ref.dtype)


def matmul_bias(x, w, b, out_dtype=jnp.float32):
    """x: (M, K), w: (K, N), b: (1, N). N must be a multiple of 128."""
    M, K = x.shape
    N = w.shape[1]
    TM = 256 if M >= 256 else _round_up(M, 8)
    Mp = _round_up(M, TM)
    if Mp != M:
        x = jnp.pad(x, ((0, Mp - M), (0, 0)))
    TN = 256 if N % 256 == 0 else 128

    out = pl.pallas_call(
        _matmul_bias_kernel,
        out_shape=jax.ShapeDtypeStruct((Mp, N), out_dtype),
        grid_spec=pltpu.PrefetchScalarGridSpec(
            num_scalar_prefetch=0,
            grid=(Mp // TM, N // TN),
            in_specs=[
                pl.BlockSpec((TM, K), lambda i, j: (i, 0)),
                pl.BlockSpec((K, TN), lambda i, j: (0, j)),
                pl.BlockSpec((1, TN), lambda i, j: (0, j)),
            ],
            out_specs=pl.BlockSpec((TM, TN), lambda i, j: (i, j)),
        ),
        compiler_params=pltpu.CompilerParams(
            dimension_semantics=("parallel", "parallel"),
            vmem_limit_bytes=_VMEM_LIMIT_BYTES),
    )(x, w, b)
    return out[:M] if Mp != M else out


# ----------------------------------------------------------------------------
# Recurrent LSTM kernel: a block of TB timesteps per grid step.
# ----------------------------------------------------------------------------
def _lstm_recurrence_kernel(xg_ref, w_hh_ref, h0_ref, c0_ref, out_ref,
                            h_scr, c_scr):
    """xg_ref:  (TB, B, 4H) f32  precomputed x @ W_ih^T + (b_ih + b_hh)
       w_hh_ref:(H, 4H)     bf16 whole array, single VMEM buffer
       h0_ref:  (B, H)      f32  initial hidden (image features)
       c0_ref:  (B, H)      f32  initial cell (zeros)
       out_ref: (TB, B, H)  bf16 hidden outputs for this timestep block
       h_scr/c_scr: (B, H)  f32  recurrent state carried across grid steps."""
    tb = pl.program_id(0)

    @pl.when(tb == 0)
    def _():
        h_scr[...] = h0_ref[...]
        c_scr[...] = c0_ref[...]

    H = h_scr.shape[-1]
    TB = xg_ref.shape[0]

    def step(i, carry):
        h, c = carry
        gates = xg_ref[i] + jnp.dot(h.astype(jnp.bfloat16), w_hh_ref[...],
                                    preferred_element_type=jnp.float32)
        # PyTorch gate order: input, forget, cell (g), output.  H % 128 == 0
        # so each slice is lane-aligned (free view, no relayout).
        i_g = jax.nn.sigmoid(gates[:, 0 * H:1 * H])
        f_g = jax.nn.sigmoid(gates[:, 1 * H:2 * H])
        g_g = jnp.tanh(gates[:, 2 * H:3 * H])
        o_g = jax.nn.sigmoid(gates[:, 3 * H:4 * H])
        c = f_g * c + i_g * g_g
        h = o_g * jnp.tanh(c)
        out_ref[i] = h.astype(out_ref.dtype)
        return (h, c)

    h_fin, c_fin = jax.lax.fori_loop(0, TB, step,
                                     (h_scr[...], c_scr[...]), unroll=True)
    h_scr[...] = h_fin
    c_scr[...] = c_fin


def lstm_layer(xg, w_hh_t, h0, c0, tb):
    """xg: (T, B, 4H) f32 precomputed input gates; returns (T, B, H) bf16."""
    T, B, G = xg.shape
    H = G // 4
    return pl.pallas_call(
        _lstm_recurrence_kernel,
        out_shape=jax.ShapeDtypeStruct((T, B, H), jnp.bfloat16),
        grid_spec=pltpu.PrefetchScalarGridSpec(
            num_scalar_prefetch=0,
            grid=(T // tb,),
            in_specs=[
                pl.BlockSpec((tb, B, G), lambda t: (t, 0, 0)),
                # Constant operands: whole-array, single VMEM buffer
                # (avoids double-buffering weights every timestep block).
                pl.BlockSpec(memory_space=pltpu.MemorySpace.VMEM),   # w_hh
                pl.BlockSpec(memory_space=pltpu.MemorySpace.VMEM),   # h0
                pl.BlockSpec(memory_space=pltpu.MemorySpace.VMEM),   # c0
            ],
            out_specs=pl.BlockSpec((tb, B, H), lambda t: (t, 0, 0)),
            scratch_shapes=[
                pltpu.VMEM((B, H), jnp.float32),
                pltpu.VMEM((B, H), jnp.float32),
            ],
        ),
        compiler_params=pltpu.CompilerParams(
            dimension_semantics=("arbitrary",),   # sequential recurrence
            vmem_limit_bytes=_VMEM_LIMIT_BYTES),
    )(xg, w_hh_t, h0, c0)


# ----------------------------------------------------------------------------
# Parameter construction (matches the PyTorch module's init_weights).
# ----------------------------------------------------------------------------
def init_params(key, embed_size, hidden_size, vocab_size, num_layers):
    ks = jax.random.split(key, 2 + 4 * num_layers)
    params = {}
    params["embed_w"] = jax.random.uniform(
        ks[0], (vocab_size, embed_size), jnp.float32, -0.1, 0.1)
    params["linear_w"] = jax.random.uniform(
        ks[1], (vocab_size, hidden_size), jnp.float32, -0.1, 0.1)
    params["linear_b"] = jnp.zeros((vocab_size,), jnp.float32)
    bound = 1.0 / jnp.sqrt(hidden_size).astype(jnp.float32)
    layers = []
    for l in range(num_layers):
        in_sz = embed_size if l == 0 else hidden_size
        k0, k1, k2, k3 = ks[2 + 4 * l:2 + 4 * (l + 1)]
        layers.append({
            "w_ih": jax.random.uniform(k0, (4 * hidden_size, in_sz),
                                       jnp.float32, -bound, bound),
            "w_hh": jax.random.uniform(k1, (4 * hidden_size, hidden_size),
                                       jnp.float32, -bound, bound),
            "b_ih": jax.random.uniform(k2, (4 * hidden_size,),
                                       jnp.float32, -bound, bound),
            "b_hh": jax.random.uniform(k3, (4 * hidden_size,),
                                       jnp.float32, -bound, bound),
        })
    params["lstm"] = layers
    return params


def _prep_layer(lp, H, H_pad, in_dim, in_pad):
    """Pad per-gate blocks of the PyTorch-layout LSTM weights to H_pad and
    return transposed bf16 weights + fused f32 bias."""
    def pad_w(w, cols, cols_pad):
        w4 = w.reshape(4, H, cols)
        w4 = jnp.pad(w4, ((0, 0), (0, H_pad - H), (0, cols_pad - cols)))
        return w4.reshape(4 * H_pad, cols_pad)

    def pad_b(b):
        b4 = b.reshape(4, H)
        return jnp.pad(b4, ((0, 0), (0, H_pad - H))).reshape(4 * H_pad)

    w_ih_t = pad_w(lp["w_ih"], in_dim, in_pad).T.astype(jnp.bfloat16)
    w_hh_t = pad_w(lp["w_hh"], H, H_pad).T.astype(jnp.bfloat16)
    b = (pad_b(lp["b_ih"]) + pad_b(lp["b_hh"])).reshape(1, -1)
    return w_ih_t, w_hh_t, b.astype(jnp.float32)


# ----------------------------------------------------------------------------
# Forward pass (embed -> num_layers x LSTM -> linear), batch_first output.
# ----------------------------------------------------------------------------
@functools.partial(jax.jit, static_argnames=("num_layers",))
def lstm_forward(params, features, captions, num_layers):
    """features: (B, H) f32; captions: (B, T) int32. Returns (B, T-1, V) f32."""
    B, H = features.shape
    V, E = params["embed_w"].shape
    T = captions.shape[1] - 1

    TB = _TIME_BLOCK
    B_pad = _round_up(B, 8)
    H_pad = _round_up(H, 128)
    V_pad = _round_up(V, 128)
    T_pad = _round_up(T, TB)

    # Embedding lookup of captions[:, :-1] (gather; plain JAX glue),
    # then time-major + padded layout.
    emb = jnp.take(params["embed_w"], captions[:, :-1], axis=0)     # (B, T, E)
    x = jnp.transpose(emb, (1, 0, 2)).astype(jnp.float32)           # (T, B, E)
    x = jnp.pad(x, ((0, T_pad - T), (0, B_pad - B), (0, 0)))
    x2d = x.reshape(T_pad * B_pad, E).astype(jnp.bfloat16)

    # PyTorch module: h0[l] = features for every layer, c0 = zeros.
    h0 = jnp.pad(features.astype(jnp.float32),
                 ((0, B_pad - B), (0, H_pad - H)))
    c0 = jnp.zeros((B_pad, H_pad), jnp.float32)

    in_dim, in_pad = E, E
    h_all = None
    for l in range(num_layers):
        w_ih_t, w_hh_t, b = _prep_layer(params["lstm"][l], H, H_pad,
                                        in_dim, in_pad)
        # Hoisted input projection over the whole (padded) sequence.
        xg2d = matmul_bias(x2d, w_ih_t, b)            # (T_pad*B_pad, 4H_pad) f32
        xg = xg2d.reshape(T_pad, B_pad, 4 * H_pad)
        # Recurrence (only h @ W_hh + gate math per step).
        h_all = lstm_layer(xg, w_hh_t, h0, c0, TB)    # (T_pad, B_pad, H_pad) bf16
        x2d = h_all.reshape(T_pad * B_pad, H_pad)
        in_dim, in_pad = H, H_pad

    # Final vocab projection, batch-first.
    h_bf = jnp.transpose(h_all, (1, 0, 2))            # (B_pad, T_pad, H_pad)
    w_l = jnp.pad(params["linear_w"], ((0, V_pad - V), (0, H_pad - H)))
    b_l = jnp.pad(params["linear_b"], (0, V_pad - V)).reshape(1, -1)
    logits2d = matmul_bias(h_bf.reshape(B_pad * T_pad, H_pad),
                           w_l.T.astype(jnp.bfloat16),
                           b_l.astype(jnp.float32))   # (B_pad*T_pad, V_pad) f32
    logits = logits2d.reshape(B_pad, T_pad, V_pad)
    return logits[:B, :T, :V]


# ----------------------------------------------------------------------------
# Pure-JAX reference with the same mixed-precision math (bf16 matmul inputs,
# f32 accumulation and gate math) for verification.
# ----------------------------------------------------------------------------
def reference_forward(params, features, captions, num_layers):
    B, H = features.shape
    T = captions.shape[1] - 1
    emb = jnp.take(params["embed_w"], captions[:, :-1], axis=0)
    x = jnp.transpose(emb, (1, 0, 2)).astype(jnp.float32)           # (T, B, E)
    x = x.astype(jnp.bfloat16)
    h0 = features.astype(jnp.float32)
    c0 = jnp.zeros((B, H), jnp.float32)

    for l in range(num_layers):
        lp = params["lstm"][l]
        w_ih_t = lp["w_ih"].T.astype(jnp.bfloat16)
        w_hh_t = lp["w_hh"].T.astype(jnp.bfloat16)
        b = (lp["b_ih"] + lp["b_hh"]).astype(jnp.float32)
        in_dim = x.shape[-1]
        xg = (jnp.dot(x.reshape(T * B, in_dim), w_ih_t,
                      preferred_element_type=jnp.float32)
              .reshape(T, B, 4 * H) + b)

        def step(carry, xg_t):
            h, c = carry
            g = xg_t + jnp.dot(h.astype(jnp.bfloat16), w_hh_t,
                               preferred_element_type=jnp.float32)
            i_g = jax.nn.sigmoid(g[:, 0 * H:1 * H])
            f_g = jax.nn.sigmoid(g[:, 1 * H:2 * H])
            g_g = jnp.tanh(g[:, 2 * H:3 * H])
            o_g = jax.nn.sigmoid(g[:, 3 * H:4 * H])
            c = f_g * c + i_g * g_g
            h = o_g * jnp.tanh(c)
            return (h, c), h.astype(jnp.bfloat16)

        _, x = jax.lax.scan(step, (h0, c0), xg)                     # (T, B, H) bf16

    h_bf = jnp.transpose(x, (1, 0, 2))                              # (B, T, H)
    w_l = params["linear_w"].T.astype(jnp.bfloat16)
    logits = (jnp.dot(h_bf.reshape(B * T, H), w_l,
                      preferred_element_type=jnp.float32)
              + params["linear_b"]).reshape(B, T, -1)
    return logits


if __name__ == "__main__":
    embed_size, hidden_size, vocab_size, num_layers = 32, 32, 64, 2
    batch, seq_len = 2, 8   # captions length 8 -> 7 decode steps

    key = jax.random.PRNGKey(0)
    k_par, k_feat, k_cap = jax.random.split(key, 3)
    params = init_params(k_par, embed_size, hidden_size, vocab_size, num_layers)

    features = jax.random.normal(k_feat, (batch, hidden_size), jnp.float32)
    captions = jax.random.randint(k_cap, (batch, seq_len), 0, vocab_size,
                                  dtype=jnp.int32)

    out = lstm_forward(params, features, captions, num_layers=num_layers)
    out = jax.block_until_ready(out)

    ref = reference_forward(params, features, captions, num_layers)
    assert out.shape == (batch, seq_len - 1, vocab_size), out.shape
    # Mixed-precision (bf16 matmul inputs, f32 accumulation) on both paths;
    # loose tolerance covers bf16 rounding-boundary effects in the recurrence.
    assert jnp.allclose(out, ref, rtol=2e-2, atol=2e-2), \
        float(jnp.max(jnp.abs(out - ref)))

    print("KERNEL_OK")
</pallas_src>

<mosaic_0001>
module attributes {stable_mosaic.version = 11 : i64} {
  func.func @_matmul_bias_kernel(%arg0: i32, %arg1: i32, %arg2: memref<64x128xbf16, #tpu.memory_space<vmem>>, %arg3: memref<128x256xbf16, #tpu.memory_space<vmem>>, %arg4: memref<1x256xf32, #tpu.memory_space<vmem>>, %arg5: memref<64x256xf32, #tpu.memory_space<vmem>>) attributes {dimension_semantics = [#tpu.dimension_semantics<parallel>, #tpu.dimension_semantics<parallel>], iteration_bounds = array<i64: 1, 2>, scalar_prefetch = 0 : i64, scratch_operands = 0 : i64, tpu.core_type = #tpu.core_type<tc>, window_params = [{transform_indices = @transform_0, window_bounds = array<i64: 64, 128>}, {transform_indices = @transform_1, window_bounds = array<i64: 128, 256>}, {transform_indices = @transform_2, window_bounds = array<i64: 1, 256>}, {transform_indices = @transform_3, window_bounds = array<i64: 64, 256>}]} {
    %c0 = arith.constant 0 : index
    %c0_0 = arith.constant 0 : index
    %0 = vector.load %arg2[%c0, %c0_0] : memref<64x128xbf16, #tpu.memory_space<vmem>>, vector<64x128xbf16>
    %c0_1 = arith.constant 0 : index
    %c0_2 = arith.constant 0 : index
    %1 = vector.load %arg3[%c0_1, %c0_2] : memref<128x256xbf16, #tpu.memory_space<vmem>>, vector<128x256xbf16>
    %cst = arith.constant dense<0.000000e+00> : vector<64x256xf32>
    %2 = tpu.matmul %0, %1, %cst {dimension_numbers = #tpu.dot_dimension_numbers<[1], [0], [0], [1], [0, 0, 1, 1], [], []>} : vector<64x128xbf16>, vector<128x256xbf16>, vector<64x256xf32> -> vector<64x256xf32>
    %c0_3 = arith.constant 0 : index
    %c0_4 = arith.constant 0 : index
    %3 = vector.load %arg4[%c0_3, %c0_4] : memref<1x256xf32, #tpu.memory_space<vmem>>, vector<1x256xf32>
    %4 = vector.broadcast %3 : vector<1x256xf32> to vector<64x256xf32>
    %5 = arith.addf %2, %4 : vector<64x256xf32>
    %c0_5 = arith.constant 0 : index
    %c0_6 = arith.constant 0 : index
    %6 = vector.load %arg5[%c0_5, %c0_6] : memref<64x256xf32, #tpu.memory_space<vmem>>, vector<64x256xf32>
    tpu.vector_store %arg5[%c0_5, %c0_6], %5 {strides = array<i32>} : memref<64x256xf32, #tpu.memory_space<vmem>>, vector<64x256xf32>,
    return
  }
  func.func @transform_0(%arg0: i32, %arg1: i32) -> (i32, i32) {
    %c0_i32 = arith.constant 0 : i32
    %c0_i32_0 = arith.constant 0 : i32
    return %arg0, %c0_i32 : i32, i32
  }
  func.func @transform_1(%arg0: i32, %arg1: i32) -> (i32, i32) {
    %c0_i32 = arith.constant 0 : i32
    %c0_i32_0 = arith.constant 0 : i32
    return %c0_i32, %arg1 : i32, i32
  }
  func.func @transform_2(%arg0: i32, %arg1: i32) -> (i32, i32) {
    %c0_i32 = arith.constant 0 : i32
    %c0_i32_0 = arith.constant 0 : i32
    return %c0_i32, %arg1 : i32, i32
  }
  func.func @transform_3(%arg0: i32, %arg1: i32) -> (i32, i32) {
    %c0_i32 = arith.constant 0 : i32
    return %arg0, %arg1 : i32, i32
  }
}

module attributes {stable_mosaic.version = 11 : i64} {
  func.func @_matmul_bias_kernel(%arg0: i32, %arg1: i32, %arg2: memref<64x32xbf16, #tpu.memory_space<vmem>>, %arg3: memref<32x256xbf16, #tpu.memory_space<vmem>>, %arg4: memref<1x256xf32, #tpu.memory_space<vmem>>, %arg5: memref<64x256xf32, #tpu.memory_space<vmem>>) attributes {dimension_semantics = [#tpu.dimension_semantics<parallel>, #tpu.dimension_semantics<parallel>], iteration_bounds = array<i64: 1, 2>, scalar_prefetch = 0 : i64, scratch_operands = 0 : i64, tpu.core_type = #tpu.core_type<tc>, window_params = [{transform_indices = @transform_0, window_bounds = array<i64: 64, 32>}, {transform_indices = @transform_1, window_bounds = array<i64: 32, 256>}, {transform_indices = @transform_2, window_bounds = array<i64: 1, 256>}, {transform_indices = @transform_3, window_bounds = array<i64: 64, 256>}]} {
    %c0 = arith.constant 0 : index
    %c0_0 = arith.constant 0 : index
    %0 = vector.load %arg2[%c0, %c0_0] : memref<64x32xbf16, #tpu.memory_space<vmem>>, vector<64x32xbf16>
    %c0_1 = arith.constant 0 : index
    %c0_2 = arith.constant 0 : index
    %1 = vector.load %arg3[%c0_1, %c0_2] : memref<32x256xbf16, #tpu.memory_space<vmem>>, vector<32x256xbf16>
    %cst = arith.constant dense<0.000000e+00> : vector<64x256xf32>
    %2 = tpu.matmul %0, %1, %cst {dimension_numbers = #tpu.dot_dimension_numbers<[1], [0], [0], [1], [0, 0, 1, 1], [], []>} : vector<64x32xbf16>, vector<32x256xbf16>, vector<64x256xf32> -> vector<64x256xf32>
    %c0_3 = arith.constant 0 : index
    %c0_4 = arith.constant 0 : index
    %3 = vector.load %arg4[%c0_3, %c0_4] : memref<1x256xf32, #tpu.memory_space<vmem>>, vector<1x256xf32>
    %4 = vector.broadcast %3 : vector<1x256xf32> to vector<64x256xf32>
    %5 = arith.addf %2, %4 : vector<64x256xf32>
    %c0_5 = arith.constant 0 : index
    %c0_6 = arith.constant 0 : index
    %6 = vector.load %arg5[%c0_5, %c0_6] : memref<64x256xf32, #tpu.memory_space<vmem>>, vector<64x256xf32>
    tpu.vector_store %arg5[%c0_5, %c0_6], %5 {strides = array<i32>} : memref<64x256xf32, #tpu.memory_space<vmem>>, vector<64x256xf32>,
    return
  }
  func.func @transform_0(%arg0: i32, %arg1: i32) -> (i32, i32) {
    %c0_i32 = arith.constant 0 : i32
    %c0_i32_0 = arith.constant 0 : i32
    return %arg0, %c0_i32 : i32, i32
  }
  func.func @transform_1(%arg0: i32, %arg1: i32) -> (i32, i32) {
    %c0_i32 = arith.constant 0 : i32
    %c0_i32_0 = arith.constant 0 : i32
    return %c0_i32, %arg1 : i32, i32
  }
  func.func @transform_2(%arg0: i32, %arg1: i32) -> (i32, i32) {
    %c0_i32 = arith.constant 0 : i32
    %c0_i32_0 = arith.constant 0 : i32
    return %c0_i32, %arg1 : i32, i32
  }
  func.func @transform_3(%arg0: i32, %arg1: i32) -> (i32, i32) {
    %c0_i32 = arith.constant 0 : i32
    return %arg0, %arg1 : i32, i32
  }
}

module attributes {stable_mosaic.version = 11 : i64} {
  func.func @_lstm_recurrence_kernel(%arg0: i32, %arg1: memref<8x8x512xf32, #tpu.memory_space<vmem>>, %arg2: memref<128x512xbf16, #tpu.memory_space<vmem>>, %arg3: memref<8x128xf32, #tpu.memory_space<vmem>>, %arg4: memref<8x128xf32, #tpu.memory_space<vmem>>, %arg5: memref<8x8x128xbf16, #tpu.memory_space<vmem>>, %arg6: memref<8x128xf32, #tpu.memory_space<vmem>>, %arg7: memref<8x128xf32, #tpu.memory_space<vmem>>) attributes {dimension_semantics = [#tpu.dimension_semantics<arbitrary>], iteration_bounds = array<i64: 1>, scalar_prefetch = 0 : i64, scratch_operands = 2 : i64, tpu.core_type = #tpu.core_type<tc>, window_params = [{transform_indices = @transform_0, window_bounds = array<i64: 8, 8, 512>}, {pipeline_mode = #tpu.pipeline_mode<synchronous>, transform_indices = @transform_1, window_bounds = array<i64: 128, 512>}, {pipeline_mode = #tpu.pipeline_mode<synchronous>, transform_indices = @transform_2, window_bounds = array<i64: 8, 128>}, {pipeline_mode = #tpu.pipeline_mode<synchronous>, transform_indices = @transform_3, window_bounds = array<i64: 8, 128>}, {transform_indices = @transform_4, window_bounds = array<i64: 8, 8, 128>}]} {
    %c0_i32 = arith.constant 0 : i32
    %0 = arith.cmpi eq, %arg0, %c0_i32 : i32
    %1 = arith.extui %0 : i1 to i32
    %c0_i32_0 = arith.constant 0 : i32
    %2 = arith.cmpi ne, %1, %c0_i32_0 : i32
    scf.if %2 {
      %c0_88 = arith.constant 0 : index
      %c0_89 = arith.constant 0 : index
      %303 = vector.load %arg3[%c0_88, %c0_89] : memref<8x128xf32, #tpu.memory_space<vmem>>, vector<8x128xf32>
      %c0_90 = arith.constant 0 : index
      %c0_91 = arith.constant 0 : index
      %304 = vector.load %arg6[%c0_90, %c0_91] : memref<8x128xf32, #tpu.memory_space<vmem>>, vector<8x128xf32>
      tpu.vector_store %arg6[%c0_90, %c0_91], %303 {strides = array<i32>} : memref<8x128xf32, #tpu.memory_space<vmem>>, vector<8x128xf32>,
      %c0_92 = arith.constant 0 : index
      %c0_93 = arith.constant 0 : index
      %305 = vector.load %arg4[%c0_92, %c0_93] : memref<8x128xf32, #tpu.memory_space<vmem>>, vector<8x128xf32>
      %c0_94 = arith.constant 0 : index
      %c0_95 = arith.constant 0 : index
      %306 = vector.load %arg7[%c0_94, %c0_95] : memref<8x128xf32, #tpu.memory_space<vmem>>, vector<8x128xf32>
      tpu.vector_store %arg7[%c0_94, %c0_95], %305 {strides = array<i32>} : memref<8x128xf32, #tpu.memory_space<vmem>>, vector<8x128xf32>,
    } else {
    }
    %c0 = arith.constant 0 : index
    %c0_1 = arith.constant 0 : index
    %3 = vector.load %arg6[%c0, %c0_1] : memref<8x128xf32, #tpu.memory_space<vmem>>, vector<8x128xf32>
    %c0_2 = arith.constant 0 : index
    %c0_3 = arith.constant 0 : index
    %4 = vector.load %arg7[%c0_2, %c0_3] : memref<8x128xf32, #tpu.memory_space<vmem>>, vector<8x128xf32>
    %c0_i32_4 = arith.constant 0 : i32
    %5 = arith.index_cast %c0_i32_4 : i32 to index
    %c0_5 = arith.constant 0 : index
    %c0_6 = arith.constant 0 : index
    %6 = vector.load %arg1[%5, %c0_5, %c0_6] : memref<8x8x512xf32, #tpu.memory_space<vmem>>, vector<1x8x512xf32>
    %7 = vector.shape_cast %6 : vector<1x8x512xf32> to vector<8x512xf32>
    %8 = arith.truncf %3 : vector<8x128xf32> to vector<8x128xbf16>
    %c0_7 = arith.constant 0 : index
    %c0_8 = arith.constant 0 : index
    %9 = vector.load %arg2[%c0_7, %c0_8] : memref<128x512xbf16, #tpu.memory_space<vmem>>, vector<128x512xbf16>
    %cst = arith.constant dense<0.000000e+00> : vector<8x512xf32>
    %10 = tpu.matmul %8, %9, %cst {dimension_numbers = #tpu.dot_dimension_numbers<[1], [0], [0], [1], [0, 0, 1, 1], [], []>} : vector<8x128xbf16>, vector<128x512xbf16>, vector<8x512xf32> -> vector<8x512xf32>
    %11 = arith.addf %7, %10 : vector<8x512xf32>
    %12 = vector.extract_strided_slice %11 {offsets = [0, 0], sizes = [8, 128], strides = [1, 1]} : vector<8x512xf32> to vector<8x128xf32>
    %13 = arith.negf %12 : vector<8x128xf32>
    %14 = math.exp %13 : vector<8x128xf32>
    %cst_9 = arith.constant 1.000000e+00 : f32
    %15 = vector.broadcast %cst_9 : f32 to vector<8x128xf32>
    %16 = arith.addf %15, %14 : vector<8x128xf32>
    %17 = arith.divf %15, %16 : vector<8x128xf32>
    %18 = vector.extract_strided_slice %11 {offsets = [0, 128], sizes = [8, 128], strides = [1, 1]} : vector<8x512xf32> to vector<8x128xf32>
    %19 = arith.negf %18 : vector<8x128xf32>
    %20 = math.exp %19 : vector<8x128xf32>
    %cst_10 = arith.constant 1.000000e+00 : f32
    %21 = vector.broadcast %cst_10 : f32 to vector<8x128xf32>
    %22 = arith.addf %21, %20 : vector<8x128xf32>
    %23 = arith.divf %21, %22 : vector<8x128xf32>
    %24 = vector.extract_strided_slice %11 {offsets = [0, 256], sizes = [8, 128], strides = [1, 1]} : vector<8x512xf32> to vector<8x128xf32>
    %25 = math.tanh %24 : vector<8x128xf32>
    %26 = vector.extract_strided_slice %11 {offsets = [0, 384], sizes = [8, 128], strides = [1, 1]} : vector<8x512xf32> to vector<8x128xf32>
    %27 = arith.negf %26 : vector<8x128xf32>
    %28 = math.exp %27 : vector<8x128xf32>
    %cst_11 = arith.constant 1.000000e+00 : f32
    %29 = vector.broadcast %cst_11 : f32 to vector<8x128xf32>
    %30 = arith.addf %29, %28 : vector<8x128xf32>
    %31 = arith.divf %29, %30 : vector<8x128xf32>
    %32 = arith.mulf %23, %4 : vector<8x128xf32>
    %33 = arith.mulf %17, %25 : vector<8x128xf32>
    %34 = arith.addf %32, %33 : vector<8x128xf32>
    %35 = math.tanh %34 : vector<8x128xf32>
    %36 = arith.mulf %31, %35 : vector<8x128xf32>
    %37 = arith.truncf %36 : vector<8x128xf32> to vector<8x128xbf16>
    %38 = arith.index_cast %c0_i32_4 : i32 to index
    %c0_12 = arith.constant 0 : index
    %c0_13 = arith.constant 0 : index
    %39 = vector.load %arg5[%38, %c0_12, %c0_13] : memref<8x8x128xbf16, #tpu.memory_space<vmem>>, vector<1x8x128xbf16>
    %40 = vector.shape_cast %39 : vector<1x8x128xbf16> to vector<8x128xbf16>
    %41 = vector.shape_cast %37 : vector<8x128xbf16> to vector<1x8x128xbf16>
    tpu.vector_store %arg5[%38, %c0_12, %c0_13], %41 {strides = array<i32>} : memref<8x8x128xbf16, #tpu.memory_space<vmem>>, vector<1x8x128xbf16>,
    %c1_i32 = arith.constant 1 : i32
    %42 = arith.index_cast %c1_i32 : i32 to index
    %c0_14 = arith.constant 0 : index
    %c0_15 = arith.constant 0 : index
    %43 = vector.load %arg1[%42, %c0_14, %c0_15] : memref<8x8x512xf32, #tpu.memory_space<vmem>>, vector<1x8x512xf32>
    %44 = vector.shape_cast %43 : vector<1x8x512xf32> to vector<8x512xf32>
    %45 = arith.truncf %36 : vector<8x128xf32> to vector<8x128xbf16>
    %c0_16 = arith.constant 0 : index
    %c0_17 = arith.constant 0 : index
    %46 = vector.load %arg2[%c0_16, %c0_17] : memref<128x512xbf16, #tpu.memory_space<vmem>>, vector<128x512xbf16>
    %cst_18 = arith.constant dense<0.000000e+00> : vector<8x512xf32>
    %47 = tpu.matmul %45, %46, %cst_18 {dimension_numbers = #tpu.dot_dimension_numbers<[1], [0], [0], [1], [0, 0, 1, 1], [], []>} : vector<8x128xbf16>, vector<128x512xbf16>, vector<8x512xf32> -> vector<8x512xf32>
    %48 = arith.addf %44, %47 : vector<8x512xf32>
    %49 = vector.extract_strided_slice %48 {offsets = [0, 0], sizes = [8, 128], strides = [1, 1]} : vector<8x512xf32> to vector<8x128xf32>
    %50 = arith.negf %49 : vector<8x128xf32>
    %51 = math.exp %50 : vector<8x128xf32>
    %cst_19 = arith.constant 1.000000e+00 : f32
    %52 = vector.broadcast %cst_19 : f32 to vector<8x128xf32>
    %53 = arith.addf %52, %51 : vector<8x128xf32>
    %54 = arith.divf %52, %53 : vector<8x128xf32>
    %55 = vector.extract_strided_slice %48 {offsets = [0, 128], sizes = [8, 128], strides = [1, 1]} : vector<8x512xf32> to vector<8x128xf32>
    %56 = arith.negf %55 : vector<8x128xf32>
    %57 = math.exp %56 : vector<8x128xf32>
    %cst_20 = arith.constant 1.000000e+00 : f32
    %58 = vector.broadcast %cst_20 : f32 to vector<8x128xf32>
    %59 = arith.addf %58, %57 : vector<8x128xf32>
    %60 = arith.divf %58, %59 : vector<8x128xf32>
    %61 = vector.extract_strided_slice %48 {offsets = [0, 256], sizes = [8, 128], strides = [1, 1]} : vector<8x512xf32> to vector<8x128xf32>
    %62 = math.tanh %61 : vector<8x128xf32>
    %63 = vector.extract_strided_slice %48 {offsets = [0, 384], sizes = [8, 128], strides = [1, 1]} : vector<8x512xf32> to vector<8x128xf32>
    %64 = arith.negf %63 : vector<8x128xf32>
    %65 = math.exp %64 : vector<8x128xf32>
    %cst_21 = arith.constant 1.000000e+00 : f32
    %66 = vector.broadcast %cst_21 : f32 to vector<8x128xf32>
    %67 = arith.addf %66, %65 : vector<8x128xf32>
    %68 = arith.divf %66, %67 : vector<8x128xf32>
    %69 = arith.mulf %60, %34 : vector<8x128xf32>
    %70 = arith.mulf %54, %62 : vector<8x128xf32>
    %71 = arith.addf %69, %70 : vector<8x128xf32>
    %72 = math.tanh %71 : vector<8x128xf32>
    %73 = arith.mulf %68, %72 : vector<8x128xf32>
    %74 = arith.truncf %73 : vector<8x128xf32> to vector<8x128xbf16>
    %75 = arith.index_cast %c1_i32 : i32 to index
    %c0_22 = arith.constant 0 : index
    %c0_23 = arith.constant 0 : index
    %76 = vector.load %arg5[%75, %c0_22, %c0_23] : memref<8x8x128xbf16, #tpu.memory_space<vmem>>, vector<1x8x128xbf16>
    %77 = vector.shape_cast %76 : vector<1x8x128xbf16> to vector<8x128xbf16>
    %78 = vector.shape_cast %74 : vector<8x128xbf16> to vector<1x8x128xbf16>
    tpu.vector_store %arg5[%75, %c0_22, %c0_23], %78 {strides = array<i32>} : memref<8x8x128xbf16, #tpu.memory_space<vmem>>, vector<1x8x128xbf16>,
    %c2_i32 = arith.constant 2 : i32
    %79 = arith.index_cast %c2_i32 : i32 to index
    %c0_24 = arith.constant 0 : index
    %c0_25 = arith.constant 0 : index
    %80 = vector.load %arg1[%79, %c0_24, %c0_25] : memref<8x8x512xf32, #tpu.memory_space<vmem>>, vector<1x8x512xf32>
    %81 = vector.shape_cast %80 : vector<1x8x512xf32> to vector<8x512xf32>
    %82 = arith.truncf %73 : vector<8x128xf32> to vector<8x128xbf16>
    %c0_26 = arith.constant 0 : index
    %c0_27 = arith.constant 0 : index
    %83 = vector.load %arg2[%c0_26, %c0_27] : memref<128x512xbf16, #tpu.memory_space<vmem>>, vector<128x512xbf16>
    %cst_28 = arith.constant dense<0.000000e+00> : vector<8x512xf32>
    %84 = tpu.matmul %82, %83, %cst_28 {dimension_numbers = #tpu.dot_dimension_numbers<[1], [0], [0], [1], [0, 0, 1, 1], [], []>} : vector<8x128xbf16>, vector<128x512xbf16>, vector<8x512xf32> -> vector<8x512xf32>
    %85 = arith.addf %81, %84 : vector<8x512xf32>
    %86 = vector.extract_strided_slice %85 {offsets = [0, 0], sizes = [8, 128], strides = [1, 1]} : vector<8x512xf32> to vector<8x128xf32>
    %87 = arith.negf %86 : vector<8x128xf32>
    %88 = math.exp %87 : vector<8x128xf32>
    %cst_29 = arith.constant 1.000000e+00 : f32
    %89 = vector.broadcast %cst_29 : f32 to vector<8x128xf32>
    %90 = arith.addf %89, %88 : vector<8x128xf32>
    %91 = arith.divf %89, %90 : vector<8x128xf32>
    %92 = vector.extract_strided_slice %85 {offsets = [0, 128], sizes = [8, 128], strides = [1, 1]} : vector<8x512xf32> to vector<8x128xf32>
    %93 = arith.negf %92 : vector<8x128xf32>
    %94 = math.exp %93 : vector<8x128xf32>
    %cst_30 = arith.constant 1.000000e+00 : f32
    %95 = vector.broadcast %cst_30 : f32 to vector<8x128xf32>
    %96 = arith.addf %95, %94 : vector<8x128xf32>
    %97 = arith.divf %95, %96 : vector<8x128xf32>
    %98 = vector.extract_strided_slice %85 {offsets = [0, 256], sizes = [8, 128], strides = [1, 1]} : vector<8x512xf32> to vector<8x128xf32>
    %99 = math.tanh %98 : vector<8x128xf32>
    %100 = vector.extract_strided_slice %85 {offsets = [0, 384], sizes = [8, 128], strides = [1, 1]} : vector<8x512xf32> to vector<8x128xf32>
    %101 = arith.negf %100 : vector<8x128xf32>
    %102 = math.exp %101 : vector<8x128xf32>
    %cst_31 = arith.constant 1.000000e+00 : f32
    %103 = vector.broadcast %cst_31 : f32 to vector<8x128xf32>
    %104 = arith.addf %103, %102 : vector<8x128xf32>
    %105 = arith.divf %103, %104 : vector<8x128xf32>
    %106 = arith.mulf %97, %71 : vector<8x128xf32>
    %107 = arith.mulf %91, %99 : vector<8x128xf32>
    %108 = arith.addf %106, %107 : vector<8x128xf32>
    %109 = math.tanh %108 : vector<8x128xf32>
    %110 = arith.mulf %105, %109 : vector<8x128xf32>
    %111 = arith.truncf %110 : vector<8x128xf32> to vector<8x128xbf16>
    %112 = arith.index_cast %c2_i32 : i32 to index
    %c0_32 = arith.constant 0 : index
    %c0_33 = arith.constant 0 : index
    %113 = vector.load %arg5[%112, %c0_32, %c0_33] : memref<8x8x128xbf16, #tpu.memory_space<vmem>>, vector<1x8x128xbf16>
    %114 = vector.shape_cast %113 : vector<1x8x128xbf16> to vector<8x128xbf16>
    %115 = vector.shape_cast %111 : vector<8x128xbf16> to vector<1x8x128xbf16>
    tpu.vector_store %arg5[%112, %c0_32, %c0_33], %115 {strides = array<i32>} : memref<8x8x128xbf16, #tpu.memory_space<vmem>>, vector<1x8x128xbf16>,
    %c3_i32 = arith.constant 3 : i32
    %116 = arith.index_cast %c3_i32 : i32 to index
    %c0_34 = arith.constant 0 : index
    %c0_35 = arith.constant 0 : index
    %117 = vector.load %arg1[%116, %c0_34, %c0_35] : memref<8x8x512xf32, #tpu.memory_space<vmem>>, vector<1x8x512xf32>
    %118 = vector.shape_cast %117 : vector<1x8x512xf32> to vector<8x512xf32>
    %119 = arith.truncf %110 : vector<8x128xf32> to vector<8x128xbf16>
    %c0_36 = arith.constant 0 : index
    %c0_37 = arith.constant 0 : index
    %120 = vector.load %arg2[%c0_36, %c0_37] : memref<128x512xbf16, #tpu.memory_space<vmem>>, vector<128x512xbf16>
    %cst_38 = arith.constant dense<0.000000e+00> : vector<8x512xf32>
    %121 = tpu.matmul %119, %120, %cst_38 {dimension_numbers = #tpu.dot_dimension_numbers<[1], [0], [0], [1], [0, 0, 1, 1], [], []>} : vector<8x128xbf16>, vector<128x512xbf16>, vector<8x512xf32> -> vector<8x512xf32>
    %122 = arith.addf %118, %121 : vector<8x512xf32>
    %123 = vector.extract_strided_slice %122 {offsets = [0, 0], sizes = [8, 128], strides = [1, 1]} : vector<8x512xf32> to vector<8x128xf32>
    %124 = arith.negf %123 : vector<8x128xf32>
    %125 = math.exp %124 : vector<8x128xf32>
    %cst_39 = arith.constant 1.000000e+00 : f32
    %126 = vector.broadcast %cst_39 : f32 to vector<8x128xf32>
    %127 = arith.addf %126, %125 : vector<8x128xf32>
    %128 = arith.divf %126, %127 : vector<8x128xf32>
    %129 = vector.extract_strided_slice %122 {offsets = [0, 128], sizes = [8, 128], strides = [1, 1]} : vector<8x512xf32> to vector<8x128xf32>
    %130 = arith.negf %129 : vector<8x128xf32>
    %131 = math.exp %130 : vector<8x128xf32>
    %cst_40 = arith.constant 1.000000e+00 : f32
    %132 = vector.broadcast %cst_40 : f32 to vector<8x128xf32>
    %133 = arith.addf %132, %131 : vector<8x128xf32>
    %134 = arith.divf %132, %133 : vector<8x128xf32>
    %135 = vector.extract_strided_slice %122 {offsets = [0, 256], sizes = [8, 128], strides = [1, 1]} : vector<8x512xf32> to vector<8x128xf32>
    %136 = math.tanh %135 : vector<8x128xf32>
    %137 = vector.extract_strided_slice %122 {offsets = [0, 384], sizes = [8, 128], strides = [1, 1]} : vector<8x512xf32> to vector<8x128xf32>
    %138 = arith.negf %137 : vector<8x128xf32>
    %139 = math.exp %138 : vector<8x128xf32>
    %cst_41 = arith.constant 1.000000e+00 : f32
    %140 = vector.broadcast %cst_41 : f32 to vector<8x128xf32>
    %141 = arith.addf %140, %139 : vector<8x128xf32>
    %142 = arith.divf %140, %141 : vector<8x128xf32>
    %143 = arith.mulf %134, %108 : vector<8x128xf32>
    %144 = arith.mulf %128, %136 : vector<8x128xf32>
    %145 = arith.addf %143, %144 : vector<8x128xf32>
    %146 = math.tanh %145 : vector<8x128xf32>
    %147 = arith.mulf %142, %146 : vector<8x128xf32>
    %148 = arith.truncf %147 : vector<8x128xf32> to vector<8x128xbf16>
    %149 = arith.index_cast %c3_i32 : i32 to index
    %c0_42 = arith.constant 0 : index
    %c0_43 = arith.constant 0 : index
    %150 = vector.load %arg5[%149, %c0_42, %c0_43] : memref<8x8x128xbf16, #tpu.memory_space<vmem>>, vector<1x8x128xbf16>
    %151 = vector.shape_cast %150 : vector<1x8x128xbf16> to vector<8x128xbf16>
    %152 = vector.shape_cast %148 : vector<8x128xbf16> to vector<1x8x128xbf16>
    tpu.vector_store %arg5[%149, %c0_42, %c0_43], %152 {strides = array<i32>} : memref<8x8x128xbf16, #tpu.memory_space<vmem>>, vector<1x8x128xbf16>,
    %c4_i32 = arith.constant 4 : i32
    %153 = arith.index_cast %c4_i32 : i32 to index
    %c0_44 = arith.constant 0 : index
    %c0_45 = arith.constant 0 : index
    %154 = vector.load %arg1[%153, %c0_44, %c0_45] : memref<8x8x512xf32, #tpu.memory_space<vmem>>, vector<1x8x512xf32>
    %155 = vector.shape_cast %154 : vector<1x8x512xf32> to vector<8x512xf32>
    %156 = arith.truncf %147 : vector<8x128xf32> to vector<8x128xbf16>
    %c0_46 = arith.constant 0 : index
    %c0_47 = arith.constant 0 : index
    %157 = vector.load %arg2[%c0_46, %c0_47] : memref<128x512xbf16, #tpu.memory_space<vmem>>, vector<128x512xbf16>
    %cst_48 = arith.constant dense<0.000000e+00> : vector<8x512xf32>
    %158 = tpu.matmul %156, %157, %cst_48 {dimension_numbers = #tpu.dot_dimension_numbers<[1], [0], [0], [1], [0, 0, 1, 1], [], []>} : vector<8x128xbf16>, vector<128x512xbf16>, vector<8x512xf32> -> vector<8x512xf32>
    %159 = arith.addf %155, %158 : vector<8x512xf32>
    %160 = vector.extract_strided_slice %159 {offsets = [0, 0], sizes = [8, 128], strides = [1, 1]} : vector<8x512xf32> to vector<8x128xf32>
    %161 = arith.negf %160 : vector<8x128xf32>
    %162 = math.exp %161 : vector<8x128xf32>
    %cst_49 = arith.constant 1.000000e+00 : f32
    %163 = vector.broadcast %cst_49 : f32 to vector<8x128xf32>
    %164 = arith.addf %163, %162 : vector<8x128xf32>
    %165 = arith.divf %163, %164 : vector<8x128xf32>
    %166 = vector.extract_strided_slice %159 {offsets = [0, 128], sizes = [8, 128], strides = [1, 1]} : vector<8x512xf32> to vector<8x128xf32>
    %167 = arith.negf %166 : vector<8x128xf32>
    %168 = math.exp %167 : vector<8x128xf32>
    %cst_50 = arith.constant 1.000000e+00 : f32
    %169 = vector.broadcast %cst_50 : f32 to vector<8x128xf32>
    %170 = arith.addf %169, %168 : vector<8x128xf32>
    %171 = arith.divf %169, %170 : vector<8x128xf32>
    %172 = vector.extract_strided_slice %159 {offsets = [0, 256], sizes = [8, 128], strides = [1, 1]} : vector<8x512xf32> to vector<8x128xf32>
    %173 = math.tanh %172 : vector<8x128xf32>
    %174 = vector.extract_strided_slice %159 {offsets = [0, 384], sizes = [8, 128], strides = [1, 1]} : vector<8x512xf32> to vector<8x128xf32>
    %175 = arith.negf %174 : vector<8x128xf32>
    %176 = math.exp %175 : vector<8x128xf32>
    %cst_51 = arith.constant 1.000000e+00 : f32
    %177 = vector.broadcast %cst_51 : f32 to vector<8x128xf32>
    %178 = arith.addf %177, %176 : vector<8x128xf32>
    %179 = arith.divf %177, %178 : vector<8x128xf32>
    %180 = arith.mulf %171, %145 : vector<8x128xf32>
    %181 = arith.mulf %165, %173 : vector<8x128xf32>
    %182 = arith.addf %180, %181 : vector<8x128xf32>
    %183 = math.tanh %182 : vector<8x128xf32>
    %184 = arith.mulf %179, %183 : vector<8x128xf32>
    %185 = arith.truncf %184 : vector<8x128xf32> to vector<8x128xbf16>
    %186 = arith.index_cast %c4_i32 : i32 to index
    %c0_52 = arith.constant 0 : index
    %c0_53 = arith.constant 0 : index
    %187 = vector.load %arg5[%186, %c0_52, %c0_53] : memref<8x8x128xbf16, #tpu.memory_space<vmem>>, vector<1x8x128xbf16>
    %188 = vector.shape_cast %187 : vector<1x8x128xbf16> to vector<8x128xbf16>
    %189 = vector.shape_cast %185 : vector<8x128xbf16> to vector<1x8x128xbf16>
    tpu.vector_store %arg5[%186, %c0_52, %c0_53], %189 {strides = array<i32>} : memref<8x8x128xbf16, #tpu.memory_space<vmem>>, vector<1x8x128xbf16>,
    %c5_i32 = arith.constant 5 : i32
    %190 = arith.index_cast %c5_i32 : i32 to index
    %c0_54 = arith.constant 0 : index
    %c0_55 = arith.constant 0 : index
    %191 = vector.load %arg1[%190, %c0_54, %c0_55] : memref<8x8x512xf32, #tpu.memory_space<vmem>>, vector<1x8x512xf32>
    %192 = vector.shape_cast %191 : vector<1x8x512xf32> to vector<8x512xf32>
    %193 = arith.truncf %184 : vector<8x128xf32> to vector<8x128xbf16>
    %c0_56 = arith.constant 0 : index
    %c0_57 = arith.constant 0 : index
    %194 = vector.load %arg2[%c0_56, %c0_57] : memref<128x512xbf16, #tpu.memory_space<vmem>>, vector<128x512xbf16>
    %cst_58 = arith.constant dense<0.000000e+00> : vector<8x512xf32>
    %195 = tpu.matmul %193, %194, %cst_58 {dimension_numbers = #tpu.dot_dimension_numbers<[1], [0], [0], [1], [0, 0, 1, 1], [], []>} : vector<8x128xbf16>, vector<128x512xbf16>, vector<8x512xf32> -> vector<8x512xf32>
    %196 = arith.addf %192, %195 : vector<8x512xf32>
    %197 = vector.extract_strided_slice %196 {offsets = [0, 0], sizes = [8, 128], strides = [1, 1]} : vector<8x512xf32> to vector<8x128xf32>
    %198 = arith.negf %197 : vector<8x128xf32>
    %199 = math.exp %198 : vector<8x128xf32>
    %cst_59 = arith.constant 1.000000e+00 : f32
    %200 = vector.broadcast %cst_59 : f32 to vector<8x128xf32>
    %201 = arith.addf %200, %199 : vector<8x128xf32>
    %202 = arith.divf %200, %201 : vector<8x128xf32>
    %203 = vector.extract_strided_slice %196 {offsets = [0, 128], sizes = [8, 128], strides = [1, 1]} : vector<8x512xf32> to vector<8x128xf32>
    %204 = arith.negf %203 : vector<8x128xf32>
    %205 = math.exp %204 : vector<8x128xf32>
    %cst_60 = arith.constant 1.000000e+00 : f32
    %206 = vector.broadcast %cst_60 : f32 to vector<8x128xf32>
    %207 = arith.addf %206, %205 : vector<8x128xf32>
    %208 = arith.divf %206, %207 : vector<8x128xf32>
    %209 = vector.extract_strided_slice %196 {offsets = [0, 256], sizes = [8, 128], strides = [1, 1]} : vector<8x512xf32> to vector<8x128xf32>
    %210 = math.tanh %209 : vector<8x128xf32>
    %211 = vector.extract_strided_slice %196 {offsets = [0, 384], sizes = [8, 128], strides = [1, 1]} : vector<8x512xf32> to vector<8x128xf32>
    %212 = arith.negf %211 : vector<8x128xf32>
    %213 = math.exp %212 : vector<8x128xf32>
    %cst_61 = arith.constant 1.000000e+00 : f32
    %214 = vector.broadcast %cst_61 : f32 to vector<8x128xf32>
    %215 = arith.addf %214, %213 : vector<8x128xf32>
    %216 = arith.divf %214, %215 : vector<8x128xf32>
    %217 = arith.mulf %208, %182 : vector<8x128xf32>
    %218 = arith.mulf %202, %210 : vector<8x128xf32>
    %219 = arith.addf %217, %218 : vector<8x128xf32>
    %220 = math.tanh %219 : vector<8x128xf32>
    %221 = arith.mulf %216, %220 : vector<8x128xf32>
    %222 = arith.truncf %221 : vector<8x128xf32> to vector<8x128xbf16>
    %223 = arith.index_cast %c5_i32 : i32 to index
    %c0_62 = arith.constant 0 : index
    %c0_63 = arith.constant 0 : index
    %224 = vector.load %arg5[%223, %c0_62, %c0_63] : memref<8x8x128xbf16, #tpu.memory_space<vmem>>, vector<1x8x128xbf16>
    %225 = vector.shape_cast %224 : vector<1x8x128xbf16> to vector<8x128xbf16>
    %226 = vector.shape_cast %222 : vector<8x128xbf16> to vector<1x8x128xbf16>
    tpu.vector_store %arg5[%223, %c0_62, %c0_63], %226 {strides = array<i32>} : memref<8x8x128xbf16, #tpu.memory_space<vmem>>, vector<1x8x128xbf16>,
    %c6_i32 = arith.constant 6 : i32
    %227 = arith.index_cast %c6_i32 : i32 to index
    %c0_64 = arith.constant 0 : index
    %c0_65 = arith.constant 0 : index
    %228 = vector.load %arg1[%227, %c0_64, %c0_65] : memref<8x8x512xf32, #tpu.memory_space<vmem>>, vector<1x8x512xf32>
    %229 = vector.shape_cast %228 : vector<1x8x512xf32> to vector<8x512xf32>
    %230 = arith.truncf %221 : vector<8x128xf32> to vector<8x128xbf16>
    %c0_66 = arith.constant 0 : index
    %c0_67 = arith.constant 0 : index
    %231 = vector.load %arg2[%c0_66, %c0_67] : memref<128x512xbf16, #tpu.memory_space<vmem>>, vector<128x512xbf16>
    %cst_68 = arith.constant dense<0.000000e+00> : vector<8x512xf32>
    %232 = tpu.matmul %230, %231, %cst_68 {dimension_numbers = #tpu.dot_dimension_numbers<[1], [0], [0], [1], [0, 0, 1, 1], [], []>} : vector<8x128xbf16>, vector<128x512xbf16>, vector<8x512xf32> -> vector<8x512xf32>
    %233 = arith.addf %229, %232 : vector<8x512xf32>
    %234 = vector.extract_strided_slice %233 {offsets = [0, 0], sizes = [8, 128], strides = [1, 1]} : vector<8x512xf32> to vector<8x128xf32>
    %235 = arith.negf %234 : vector<8x128xf32>
    %236 = math.exp %235 : vector<8x128xf32>
    %cst_69 = arith.constant 1.000000e+00 : f32
    %237 = vector.broadcast %cst_69 : f32 to vector<8x128xf32>
    %238 = arith.addf %237, %236 : vector<8x128xf32>
    %239 = arith.divf %237, %238 : vector<8x128xf32>
    %240 = vector.extract_strided_slice %233 {offsets = [0, 128], sizes = [8, 128], strides = [1, 1]} : vector<8x512xf32> to vector<8x128xf32>
    %241 = arith.negf %240 : vector<8x128xf32>
    %242 = math.exp %241 : vector<8x128xf32>
    %cst_70 = arith.constant 1.000000e+00 : f32
    %243 = vector.broadcast %cst_70 : f32 to vector<8x128xf32>
    %244 = arith.addf %243, %242 : vector<8x128xf32>
    %245 = arith.divf %243, %244 : vector<8x128xf32>
    %246 = vector.extract_strided_slice %233 {offsets = [0, 256], sizes = [8, 128], strides = [1, 1]} : vector<8x512xf32> to vector<8x128xf32>
    %247 = math.tanh %246 : vector<8x128xf32>
    %248 = vector.extract_strided_slice %233 {offsets = [0, 384], sizes = [8, 128], strides = [1, 1]} : vector<8x512xf32> to vector<8x128xf32>
    %249 = arith.negf %248 : vector<8x128xf32>
    %250 = math.exp %249 : vector<8x128xf32>
    %cst_71 = arith.constant 1.000000e+00 : f32
    %251 = vector.broadcast %cst_71 : f32 to vector<8x128xf32>
    %252 = arith.addf %251, %250 : vector<8x128xf32>
    %253 = arith.divf %251, %252 : vector<8x128xf32>
    %254 = arith.mulf %245, %219 : vector<8x128xf32>
    %255 = arith.mulf %239, %247 : vector<8x128xf32>
    %256 = arith.addf %254, %255 : vector<8x128xf32>
    %257 = math.tanh %256 : vector<8x128xf32>
    %258 = arith.mulf %253, %257 : vector<8x128xf32>
    %259 = arith.truncf %258 : vector<8x128xf32> to vector<8x128xbf16>
    %260 = arith.index_cast %c6_i32 : i32 to index
    %c0_72 = arith.constant 0 : index
    %c0_73 = arith.constant 0 : index
    %261 = vector.load %arg5[%260, %c0_72, %c0_73] : memref<8x8x128xbf16, #tpu.memory_space<vmem>>, vector<1x8x128xbf16>
    %262 = vector.shape_cast %261 : vector<1x8x128xbf16> to vector<8x128xbf16>
    %263 = vector.shape_cast %259 : vector<8x128xbf16> to vector<1x8x128xbf16>
    tpu.vector_store %arg5[%260, %c0_72, %c0_73], %263 {strides = array<i32>} : memref<8x8x128xbf16, #tpu.memory_space<vmem>>, vector<1x8x128xbf16>,
    %c7_i32 = arith.constant 7 : i32
    %264 = arith.index_cast %c7_i32 : i32 to index
    %c0_74 = arith.constant 0 : index
    %c0_75 = arith.constant 0 : index
    %265 = vector.load %arg1[%264, %c0_74, %c0_75] : memref<8x8x512xf32, #tpu.memory_space<vmem>>, vector<1x8x512xf32>
    %266 = vector.shape_cast %265 : vector<1x8x512xf32> to vector<8x512xf32>
    %267 = arith.truncf %258 : vector<8x128xf32> to vector<8x128xbf16>
    %c0_76 = arith.constant 0 : index
    %c0_77 = arith.constant 0 : index
    %268 = vector.load %arg2[%c0_76, %c0_77] : memref<128x512xbf16, #tpu.memory_space<vmem>>, vector<128x512xbf16>
    %cst_78 = arith.constant dense<0.000000e+00> : vector<8x512xf32>
    %269 = tpu.matmul %267, %268, %cst_78 {dimension_numbers = #tpu.dot_dimension_numbers<[1], [0], [0], [1], [0, 0, 1, 1], [], []>} : vector<8x128xbf16>, vector<128x512xbf16>, vector<8x512xf32> -> vector<8x512xf32>
    %270 = arith.addf %266, %269 : vector<8x512xf32>
    %271 = vector.extract_strided_slice %270 {offsets = [0, 0], sizes = [8, 128], strides = [1, 1]} : vector<8x512xf32> to vector<8x128xf32>
    %272 = arith.negf %271 : vector<8x128xf32>
    %273 = math.exp %272 : vector<8x128xf32>
    %cst_79 = arith.constant 1.000000e+00 : f32
    %274 = vector.broadcast %cst_79 : f32 to vector<8x128xf32>
    %275 = arith.addf %274, %273 : vector<8x128xf32>
    %276 = arith.divf %274, %275 : vector<8x128xf32>
    %277 = vector.extract_strided_slice %270 {offsets = [0, 128], sizes = [8, 128], strides = [1, 1]} : vector<8x512xf32> to vector<8x128xf32>
    %278 = arith.negf %277 : vector<8x128xf32>
    %279 = math.exp %278 : vector<8x128xf32>
    %cst_80 = arith.constant 1.000000e+00 : f32
    %280 = vector.broadcast %cst_80 : f32 to vector<8x128xf32>
    %281 = arith.addf %280, %279 : vector<8x128xf32>
    %282 = arith.divf %280, %281 : vector<8x128xf32>
    %283 = vector.extract_strided_slice %270 {offsets = [0, 256], sizes = [8, 128], strides = [1, 1]} : vector<8x512xf32> to vector<8x128xf32>
    %284 = math.tanh %283 : vector<8x128xf32>
    %285 = vector.extract_strided_slice %270 {offsets = [0, 384], sizes = [8, 128], strides = [1, 1]} : vector<8x512xf32> to vector<8x128xf32>
    %286 = arith.negf %285 : vector<8x128xf32>
    %287 = math.exp %286 : vector<8x128xf32>
    %cst_81 = arith.constant 1.000000e+00 : f32
    %288 = vector.broadcast %cst_81 : f32 to vector<8x128xf32>
    %289 = arith.addf %288, %287 : vector<8x128xf32>
    %290 = arith.divf %288, %289 : vector<8x128xf32>
    %291 = arith.mulf %282, %256 : vector<8x128xf32>
    %292 = arith.mulf %276, %284 : vector<8x128xf32>
    %293 = arith.addf %291, %292 : vector<8x128xf32>
    %294 = math.tanh %293 : vector<8x128xf32>
    %295 = arith.mulf %290, %294 : vector<8x128xf32>
    %296 = arith.truncf %295 : vector<8x128xf32> to vector<8x128xbf16>
    %297 = arith.index_cast %c7_i32 : i32 to index
    %c0_82 = arith.constant 0 : index
    %c0_83 = arith.constant 0 : index
    %298 = vector.load %arg5[%297, %c0_82, %c0_83] : memref<8x8x128xbf16, #tpu.memory_space<vmem>>, vector<1x8x128xbf16>
    %299 = vector.shape_cast %298 : vector<1x8x128xbf16> to vector<8x128xbf16>
    %300 = vector.shape_cast %296 : vector<8x128xbf16> to vector<1x8x128xbf16>
    tpu.vector_store %arg5[%297, %c0_82, %c0_83], %300 {strides = array<i32>} : memref<8x8x128xbf16, #tpu.memory_space<vmem>>, vector<1x8x128xbf16>,
    %c8_i32 = arith.constant 8 : i32
    %c0_84 = arith.constant 0 : index
    %c0_85 = arith.constant 0 : index
    %301 = vector.load %arg6[%c0_84, %c0_85] : memref<8x128xf32, #tpu.memory_space<vmem>>, vector<8x128xf32>
    tpu.vector_store %arg6[%c0_84, %c0_85], %295 {strides = array<i32>} : memref<8x128xf32, #tpu.memory_space<vmem>>, vector<8x128xf32>,
    %c0_86 = arith.constant 0 : index
    %c0_87 = arith.constant 0 : index
    %302 = vector.load %arg7[%c0_86, %c0_87] : memref<8x128xf32, #tpu.memory_space<vmem>>, vector<8x128xf32>
    tpu.vector_store %arg7[%c0_86, %c0_87], %293 {strides = array<i32>} : memref<8x128xf32, #tpu.memory_space<vmem>>, vector<8x128xf32>,
    return
  }
  func.func @transform_0(%arg0: i32) -> (i32, i32, i32) {
    %c0_i32 = arith.constant 0 : i32
    %c0_i32_0 = arith.constant 0 : i32
    %c0_i32_1 = arith.constant 0 : i32
    return %arg0, %c0_i32, %c0_i32_0 : i32, i32, i32
  }
  func.func @transform_1(%arg0: i32) -> (i32, i32) {
    %c0_i32 = arith.constant 0 : i32
    %c0_i32_0 = arith.constant 0 : i32
    %c0_i32_1 = arith.constant 0 : i32
    return %c0_i32, %c0_i32_0 : i32, i32
  }
  func.func @transform_2(%arg0: i32) -> (i32, i32) {
    %c0_i32 = arith.constant 0 : i32
    %c0_i32_0 = arith.constant 0 : i32
    %c0_i32_1 = arith.constant 0 : i32
    return %c0_i32, %c0_i32_0 : i32, i32
  }
  func.func @transform_3(%arg0: i32) -> (i32, i32) {
    %c0_i32 = arith.constant 0 : i32
    %c0_i32_0 = arith.constant 0 : i32
    %c0_i32_1 = arith.constant 0 : i32
    return %c0_i32, %c0_i32_0 : i32, i32
  }
  func.func @transform_4(%arg0: i32) -> (i32, i32, i32) {
    %c0_i32 = arith.constant 0 : i32
    %c0_i32_0 = arith.constant 0 : i32
    %c0_i32_1 = arith.constant 0 : i32
    return %arg0, %c0_i32, %c0_i32_0 : i32, i32, i32
  }
}

module attributes {stable_mosaic.version = 11 : i64} {
  func.func @_matmul_bias_kernel(%arg0: i32, %arg1: i32, %arg2: memref<64x128xbf16, #tpu.memory_space<vmem>>, %arg3: memref<128x128xbf16, #tpu.memory_space<vmem>>, %arg4: memref<1x128xf32, #tpu.memory_space<vmem>>, %arg5: memref<64x128xf32, #tpu.memory_space<vmem>>) attributes {dimension_semantics = [#tpu.dimension_semantics<parallel>, #tpu.dimension_semantics<parallel>], iteration_bounds = array<i64: 1, 1>, scalar_prefetch = 0 : i64, scratch_operands = 0 : i64, tpu.core_type = #tpu.core_type<tc>, window_params = [{transform_indices = @transform_0, window_bounds = array<i64: 64, 128>}, {transform_indices = @transform_1, window_bounds = array<i64: 128, 128>}, {transform_indices = @transform_2, window_bounds = array<i64: 1, 128>}, {transform_indices = @transform_3, window_bounds = array<i64: 64, 128>}]} {
    %c0 = arith.constant 0 : index
    %c0_0 = arith.constant 0 : index
    %0 = vector.load %arg2[%c0, %c0_0] : memref<64x128xbf16, #tpu.memory_space<vmem>>, vector<64x128xbf16>
    %c0_1 = arith.constant 0 : index
    %c0_2 = arith.constant 0 : index
    %1 = vector.load %arg3[%c0_1, %c0_2] : memref<128x128xbf16, #tpu.memory_space<vmem>>, vector<128x128xbf16>
    %cst = arith.constant dense<0.000000e+00> : vector<64x128xf32>
    %2 = tpu.matmul %0, %1, %cst {dimension_numbers = #tpu.dot_dimension_numbers<[1], [0], [0], [1], [0, 0, 1, 1], [], []>} : vector<64x128xbf16>, vector<128x128xbf16>, vector<64x128xf32> -> vector<64x128xf32>
    %c0_3 = arith.constant 0 : index
    %c0_4 = arith.constant 0 : index
    %3 = vector.load %arg4[%c0_3, %c0_4] : memref<1x128xf32, #tpu.memory_space<vmem>>, vector<1x128xf32>
    %4 = vector.broadcast %3 : vector<1x128xf32> to vector<64x128xf32>
    %5 = arith.addf %2, %4 : vector<64x128xf32>
    %c0_5 = arith.constant 0 : index
    %c0_6 = arith.constant 0 : index
    %6 = vector.load %arg5[%c0_5, %c0_6] : memref<64x128xf32, #tpu.memory_space<vmem>>, vector<64x128xf32>
    tpu.vector_store %arg5[%c0_5, %c0_6], %5 {strides = array<i32>} : memref<64x128xf32, #tpu.memory_space<vmem>>, vector<64x128xf32>,
    return
  }
  func.func @transform_0(%arg0: i32, %arg1: i32) -> (i32, i32) {
    %c0_i32 = arith.constant 0 : i32
    %c0_i32_0 = arith.constant 0 : i32
    return %arg0, %c0_i32 : i32, i32
  }
  func.func @transform_1(%arg0: i32, %arg1: i32) -> (i32, i32) {
    %c0_i32 = arith.constant 0 : i32
    %c0_i32_0 = arith.constant 0 : i32
    return %c0_i32, %arg1 : i32, i32
  }
  func.func @transform_2(%arg0: i32, %arg1: i32) -> (i32, i32) {
    %c0_i32 = arith.constant 0 : i32
    %c0_i32_0 = arith.constant 0 : i32
    return %c0_i32, %arg1 : i32, i32
  }
  func.func @transform_3(%arg0: i32, %arg1: i32) -> (i32, i32) {
    %c0_i32 = arith.constant 0 : i32
    return %arg0, %arg1 : i32, i32
  }
}

</mosaic_0001>

<llo_original>
// kernel: lstm_forward.5
$region0: #{lstm_forward.5}
  #allocation0 [shape = 'u32[]', space=smem, size = 0x4, offset = 0x4, fixed_abs, tag = 'smem constant byte address 0x4 - core index']
  #allocation1 [shape = 'u32[144,128]{1,0:T(1,128)}', space=vmem, size = 0x12000, scoped, tag = 'internal scratch']
  %s0 = inlined_call_operand.vmem [shape: bf16[64,32], index: 0, kind: input, shape index: {}]
  %s1 = inlined_call_operand.vmem [shape: bf16[32,512], index: 1, kind: input, shape index: {}]
  %s2 = inlined_call_operand.vmem [shape: f32[1,512], index: 2, kind: input, shape index: {}]
  %s3 = inlined_call_operand.vmem [shape: f32[64,512], index: 3, kind: output, shape index: {}]
  %s4 = sld [smem:[#allocation0]]
  $region102: #{lstm_forward.5} parent=0
    _
  %s6 = ssub.s32 1, %s4
  %s7 = scalar_select 0, %s6, %s4
  $region1: #{lstm_forward.5} parent=0
    #allocation2 [shape = 'u8[32768]{0}', space=vmem, size = 0x8000, scoped, tag = 'input window, operand 1']
    #allocation3 [shape = 'u8[131072]{0}', space=vmem, size = 0x20000, scoped, tag = 'output window, operand 0']
    loop: start=0, step=1, limit=4
    $region2: #{lstm_forward.5} parent=1 // loop_pre_header
      _
    $region3: #{lstm_forward.5} parent=1 // loop_header
      %s9 = sphi 0, %s13
      %p10 = scmp.ge.s32.totalorder %s9, 4
      %s16 = sphi 0, %s28
      %s17 = sphi 0, %s24
      %s18 = sphi 0, %s16
      %s19 = sphi 0, %s17
      %s20 = sphi 0, %s18
      %s21 = sphi 0, %s19
      %s31 = sphi 0, %s33
      %s34 = sphi 0, %s31
      %s35 = sphi 0, %s34
      %s51 = sphi 0, %s35
      %s57 = sphi 0, %s59
      %s60 = sphi 0, %s57
      %s61 = sphi 0, %s60
      %s77 = sphi 0, %s61
      %s83 = sphi 0, %s85
      %s86 = sphi 0, %s83
      %s87 = sphi 0, %s86
      %s103 = sphi 0, %s87
      %s111 = sphi 0, %s113
      %s114 = sphi 0, %s111
      %s115 = sphi 0, %s114
      %s131 = sphi 0, %s115
    $region4: #{lstm_forward.5} parent=1 // loop_header_branch
      %12 = sbr.rel (%p10) target = $region8
    $region5: #{lstm_forward.5} parent=1 // loop_body
      %s14 = ssub.s32 %s9, 1
      %s15 = ssub.s32 %s9, 2
      %s22 = sadd.s32 1, %s17
      %p23 = scmp.ge.s32.totalorder %s22, 2
      %s24 = scalar_select %p23, 0, %s22
      %s25 = sadd.s32 1, %s16
      %s26 = scalar_select %p23, %s25, %s16
      %p27 = scmp.ge.s32.totalorder %s26, 1
      %s28 = scalar_select %p27, 0, %s26
      %s29 = ssub.s32 %s16, %s28
      %p30 = scmp.eq.s32.totalorder %s29, 0
      %s32 = sadd.s32 %s31, 1
      %s33 = scalar_select %p30, %s31, %s32
      %p36 = pneg %p30
      %p37 = scmp.eq.s32.totalorder %s9, 1
      %p38 = por %p36, %p37
      %p39 = scmp.ne.s32.totalorder %s31, %s34
      %p40 = scmp.eq.s32.totalorder %s9, 0
      %p41 = por %p39, %p40
      %p42 = scmp.ne.s32.totalorder %s31, %s34
      %p43 = scmp.eq.s32.totalorder %s14, 1
      %p44 = por %p42, %p43
      %p45 = scmp.ne.s32.totalorder %s34, %s35
      %p46 = scmp.eq.s32.totalorder %s14, 0
      %p47 = por %p45, %p46
      %p48 = scmp.ne.s32.totalorder %s34, %s35
      %p49 = scmp.eq.s32.totalorder %s15, 1
      %p50 = por %p48, %p49
      %p52 = scmp.ne.s32.totalorder %s35, %s51
      %p53 = scmp.eq.s32.totalorder %s15, 0
      %p54 = por %p52, %p53
      %s55 = ssub.s32 %s17, %s24
      %p56 = scmp.eq.s32.totalorder %s55, 0
      %s58 = sadd.s32 %s57, 1
      %s59 = scalar_select %p56, %s57, %s58
      %p62 = pneg %p56
      %p63 = scmp.eq.s32.totalorder %s9, 1
      %p64 = por %p62, %p63
      %p65 = scmp.ne.s32.totalorder %s57, %s60
      %p66 = scmp.eq.s32.totalorder %s9, 0
      %p67 = por %p65, %p66
      %p68 = scmp.ne.s32.totalorder %s57, %s60
      %p69 = scmp.eq.s32.totalorder %s14, 1
      %p70 = por %p68, %p69
      %p71 = scmp.ne.s32.totalorder %s60, %s61
      %p72 = scmp.eq.s32.totalorder %s14, 0
      %p73 = por %p71, %p72
      %p74 = scmp.ne.s32.totalorder %s60, %s61
      %p75 = scmp.eq.s32.totalorder %s15, 1
      %p76 = por %p74, %p75
      %p78 = scmp.ne.s32.totalorder %s61, %s77
      %p79 = scmp.eq.s32.totalorder %s15, 0
      %p80 = por %p78, %p79
      %s81 = ssub.s32 %s17, %s24
      %p82 = scmp.eq.s32.totalorder %s81, 0
      %s84 = sadd.s32 %s83, 1
      %s85 = scalar_select %p82, %s83, %s84
      %p88 = pneg %p82
      %p89 = scmp.eq.s32.totalorder %s9, 1
      %p90 = por %p88, %p89
      %p91 = scmp.ne.s32.totalorder %s83, %s86
      %p92 = scmp.eq.s32.totalorder %s9, 0
      %p93 = por %p91, %p92
      %p94 = scmp.ne.s32.totalorder %s83, %s86
      %p95 = scmp.eq.s32.totalorder %s14, 1
      %p96 = por %p94, %p95
      %p97 = scmp.ne.s32.totalorder %s86, %s87
      %p98 = scmp.eq.s32.totalorder %s14, 0
      %p99 = por %p97, %p98
      %p100 = scmp.ne.s32.totalorder %s86, %s87
      %p101 = scmp.eq.s32.totalorder %s15, 1
      %p102 = por %p100, %p101
      %p104 = scmp.ne.s32.totalorder %s87, %s103
      %p105 = scmp.eq.s32.totalorder %s15, 0
      %p106 = por %p104, %p105
      %s107 = ssub.s32 %s16, %s28
      %s108 = ssub.s32 %s17, %s24
      %s109 = sor.u32 %s107, %s108
      %p110 = scmp.eq.s32.totalorder %s109, 0
      %s112 = sadd.s32 %s111, 1
      %s113 = scalar_select %p110, %s111, %s112
      %p116 = pneg %p110
      %p117 = scmp.eq.s32.totalorder %s9, 1
      %p118 = por %p116, %p117
      %p119 = scmp.ne.s32.totalorder %s111, %s114
      %p120 = scmp.eq.s32.totalorder %s9, 0
      %p121 = por %p119, %p120
      %p122 = scmp.ne.s32.totalorder %s111, %s114
      %p123 = scmp.eq.s32.totalorder %s14, 1
      %p124 = por %p122, %p123
      %p125 = scmp.ne.s32.totalorder %s114, %s115
      %p126 = scmp.eq.s32.totalorder %s14, 0
      %p127 = por %p125, %p126
      %p128 = scmp.ne.s32.totalorder %s114, %s115
      %p129 = scmp.eq.s32.totalorder %s15, 1
      %p130 = por %p128, %p129
      %p132 = scmp.ne.s32.totalorder %s115, %s131
      %p133 = scmp.eq.s32.totalorder %s15, 0
      %p134 = por %p132, %p133
      %p135 = scmp.le.s32.totalorder 1, %s9
      %p136 = scmp.lt.s32.totalorder %s9, 3
      %p137 = pnand %p135, %p136
      %p138 = pneg %p137
      // Predicated region
      $region9: #{lstm_forward.5} parent=5 // pred_check
        _
      $region10: #{lstm_forward.5} parent=5 // pred_check_branch
        %140 = sbr.rel (%p137) target = $region12
      $region11: #{lstm_forward.5} parent=5 // pred_region
        %s141 = ssub.s32 %s9, 1
        // Predicated region
        $region13: #{lstm_forward.5} parent=11 // pred_check
          %p142 = pneg %p47
        $region14: #{lstm_forward.5} parent=11 // pred_check_branch
          %144 = sbr.rel (%p142) target = $region16
        $region15: #{lstm_forward.5} parent=11 // pred_region
          %s145 = smul.u32 8, %s18
          %p146 = scmp.lt.s32.totalorder %s145, 7
          %s147 = scalar_select %p146, %s145, 7
          %s148 = smul.addr %s147, 4
          %s149 = scalar_lea.vmem %s0, %s148
          %s150 = smul.u32 8, %s18
        $region16: #{lstm_forward.5} parent=11 // pred_fallthru
          _
      $region12: #{lstm_forward.5} parent=5 // pred_fallthru
        _
      %p151 = scmp.lt.s32.totalorder %s9, 2
      // Predicated region
      $region17: #{lstm_forward.5} parent=5 // pred_check
        %p152 = pneg %p151
      $region18: #{lstm_forward.5} parent=5 // pred_check_branch
        %154 = sbr.rel (%p152) target = $region20
      $region19: #{lstm_forward.5} parent=5 // pred_region
        // Predicated region
        $region21: #{lstm_forward.5} parent=19 // pred_check
          %p155 = pneg %p67
        $region22: #{lstm_forward.5} parent=19 // pred_check_branch
          %157 = sbr.rel (%p155) target = $region24
        $region23: #{lstm_forward.5} parent=19 // pred_region
          %s158 = sand.u32 %s57, 1
          %s159 = sand.u32 %s57, 1
          %s160 = smul.addr %s159, 32
          %s161 = scalar_lea.vmem [#allocation2], %s160
          %s162 = smul.u32 2, %s17
          %s163 = smul.addr %s162, 4
          %s164 = scalar_lea.vmem %s1, %s163
          // Predicated region
          $region25: #{lstm_forward.5} parent=23 // pred_check
            _
          $region26: #{lstm_forward.5} parent=23 // pred_check_branch
            %166 = sbr.rel (0) target = $region28
          $region27: #{lstm_forward.5} parent=23 // pred_region
            // Predicated region
            $region29: #{lstm_forward.5} parent=27 // pred_check
              _
            $region30: #{lstm_forward.5} parent=27 // pred_check_branch
              %168 = sbr.rel (0) target = $region32
            $region31: #{lstm_forward.5} parent=27 // pred_region
              // Predicated region
              $region44: #{lstm_forward.5} parent=31 // pred_check
                _
              $region45: #{lstm_forward.5} parent=31 // pred_check_branch
                %189 = sbr.rel (0) target = $region47
              $region46: #{lstm_forward.5} parent=31 // pred_region
                loop: start=0, step=1, limit=1
                $region48: #{lstm_forward.5} parent=46 // loop_pre_header
                  _
                $region49: #{lstm_forward.5} parent=46 // loop_header
                  %s191 = sphi 0, %s195
                  %p192 = scmp.ge.s32.totalorder %s191, 1
                  %s196 = sphi %s164, %s164
                  %s197 = sphi %s161, %s161
                $region50: #{lstm_forward.5} parent=46 // loop_header_branch
                  %194 = sbr.rel (%p192) target = $region54
                $region51: #{lstm_forward.5} parent=46 // loop_body
                  %v198 = vld [vmem:[%s196] sm:$0xff]
                  %199 = vst [vmem:[%s197] sm:$0xff] %v198
                  %v200 = vld [vmem:[%s196 + $0x10] sm:$0xff]
                  %201 = vst [vmem:[%s197 + $0x8] sm:$0xff] %v200
                  %v202 = vld [vmem:[%s196 + $0x20] sm:$0xff]
                  %203 = vst [vmem:[%s197 + $0x10] sm:$0xff] %v202
                  %v204 = vld [vmem:[%s196 + $0x30] sm:$0xff]
                  %205 = vst [vmem:[%s197 + $0x18] sm:$0xff] %v204
                $region52: #{lstm_forward.5} parent=46 // loop_footer
                  %s195 = sadd.s32 1, %s191
                $region53: #{lstm_forward.5} parent=46 // loop_footer_branch
                  %190 = sbr.rel target = $region49
                $region54: #{lstm_forward.5} parent=46 // loop_exit
                  _
              $region47: #{lstm_forward.5} parent=31 // pred_fallthru
                _
              // Predicated region
              $region55: #{lstm_forward.5} parent=31 // pred_check
                _
              $region56: #{lstm_forward.5} parent=31 // pred_check_branch
                %207 = sbr.rel target = $region58
              $region57: #{lstm_forward.5} parent=31 // pred_region
                _
              $region58: #{lstm_forward.5} parent=31 // pred_fallthru
                _
            $region32: #{lstm_forward.5} parent=27 // pred_fallthru
              _
            // Predicated region
            $region33: #{lstm_forward.5} parent=27 // pred_check
              _
            $region34: #{lstm_forward.5} parent=27 // pred_check_branch
              %170 = sbr.rel target = $region36
            $region35: #{lstm_forward.5} parent=27 // pred_region
              loop: start=0, step=1, limit=1
              $region37: #{lstm_forward.5} parent=35 // loop_pre_header
                _
              $region38: #{lstm_forward.5} parent=35 // loop_header
                %s173 = sphi 0, %s177
                %p174 = scmp.ge.s32.totalorder %s173, 1
                %s178 = sphi %s164, %s164
                %s179 = sphi %s161, %s161
              $region39: #{lstm_forward.5} parent=35 // loop_header_branch
                %176 = sbr.rel (%p174) target = $region43
              $region40: #{lstm_forward.5} parent=35 // loop_body
                %v180 = vld [vmem:[%s178] sm:$0xff]
                %181 = vst [vmem:[%s179] sm:$0xff] %v180
                %v182 = vld [vmem:[%s178 + $0x10] sm:$0xff]
                %183 = vst [vmem:[%s179 + $0x8] sm:$0xff] %v182
                %v184 = vld [vmem:[%s178 + $0x20] sm:$0xff]
                %185 = vst [vmem:[%s179 + $0x10] sm:$0xff] %v184
                %v186 = vld [vmem:[%s178 + $0x30] sm:$0xff]
                %187 = vst [vmem:[%s179 + $0x18] sm:$0xff] %v186
              $region41: #{lstm_forward.5} parent=35 // loop_footer
                %s177 = sadd.s32 1, %s173
              $region42: #{lstm_forward.5} parent=35 // loop_footer_branch
                %172 = sbr.rel target = $region38
              $region43: #{lstm_forward.5} parent=35 // loop_exit
                _
            $region36: #{lstm_forward.5} parent=27 // pred_fallthru
              _
          $region28: #{lstm_forward.5} parent=23 // pred_fallthru
            _
          %208 = vnop
        $region24: #{lstm_forward.5} parent=19 // pred_fallthru
          _
        // Predicated region
        $region59: #{lstm_forward.5} parent=19 // pred_check
          %p209 = pneg %p93
        $region60: #{lstm_forward.5} parent=19 // pred_check_branch
          %211 = sbr.rel (%p209) target = $region62
        $region61: #{lstm_forward.5} parent=19 // pred_region
          %s212 = smul.u32 2, %s17
          %p213 = scmp.lt.s32.totalorder %s212, 3
          %s214 = scalar_select %p213, %s212, 3
          %s215 = scalar_lea.vmem %s2, %s214
          %s216 = smul.u32 2, %s17
        $region62: #{lstm_forward.5} parent=19 // pred_fallthru
          _
      $region20: #{lstm_forward.5} parent=5 // pred_fallthru
        _
      %p217 = scmp.le.s32.totalorder 1, %s9
      %p218 = scmp.lt.s32.totalorder %s9, 3
      %p219 = pnand %p217, %p218
      %p220 = pneg %p219
      // Predicated region
      $region63: #{lstm_forward.5} parent=5 // pred_check
        _
      $region64: #{lstm_forward.5} parent=5 // pred_check_branch
        %222 = sbr.rel (%p219) target = $region66
      $region65: #{lstm_forward.5} parent=5 // pred_region
        %s223 = ssub.s32 %s9, 1
        %s224 = sand.u32 %s60, 1
        %s225 = sand.u32 %s60, 1
        %s226 = smul.addr %s225, 32
        %s227 = scalar_lea.vmem [#allocation2], %s226
        // Predicated region
        $region67: #{lstm_forward.5} parent=65 // pred_check
          %p228 = pneg %p73
        $region68: #{lstm_forward.5} parent=65 // pred_check_branch
          %230 = sbr.rel (%p228) target = $region70
        $region69: #{lstm_forward.5} parent=65 // pred_region
          _
        $region70: #{lstm_forward.5} parent=65 // pred_fallthru
          _
        %s231 = smul.u32 8, %s18
        %p232 = scmp.lt.s32.totalorder %s231, 7
        %s233 = scalar_select %p232, %s231, 7
        %s234 = smul.addr %s233, 4
        %s235 = scalar_lea.vmem %s0, %s234
        %p236 = pneg %p47
        %p237 = pneg %p44
        %s238 = sand.u32 %s60, 1
        %s239 = sand.u32 %s60, 1
        %s240 = smul.addr %s239, 32
        %s241 = scalar_lea.vmem [#allocation2], %s240
        %p242 = pneg %p73
        %p243 = pneg %p70
        %s244 = smul.u32 2, %s19
        %p245 = scmp.lt.s32.totalorder %s244, 3
        %s246 = scalar_select %p245, %s244, 3
        %s247 = scalar_lea.vmem %s2, %s246
        %p248 = pneg %p99
        %p249 = pneg %p96
        %p250 = pneg %p127
        %p251 = pneg %p124
        %s252 = sand.u32 %s114, 1
        %s253 = sand.u32 %s114, 1
        %s254 = smul.addr %s253, 128
        %s255 = scalar_lea.vmem [#allocation3], %s254
        %s256 = smul.u32 8, %s18
        %p257 = scmp.lt.s32.totalorder %s256, 7
        %s258 = scalar_select %p257, %s256, 7
        %s259 = smul.addr %s258, 4
        %s260 = scalar_lea.vmem %s0, %s259
        %s261 = smul.u32 8, %s18
        %s262 = smul.u32 2, %s19
        %s263 = smul.u32 2, %s19
        %p264 = scmp.lt.s32.totalorder %s263, 3
        %s265 = scalar_select %p264, %s263, 3
        %s266 = scalar_lea.vmem %s2, %s265
        %s267 = smul.u32 2, %s19
        %s268 = smul.u32 8, %s18
        %s269 = smul.u32 2, %s19
        %v271 = vld [vmem:[%s260] sm:$0xf]
        %v272 = vld [vmem:[%s260 + $0x4] sm:$0xf]
        %v273 = vld [vmem:[%s260 + $0x8] sm:$0xf]
        %v274 = vld [vmem:[%s260 + $0xc] sm:$0xf]
        %v275 = vld [vmem:[%s260 + $0x10] sm:$0xf]
        %v276 = vld [vmem:[%s260 + $0x14] sm:$0xf]
        %v277 = vld [vmem:[%s260 + $0x18] sm:$0xf]
        %v278 = vld [vmem:[%s260 + $0x1c] sm:$0xf]
        %v279 = vld [vmem:[%s227] sm:$0xff]
        %v280 = vld [vmem:[%s227 + $0x8] sm:$0xff]
        %v281 = vld [vmem:[%s227 + $0x10] sm:$0xff]
        %v282 = vld [vmem:[%s227 + $0x18] sm:$0xff]
        %v283 = vld [vmem:[%s266] sm:$0x3]
        %v285 = vlaneseq
        %v286 = vshrl.u32 %v285, 7
        %v287 = vsub.s32 0, %v286
        %v288 = vrot.slane %v283, %v287
        %v289 = vlaneseq
        %v290 = vshrl.u32 %v289, 7
        %v291 = vsub.s32 1, %v290
        %v292 = vrot.slane %v283, %v291
        %v303 = vunpack.c.l.b16 %v271
        %v304 = vunpack.c.l.b16 %v272
        %v305 = vunpack.c.l.b16 %v273
        %v306 = vunpack.c.l.b16 %v274
        %v307 = vunpack.c.l.b16 %v275
        %v308 = vunpack.c.l.b16 %v276
        %v309 = vunpack.c.l.b16 %v277
        %v310 = vunpack.c.l.b16 %v278
        %v311 = vpack.c.b16 %v304, %v303
        %v312 = vpack.c.b16 %v306, %v305
        %v313 = vpack.c.b16 %v308, %v307
        %v314 = vpack.c.b16 %v310, %v309
        %v319 = vunpack.c.l.b16 %v279
        %v320 = vunpack.c.h.b16 %v279
        %v321 = vunpack.c.l.b16 %v280
        %v322 = vunpack.c.h.b16 %v280
        %v323 = vunpack.c.l.b16 %v281
        %v324 = vunpack.c.h.b16 %v281
        %v325 = vunpack.c.l.b16 %v282
        %v326 = vunpack.c.h.b16 %v282
        %v327 = vpack.c.b16 %v321, %v319
        %v328 = vpack.c.b16 %v322, %v320
        %v329 = vpack.c.b16 %v325, %v323
        %v330 = vpack.c.b16 %v326, %v324
        %vm335 = vcmask 261120
        %v337 = vsel %vm335, %v311, 0
        %v340 = vsel %vm335, %v312, 0
        %v343 = vsel %vm335, %v313, 0
        %v346 = vsel %vm335, %v314, 0
        %348 = vmatprep.subr.bf16.mxu0 %v328
        %349 = vmatpush1.bf16.msra.mxu0 %v327
        %350 = vmatprep.subr.bf16.mxu0 %v330
        %351 = vmatpush1.bf16.msra.mxu0 %v329
        %352 = vmatprep.subr.bf16.mxu0 0
        %353 = vmatpush1.bf16.msra.mxu0 0
        %354 = vmatprep.subr.bf16.mxu0 0
        %355 = vmatpush1.bf16.msra.mxu0 0
        %356 = vmatprep.subr.bf16.mxu0 0
        %357 = vmatpush1.bf16.msra.mxu0 0
        %358 = vmatprep.subr.bf16.mxu0 0
        %359 = vmatpush1.bf16.msra.mxu0 0
        %360 = vmatprep.subr.bf16.mxu0 0
        %361 = vmatpush1.bf16.msra.mxu0 0
        %362 = vmatprep.subr.bf16.mxu0 0
        %363 = vmatpush1.bf16.msra.mxu0 0
        %364 = vmatprep.subr.bf16.mxu0 0
        %365 = vmatpush1.bf16.msra.mxu0 0
        %366 = vmatprep.subr.bf16.mxu0 0
        %367 = vmatpush1.bf16.msra.mxu0 0
        %368 = vmatprep.subr.bf16.mxu0 0
        %369 = vmatpush1.bf16.msra.mxu0 0
        %370 = vmatprep.subr.bf16.mxu0 0
        %371 = vmatpush1.bf16.msra.mxu0 0
        %372 = vmatprep.subr.bf16.mxu0 0
        %373 = vmatpush1.bf16.msra.mxu0 0
        %374 = vmatprep.subr.bf16.mxu0 0
        %375 = vmatpush1.bf16.msra.mxu0 0
        %376 = vmatprep.subr.bf16.mxu0 0
        %377 = vmatpush1.bf16.msra.mxu0 0
        %378 = vmatprep.subr.bf16.mxu0 0
        %379 = vmatpush1.bf16.msra.mxu0 0
        %380 = vmatprep.mubr.bf16.mxu0 0
        %381 = vmatmul.mubr.bf16.gmra.mrb[0].mxu0 %v337
        %v382 = vpop.f32.mrb[0].mxu0
        %v383 = vadd.f32 %v288, %v382
        %v384 = vpop.f32.mrb[0].mxu0
        %v385 = vadd.f32 %v292, %v384
        %v386 = vpop.f32.mrb[0].mxu0
        %v387 = vadd.f32 %v288, %v386
        %v388 = vpop.f32.mrb[0].mxu0
        %v389 = vadd.f32 %v292, %v388
        %390 = vmatprep.mubr.bf16.mxu0 0
        %391 = vmatmul.mubr.bf16.gmra.mrb[0].mxu0 %v340
        %v392 = vpop.f32.mrb[0].mxu0
        %v393 = vadd.f32 %v288, %v392
        %v394 = vpop.f32.mrb[0].mxu0
        %v395 = vadd.f32 %v292, %v394
        %v396 = vpop.f32.mrb[0].mxu0
        %v397 = vadd.f32 %v288, %v396
        %v398 = vpop.f32.mrb[0].mxu0
        %v399 = vadd.f32 %v292, %v398
        %400 = vmatprep.mubr.bf16.mxu0 0
        %401 = vmatmul.mubr.bf16.gmra.mrb[0].mxu0 %v343
        %v402 = vpop.f32.mrb[0].mxu0
        %v403 = vadd.f32 %v288, %v402
        %v404 = vpop.f32.mrb[0].mxu0
        %v405 = vadd.f32 %v292, %v404
        %v406 = vpop.f32.mrb[0].mxu0
        %v407 = vadd.f32 %v288, %v406
        %v408 = vpop.f32.mrb[0].mxu0
        %v409 = vadd.f32 %v292, %v408
        %410 = vmatprep.mubr.bf16.mxu0 0
        %411 = vmatmul.mubr.bf16.gmra.mrb[0].mxu0 %v346
        %v412 = vpop.f32.mrb[0].mxu0
        %v413 = vadd.f32 %v288, %v412
        %v414 = vpop.f32.mrb[0].mxu0
        %v415 = vadd.f32 %v292, %v414
        %v416 = vpop.f32.mrb[0].mxu0
        %v417 = vadd.f32 %v288, %v416
        %v418 = vpop.f32.mrb[0].mxu0
        %v419 = vadd.f32 %v292, %v418
        %420 = vdwg.mxu0
        %421 = vst [vmem:[%s255] sm:$0xff] %v383
        %422 = vst [vmem:[%s255 + $0x8] sm:$0xff] %v385
        %423 = vst [vmem:[%s255 + $0x10] sm:$0xff] %v387
        %424 = vst [vmem:[%s255 + $0x18] sm:$0xff] %v389
        %425 = vst [vmem:[%s255 + $0x20] sm:$0xff] %v393
        %426 = vst [vmem:[%s255 + $0x28] sm:$0xff] %v395
        %427 = vst [vmem:[%s255 + $0x30] sm:$0xff] %v397
        %428 = vst [vmem:[%s255 + $0x38] sm:$0xff] %v399
        %429 = vst [vmem:[%s255 + $0x40] sm:$0xff] %v403
        %430 = vst [vmem:[%s255 + $0x48] sm:$0xff] %v405
        %431 = vst [vmem:[%s255 + $0x50] sm:$0xff] %v407
        %432 = vst [vmem:[%s255 + $0x58] sm:$0xff] %v409
        %433 = vst [vmem:[%s255 + $0x60] sm:$0xff] %v413
        %434 = vst [vmem:[%s255 + $0x68] sm:$0xff] %v415
        %435 = vst [vmem:[%s255 + $0x70] sm:$0xff] %v417
        %436 = vst [vmem:[%s255 + $0x78] sm:$0xff] %v419
        %s437 = sand.u32 %s114, 1
        %s438 = sand.u32 %s114, 1
        %s439 = smul.addr %s438, 128
        %s440 = scalar_lea.vmem [#allocation3], %s439
        // Predicated region
        $region71: #{lstm_forward.5} parent=65 // pred_check
          %p441 = pneg %p124
        $region72: #{lstm_forward.5} parent=65 // pred_check_branch
          %443 = sbr.rel (%p441) target = $region74
        $region73: #{lstm_forward.5} parent=65 // pred_region
          %s444 = smul.u32 8, %s18
          %s445 = smul.u32 2, %s19
          %s446 = smul.addr %s444, 4
          %s447 = sadd.s32 %s445, %s446
          %s448 = smul.addr %s447, 8
          %s449 = scalar_lea.vmem %s3, %s448
          // Predicated region
          $region75: #{lstm_forward.5} parent=73 // pred_check
            _
          $region76: #{lstm_forward.5} parent=73 // pred_check_branch
            %451 = sbr.rel (0) target = $region78
          $region77: #{lstm_forward.5} parent=73 // pred_region
            // Predicated region
            $region79: #{lstm_forward.5} parent=77 // pred_check
              _
            $region80: #{lstm_forward.5} parent=77 // pred_check_branch
              %453 = sbr.rel (0) target = $region82
            $region81: #{lstm_forward.5} parent=77 // pred_region
              loop: start=0, step=1, limit=1
              $region83: #{lstm_forward.5} parent=81 // loop_pre_header
                _
              $region84: #{lstm_forward.5} parent=81 // loop_header
                %s455 = sphi 0, %s459
                %p456 = scmp.ge.s32.totalorder %s455, 1
                %s460 = sphi %s440, %s440
                %s461 = sphi %s449, %s449
              $region85: #{lstm_forward.5} parent=81 // loop_header_branch
                %458 = sbr.rel (%p456) target = $region89
              $region86: #{lstm_forward.5} parent=81 // loop_body
                %v462 = vld [vmem:[%s460] sm:$0xff]
                %463 = vst [vmem:[%s461] sm:$0xff] %v462
                %v464 = vld [vmem:[%s460 + $0x8] sm:$0xff]
                %465 = vst [vmem:[%s461 + $0x8] sm:$0xff] %v464
                %v466 = vld [vmem:[%s460 + $0x10] sm:$0xff]
                %467 = vst [vmem:[%s461 + $0x20] sm:$0xff] %v466
                %v468 = vld [vmem:[%s460 + $0x18] sm:$0xff]
                %469 = vst [vmem:[%s461 + $0x28] sm:$0xff] %v468
                %v470 = vld [vmem:[%s460 + $0x20] sm:$0xff]
                %471 = vst [vmem:[%s461 + $0x40] sm:$0xff] %v470
                %v472 = vld [vmem:[%s460 + $0x28] sm:$0xff]
                %473 = vst [vmem:[%s461 + $0x48] sm:$0xff] %v472
                %v474 = vld [vmem:[%s460 + $0x30] sm:$0xff]
                %475 = vst [vmem:[%s461 + $0x60] sm:$0xff] %v474
                %v476 = vld [vmem:[%s460 + $0x38] sm:$0xff]
                %477 = vst [vmem:[%s461 + $0x68] sm:$0xff] %v476
                %v478 = vld [vmem:[%s460 + $0x40] sm:$0xff]
                %479 = vst [vmem:[%s461 + $0x80] sm:$0xff] %v478
                %v480 = vld [vmem:[%s460 + $0x48] sm:$0xff]
                %481 = vst [vmem:[%s461 + $0x88] sm:$0xff] %v480
                %v482 = vld [vmem:[%s460 + $0x50] sm:$0xff]
                %483 = vst [vmem:[%s461 + $0xa0] sm:$0xff] %v482
                %v484 = vld [vmem:[%s460 + $0x58] sm:$0xff]
                %485 = vst [vmem:[%s461 + $0xa8] sm:$0xff] %v484
                %v486 = vld [vmem:[%s460 + $0x60] sm:$0xff]
                %487 = vst [vmem:[%s461 + $0xc0] sm:$0xff] %v486
                %v488 = vld [vmem:[%s460 + $0x68] sm:$0xff]
                %489 = vst [vmem:[%s461 + $0xc8] sm:$0xff] %v488
                %v490 = vld [vmem:[%s460 + $0x70] sm:$0xff]
                %491 = vst [vmem:[%s461 + $0xe0] sm:$0xff] %v490
                %v492 = vld [vmem:[%s460 + $0x78] sm:$0xff]
                %493 = vst [vmem:[%s461 + $0xe8] sm:$0xff] %v492
              $region87: #{lstm_forward.5} parent=81 // loop_footer
                %s459 = sadd.s32 1, %s455
              $region88: #{lstm_forward.5} parent=81 // loop_footer_branch
                %454 = sbr.rel target = $region84
              $region89: #{lstm_forward.5} parent=81 // loop_exit
                _
            $region82: #{lstm_forward.5} parent=77 // pred_fallthru
              _
            // Predicated region
            $region90: #{lstm_forward.5} parent=77 // pred_check
              _
            $region91: #{lstm_forward.5} parent=77 // pred_check_branch
              %495 = sbr.rel target = $region93
            $region92: #{lstm_forward.5} parent=77 // pred_region
              _
            $region93: #{lstm_forward.5} parent=77 // pred_fallthru
              _
          $region78: #{lstm_forward.5} parent=73 // pred_fallthru
            _
          %496 = vnop
        $region74: #{lstm_forward.5} parent=65 // pred_fallthru
          _
      $region66: #{lstm_forward.5} parent=5 // pred_fallthru
        _
      %p497 = scmp.le.s32.totalorder 2, %s9
      // Predicated region
      $region94: #{lstm_forward.5} parent=5 // pred_check
        %p498 = pneg %p497
      $region95: #{lstm_forward.5} parent=5 // pred_check_branch
        %500 = sbr.rel (%p498) target = $region97
      $region96: #{lstm_forward.5} parent=5 // pred_region
        %s501 = ssub.s32 %s9, 2
        // Predicated region
        $region98: #{lstm_forward.5} parent=96 // pred_check
          %p502 = pneg %p130
        $region99: #{lstm_forward.5} parent=96 // pred_check_branch
          %504 = sbr.rel (%p502) target = $region101
        $region100: #{lstm_forward.5} parent=96 // pred_region
          %s505 = sand.u32 %s115, 1
          %s506 = sand.u32 %s115, 1
          %s507 = smul.addr %s506, 128
          %s508 = scalar_lea.vmem [#allocation3], %s507
        $region101: #{lstm_forward.5} parent=96 // pred_fallthru
          _
      $region97: #{lstm_forward.5} parent=5 // pred_fallthru
        _
    $region6: #{lstm_forward.5} parent=1 // loop_footer
      %s13 = sadd.s32 1, %s9
    $region7: #{lstm_forward.5} parent=1 // loop_footer_branch
      %8 = sbr.rel target = $region3
    $region8: #{lstm_forward.5} parent=1 // loop_exit
      _

// kernel: lstm_forward.7
$region0: #{lstm_forward.7}
  #allocation0 [shape = 'u32[]', space=smem, size = 0x4, offset = 0x4, fixed_abs, tag = 'smem constant byte address 0x4 - core index']
  #allocation1 [shape = 'u32[144,128]{1,0:T(1,128)}', space=vmem, size = 0x12000, scoped, tag = 'internal scratch']
  %s0 = inlined_call_operand.vmem [shape: bf16[64,128], index: 0, kind: input, shape index: {}]
  %s1 = inlined_call_operand.vmem [shape: bf16[128,512], index: 1, kind: input, shape index: {}]
  %s2 = inlined_call_operand.vmem [shape: f32[1,512], index: 2, kind: input, shape index: {}]
  %s3 = inlined_call_operand.vmem [shape: f32[64,512], index: 3, kind: output, shape index: {}]
  %s4 = sld [smem:[#allocation0]]
  $region102: #{lstm_forward.7} parent=0
    _
  %s6 = ssub.s32 1, %s4
  %s7 = scalar_select 0, %s6, %s4
  $region1: #{lstm_forward.7} parent=0
    #allocation2 [shape = 'u8[131072]{0}', space=vmem, size = 0x20000, scoped, tag = 'input window, operand 1']
    #allocation3 [shape = 'u8[131072]{0}', space=vmem, size = 0x20000, scoped, tag = 'output window, operand 0']
    loop: start=0, step=1, limit=4
    $region2: #{lstm_forward.7} parent=1 // loop_pre_header
      _
    $region3: #{lstm_forward.7} parent=1 // loop_header
      %s9 = sphi 0, %s13
      %p10 = scmp.ge.s32.totalorder %s9, 4
      %s16 = sphi 0, %s28
      %s17 = sphi 0, %s24
      %s18 = sphi 0, %s16
      %s19 = sphi 0, %s17
      %s20 = sphi 0, %s18
      %s21 = sphi 0, %s19
      %s31 = sphi 0, %s33
      %s34 = sphi 0, %s31
      %s35 = sphi 0, %s34
      %s51 = sphi 0, %s35
      %s57 = sphi 0, %s59
      %s60 = sphi 0, %s57
      %s61 = sphi 0, %s60
      %s77 = sphi 0, %s61
      %s83 = sphi 0, %s85
      %s86 = sphi 0, %s83
      %s87 = sphi 0, %s86
      %s103 = sphi 0, %s87
      %s111 = sphi 0, %s113
      %s114 = sphi 0, %s111
      %s115 = sphi 0, %s114
      %s131 = sphi 0, %s115
    $region4: #{lstm_forward.7} parent=1 // loop_header_branch
      %12 = sbr.rel (%p10) target = $region8
    $region5: #{lstm_forward.7} parent=1 // loop_body
      %s14 = ssub.s32 %s9, 1
      %s15 = ssub.s32 %s9, 2
      %s22 = sadd.s32 1, %s17
      %p23 = scmp.ge.s32.totalorder %s22, 2
      %s24 = scalar_select %p23, 0, %s22
      %s25 = sadd.s32 1, %s16
      %s26 = scalar_select %p23, %s25, %s16
      %p27 = scmp.ge.s32.totalorder %s26, 1
      %s28 = scalar_select %p27, 0, %s26
      %s29 = ssub.s32 %s16, %s28
      %p30 = scmp.eq.s32.totalorder %s29, 0
      %s32 = sadd.s32 %s31, 1
      %s33 = scalar_select %p30, %s31, %s32
      %p36 = pneg %p30
      %p37 = scmp.eq.s32.totalorder %s9, 1
      %p38 = por %p36, %p37
      %p39 = scmp.ne.s32.totalorder %s31, %s34
      %p40 = scmp.eq.s32.totalorder %s9, 0
      %p41 = por %p39, %p40
      %p42 = scmp.ne.s32.totalorder %s31, %s34
      %p43 = scmp.eq.s32.totalorder %s14, 1
      %p44 = por %p42, %p43
      %p45 = scmp.ne.s32.totalorder %s34, %s35
      %p46 = scmp.eq.s32.totalorder %s14, 0
      %p47 = por %p45, %p46
      %p48 = scmp.ne.s32.totalorder %s34, %s35
      %p49 = scmp.eq.s32.totalorder %s15, 1
      %p50 = por %p48, %p49
      %p52 = scmp.ne.s32.totalorder %s35, %s51
      %p53 = scmp.eq.s32.totalorder %s15, 0
      %p54 = por %p52, %p53
      %s55 = ssub.s32 %s17, %s24
      %p56 = scmp.eq.s32.totalorder %s55, 0
      %s58 = sadd.s32 %s57, 1
      %s59 = scalar_select %p56, %s57, %s58
      %p62 = pneg %p56
      %p63 = scmp.eq.s32.totalorder %s9, 1
      %p64 = por %p62, %p63
      %p65 = scmp.ne.s32.totalorder %s57, %s60
      %p66 = scmp.eq.s32.totalorder %s9, 0
      %p67 = por %p65, %p66
      %p68 = scmp.ne.s32.totalorder %s57, %s60
      %p69 = scmp.eq.s32.totalorder %s14, 1
      %p70 = por %p68, %p69
      %p71 = scmp.ne.s32.totalorder %s60, %s61
      %p72 = scmp.eq.s32.totalorder %s14, 0
      %p73 = por %p71, %p72
      %p74 = scmp.ne.s32.totalorder %s60, %s61
      %p75 = scmp.eq.s32.totalorder %s15, 1
      %p76 = por %p74, %p75
      %p78 = scmp.ne.s32.totalorder %s61, %s77
      %p79 = scmp.eq.s32.totalorder %s15, 0
      %p80 = por %p78, %p79
      %s81 = ssub.s32 %s17, %s24
      %p82 = scmp.eq.s32.totalorder %s81, 0
      %s84 = sadd.s32 %s83, 1
      %s85 = scalar_select %p82, %s83, %s84
      %p88 = pneg %p82
      %p89 = scmp.eq.s32.totalorder %s9, 1
      %p90 = por %p88, %p89
      %p91 = scmp.ne.s32.totalorder %s83, %s86
      %p92 = scmp.eq.s32.totalorder %s9, 0
      %p93 = por %p91, %p92
      %p94 = scmp.ne.s32.totalorder %s83, %s86
      %p95 = scmp.eq.s32.totalorder %s14, 1
      %p96 = por %p94, %p95
      %p97 = scmp.ne.s32.totalorder %s86, %s87
      %p98 = scmp.eq.s32.totalorder %s14, 0
      %p99 = por %p97, %p98
      %p100 = scmp.ne.s32.totalorder %s86, %s87
      %p101 = scmp.eq.s32.totalorder %s15, 1
      %p102 = por %p100, %p101
      %p104 = scmp.ne.s32.totalorder %s87, %s103
      %p105 = scmp.eq.s32.totalorder %s15, 0
      %p106 = por %p104, %p105
      %s107 = ssub.s32 %s16, %s28
      %s108 = ssub.s32 %s17, %s24
      %s109 = sor.u32 %s107, %s108
      %p110 = scmp.eq.s32.totalorder %s109, 0
      %s112 = sadd.s32 %s111, 1
      %s113 = scalar_select %p110, %s111, %s112
      %p116 = pneg %p110
      %p117 = scmp.eq.s32.totalorder %s9, 1
      %p118 = por %p116, %p117
      %p119 = scmp.ne.s32.totalorder %s111, %s114
      %p120 = scmp.eq.s32.totalorder %s9, 0
      %p121 = por %p119, %p120
      %p122 = scmp.ne.s32.totalorder %s111, %s114
      %p123 = scmp.eq.s32.totalorder %s14, 1
      %p124 = por %p122, %p123
      %p125 = scmp.ne.s32.totalorder %s114, %s115
      %p126 = scmp.eq.s32.totalorder %s14, 0
      %p127 = por %p125, %p126
      %p128 = scmp.ne.s32.totalorder %s114, %s115
      %p129 = scmp.eq.s32.totalorder %s15, 1
      %p130 = por %p128, %p129
      %p132 = scmp.ne.s32.totalorder %s115, %s131
      %p133 = scmp.eq.s32.totalorder %s15, 0
      %p134 = por %p132, %p133
      %p135 = scmp.le.s32.totalorder 1, %s9
      %p136 = scmp.lt.s32.totalorder %s9, 3
      %p137 = pnand %p135, %p136
      %p138 = pneg %p137
      // Predicated region
      $region9: #{lstm_forward.7} parent=5 // pred_check
        _
      $region10: #{lstm_forward.7} parent=5 // pred_check_branch
        %140 = sbr.rel (%p137) target = $region12
      $region11: #{lstm_forward.7} parent=5 // pred_region
        %s141 = ssub.s32 %s9, 1
        // Predicated region
        $region13: #{lstm_forward.7} parent=11 // pred_check
          %p142 = pneg %p47
        $region14: #{lstm_forward.7} parent=11 // pred_check_branch
          %144 = sbr.rel (%p142) target = $region16
        $region15: #{lstm_forward.7} parent=11 // pred_region
          %s145 = smul.u32 8, %s18
          %p146 = scmp.lt.s32.totalorder %s145, 7
          %s147 = scalar_select %p146, %s145, 7
          %s148 = smul.addr %s147, 4
          %s149 = scalar_lea.vmem %s0, %s148
          %s150 = smul.u32 8, %s18
        $region16: #{lstm_forward.7} parent=11 // pred_fallthru
          _
      $region12: #{lstm_forward.7} parent=5 // pred_fallthru
        _
      %p151 = scmp.lt.s32.totalorder %s9, 2
      // Predicated region
      $region17: #{lstm_forward.7} parent=5 // pred_check
        %p152 = pneg %p151
      $region18: #{lstm_forward.7} parent=5 // pred_check_branch
        %154 = sbr.rel (%p152) target = $region20
      $region19: #{lstm_forward.7} parent=5 // pred_region
        // Predicated region
        $region21: #{lstm_forward.7} parent=19 // pred_check
          %p155 = pneg %p67
        $region22: #{lstm_forward.7} parent=19 // pred_check_branch
          %157 = sbr.rel (%p155) target = $region24
        $region23: #{lstm_forward.7} parent=19 // pred_region
          %s158 = sand.u32 %s57, 1
          %s159 = sand.u32 %s57, 1
          %s160 = smul.addr %s159, 128
          %s161 = scalar_lea.vmem [#allocation2], %s160
          %s162 = smul.u32 2, %s17
          %s163 = smul.addr %s162, 4
          %s164 = scalar_lea.vmem %s1, %s163
          // Predicated region
          $region25: #{lstm_forward.7} parent=23 // pred_check
            _
          $region26: #{lstm_forward.7} parent=23 // pred_check_branch
            %166 = sbr.rel (0) target = $region28
          $region27: #{lstm_forward.7} parent=23 // pred_region
            // Predicated region
            $region29: #{lstm_forward.7} parent=27 // pred_check
              _
            $region30: #{lstm_forward.7} parent=27 // pred_check_branch
              %168 = sbr.rel (0) target = $region32
            $region31: #{lstm_forward.7} parent=27 // pred_region
              // Predicated region
              $region44: #{lstm_forward.7} parent=31 // pred_check
                _
              $region45: #{lstm_forward.7} parent=31 // pred_check_branch
                %213 = sbr.rel (0) target = $region47
              $region46: #{lstm_forward.7} parent=31 // pred_region
                loop: start=0, step=1, limit=1
                $region48: #{lstm_forward.7} parent=46 // loop_pre_header
                  _
                $region49: #{lstm_forward.7} parent=46 // loop_header
                  %s215 = sphi 0, %s219
                  %p216 = scmp.ge.s32.totalorder %s215, 1
                  %s220 = sphi %s164, %s164
                  %s221 = sphi %s161, %s161
                $region50: #{lstm_forward.7} parent=46 // loop_header_branch
                  %218 = sbr.rel (%p216) target = $region54
                $region51: #{lstm_forward.7} parent=46 // loop_body
                  %v222 = vld [vmem:[%s220] sm:$0xff]
                  %223 = vst [vmem:[%s221] sm:$0xff] %v222
                  %v224 = vld [vmem:[%s220 + $0x10] sm:$0xff]
                  %225 = vst [vmem:[%s221 + $0x8] sm:$0xff] %v224
                  %v226 = vld [vmem:[%s220 + $0x20] sm:$0xff]
                  %227 = vst [vmem:[%s221 + $0x10] sm:$0xff] %v226
                  %v228 = vld [vmem:[%s220 + $0x30] sm:$0xff]
                  %229 = vst [vmem:[%s221 + $0x18] sm:$0xff] %v228
                  %v230 = vld [vmem:[%s220 + $0x40] sm:$0xff]
                  %231 = vst [vmem:[%s221 + $0x20] sm:$0xff] %v230
                  %v232 = vld [vmem:[%s220 + $0x50] sm:$0xff]
                  %233 = vst [vmem:[%s221 + $0x28] sm:$0xff] %v232
                  %v234 = vld [vmem:[%s220 + $0x60] sm:$0xff]
                  %235 = vst [vmem:[%s221 + $0x30] sm:$0xff] %v234
                  %v236 = vld [vmem:[%s220 + $0x70] sm:$0xff]
                  %237 = vst [vmem:[%s221 + $0x38] sm:$0xff] %v236
                  %v238 = vld [vmem:[%s220 + $0x80] sm:$0xff]
                  %239 = vst [vmem:[%s221 + $0x40] sm:$0xff] %v238
                  %v240 = vld [vmem:[%s220 + $0x90] sm:$0xff]
                  %241 = vst [vmem:[%s221 + $0x48] sm:$0xff] %v240
                  %v242 = vld [vmem:[%s220 + $0xa0] sm:$0xff]
                  %243 = vst [vmem:[%s221 + $0x50] sm:$0xff] %v242
                  %v244 = vld [vmem:[%s220 + $0xb0] sm:$0xff]
                  %245 = vst [vmem:[%s221 + $0x58] sm:$0xff] %v244
                  %v246 = vld [vmem:[%s220 + $0xc0] sm:$0xff]
                  %247 = vst [vmem:[%s221 + $0x60] sm:$0xff] %v246
                  %v248 = vld [vmem:[%s220 + $0xd0] sm:$0xff]
                  %249 = vst [vmem:[%s221 + $0x68] sm:$0xff] %v248
                  %v250 = vld [vmem:[%s220 + $0xe0] sm:$0xff]
                  %251 = vst [vmem:[%s221 + $0x70] sm:$0xff] %v250
                  %v252 = vld [vmem:[%s220 + $0xf0] sm:$0xff]
                  %253 = vst [vmem:[%s221 + $0x78] sm:$0xff] %v252
                $region52: #{lstm_forward.7} parent=46 // loop_footer
                  %s219 = sadd.s32 1, %s215
                $region53: #{lstm_forward.7} parent=46 // loop_footer_branch
                  %214 = sbr.rel target = $region49
                $region54: #{lstm_forward.7} parent=46 // loop_exit
                  _
              $region47: #{lstm_forward.7} parent=31 // pred_fallthru
                _
              // Predicated region
              $region55: #{lstm_forward.7} parent=31 // pred_check
                _
              $region56: #{lstm_forward.7} parent=31 // pred_check_branch
                %255 = sbr.rel target = $region58
              $region57: #{lstm_forward.7} parent=31 // pred_region
                _
              $region58: #{lstm_forward.7} parent=31 // pred_fallthru
                _
            $region32: #{lstm_forward.7} parent=27 // pred_fallthru
              _
            // Predicated region
            $region33: #{lstm_forward.7} parent=27 // pred_check
              _
            $region34: #{lstm_forward.7} parent=27 // pred_check_branch
              %170 = sbr.rel target = $region36
            $region35: #{lstm_forward.7} parent=27 // pred_region
              loop: start=0, step=1, limit=1
              $region37: #{lstm_forward.7} parent=35 // loop_pre_header
                _
              $region38: #{lstm_forward.7} parent=35 // loop_header
                %s173 = sphi 0, %s177
                %p174 = scmp.ge.s32.totalorder %s173, 1
                %s178 = sphi %s164, %s164
                %s179 = sphi %s161, %s161
              $region39: #{lstm_forward.7} parent=35 // loop_header_branch
                %176 = sbr.rel (%p174) target = $region43
              $region40: #{lstm_forward.7} parent=35 // loop_body
                %v180 = vld [vmem:[%s178] sm:$0xff]
                %181 = vst [vmem:[%s179] sm:$0xff] %v180
                %v182 = vld [vmem:[%s178 + $0x10] sm:$0xff]
                %183 = vst [vmem:[%s179 + $0x8] sm:$0xff] %v182
                %v184 = vld [vmem:[%s178 + $0x20] sm:$0xff]
                %185 = vst [vmem:[%s179 + $0x10] sm:$0xff] %v184
                %v186 = vld [vmem:[%s178 + $0x30] sm:$0xff]
                %187 = vst [vmem:[%s179 + $0x18] sm:$0xff] %v186
                %v188 = vld [vmem:[%s178 + $0x40] sm:$0xff]
                %189 = vst [vmem:[%s179 + $0x20] sm:$0xff] %v188
                %v190 = vld [vmem:[%s178 + $0x50] sm:$0xff]
                %191 = vst [vmem:[%s179 + $0x28] sm:$0xff] %v190
                %v192 = vld [vmem:[%s178 + $0x60] sm:$0xff]
                %193 = vst [vmem:[%s179 + $0x30] sm:$0xff] %v192
                %v194 = vld [vmem:[%s178 + $0x70] sm:$0xff]
                %195 = vst [vmem:[%s179 + $0x38] sm:$0xff] %v194
                %v196 = vld [vmem:[%s178 + $0x80] sm:$0xff]
                %197 = vst [vmem:[%s179 + $0x40] sm:$0xff] %v196
                %v198 = vld [vmem:[%s178 + $0x90] sm:$0xff]
                %199 = vst [vmem:[%s179 + $0x48] sm:$0xff] %v198
                %v200 = vld [vmem:[%s178 + $0xa0] sm:$0xff]
                %201 = vst [vmem:[%s179 + $0x50] sm:$0xff] %v200
                %v202 = vld [vmem:[%s178 + $0xb0] sm:$0xff]
                %203 = vst [vmem:[%s179 + $0x58] sm:$0xff] %v202
                %v204 = vld [vmem:[%s178 + $0xc0] sm:$0xff]
                %205 = vst [vmem:[%s179 + $0x60] sm:$0xff] %v204
                %v206 = vld [vmem:[%s178 + $0xd0] sm:$0xff]
                %207 = vst [vmem:[%s179 + $0x68] sm:$0xff] %v206
                %v208 = vld [vmem:[%s178 + $0xe0] sm:$0xff]
                %209 = vst [vmem:[%s179 + $0x70] sm:$0xff] %v208
                %v210 = vld [vmem:[%s178 + $0xf0] sm:$0xff]
                %211 = vst [vmem:[%s179 + $0x78] sm:$0xff] %v210
              $region41: #{lstm_forward.7} parent=35 // loop_footer
                %s177 = sadd.s32 1, %s173
              $region42: #{lstm_forward.7} parent=35 // loop_footer_branch
                %172 = sbr.rel target = $region38
              $region43: #{lstm_forward.7} parent=35 // loop_exit
                _
            $region36: #{lstm_forward.7} parent=27 // pred_fallthru
              _
          $region28: #{lstm_forward.7} parent=23 // pred_fallthru
            _
          %256 = vnop
        $region24: #{lstm_forward.7} parent=19 // pred_fallthru
          _
        // Predicated region
        $region59: #{lstm_forward.7} parent=19 // pred_check
          %p257 = pneg %p93
        $region60: #{lstm_forward.7} parent=19 // pred_check_branch
          %259 = sbr.rel (%p257) target = $region62
        $region61: #{lstm_forward.7} parent=19 // pred_region
          %s260 = smul.u32 2, %s17
          %p261 = scmp.lt.s32.totalorder %s260, 3
          %s262 = scalar_select %p261, %s260, 3
          %s263 = scalar_lea.vmem %s2, %s262
          %s264 = smul.u32 2, %s17
        $region62: #{lstm_forward.7} parent=19 // pred_fallthru
          _
      $region20: #{lstm_forward.7} parent=5 // pred_fallthru
        _
      %p265 = scmp.le.s32.totalorder 1, %s9
      %p266 = scmp.lt.s32.totalorder %s9, 3
      %p267 = pnand %p265, %p266
      %p268 = pneg %p267
      // Predicated region
      $region63: #{lstm_forward.7} parent=5 // pred_check
        _
      $region64: #{lstm_forward.7} parent=5 // pred_check_branch
        %270 = sbr.rel (%p267) target = $region66
      $region65: #{lstm_forward.7} parent=5 // pred_region
        %s271 = ssub.s32 %s9, 1
        %s272 = sand.u32 %s60, 1
        %s273 = sand.u32 %s60, 1
        %s274 = smul.addr %s273, 128
        %s275 = scalar_lea.vmem [#allocation2], %s274
        // Predicated region
        $region67: #{lstm_forward.7} parent=65 // pred_check
          %p276 = pneg %p73
        $region68: #{lstm_forward.7} parent=65 // pred_check_branch
          %278 = sbr.rel (%p276) target = $region70
        $region69: #{lstm_forward.7} parent=65 // pred_region
          _
        $region70: #{lstm_forward.7} parent=65 // pred_fallthru
          _
        %s279 = smul.u32 8, %s18
        %p280 = scmp.lt.s32.totalorder %s279, 7
        %s281 = scalar_select %p280, %s279, 7
        %s282 = smul.addr %s281, 4
        %s283 = scalar_lea.vmem %s0, %s282
        %p284 = pneg %p47
        %p285 = pneg %p44
        %s286 = sand.u32 %s60, 1
        %s287 = sand.u32 %s60, 1
        %s288 = smul.addr %s287, 128
        %s289 = scalar_lea.vmem [#allocation2], %s288
        %p290 = pneg %p73
        %p291 = pneg %p70
        %s292 = smul.u32 2, %s19
        %p293 = scmp.lt.s32.totalorder %s292, 3
        %s294 = scalar_select %p293, %s292, 3
        %s295 = scalar_lea.vmem %s2, %s294
        %p296 = pneg %p99
        %p297 = pneg %p96
        %p298 = pneg %p127
        %p299 = pneg %p124
        %s300 = sand.u32 %s114, 1
        %s301 = sand.u32 %s114, 1
        %s302 = smul.addr %s301, 128
        %s303 = scalar_lea.vmem [#allocation3], %s302
        %s304 = smul.u32 8, %s18
        %p305 = scmp.lt.s32.totalorder %s304, 7
        %s306 = scalar_select %p305, %s304, 7
        %s307 = smul.addr %s306, 4
        %s308 = scalar_lea.vmem %s0, %s307
        %s309 = smul.u32 8, %s18
        %s310 = smul.u32 2, %s19
        %s311 = smul.u32 2, %s19
        %p312 = scmp.lt.s32.totalorder %s311, 3
        %s313 = scalar_select %p312, %s311, 3
        %s314 = scalar_lea.vmem %s2, %s313
        %s315 = smul.u32 2, %s19
        %s316 = smul.u32 8, %s18
        %s317 = smul.u32 2, %s19
        %v319 = vld [vmem:[%s308] sm:$0xf]
        %v320 = vld [vmem:[%s308 + $0x4] sm:$0xf]
        %v321 = vld [vmem:[%s308 + $0x8] sm:$0xf]
        %v322 = vld [vmem:[%s308 + $0xc] sm:$0xf]
        %v323 = vld [vmem:[%s308 + $0x10] sm:$0xf]
        %v324 = vld [vmem:[%s308 + $0x14] sm:$0xf]
        %v325 = vld [vmem:[%s308 + $0x18] sm:$0xf]
        %v326 = vld [vmem:[%s308 + $0x1c] sm:$0xf]
        %v327 = vld [vmem:[%s275] sm:$0xff]
        %v328 = vld [vmem:[%s275 + $0x8] sm:$0xff]
        %v329 = vld [vmem:[%s275 + $0x10] sm:$0xff]
        %v330 = vld [vmem:[%s275 + $0x18] sm:$0xff]
        %v331 = vld [vmem:[%s275 + $0x20] sm:$0xff]
        %v332 = vld [vmem:[%s275 + $0x28] sm:$0xff]
        %v333 = vld [vmem:[%s275 + $0x30] sm:$0xff]
        %v334 = vld [vmem:[%s275 + $0x38] sm:$0xff]
        %v335 = vld [vmem:[%s275 + $0x40] sm:$0xff]
        %v336 = vld [vmem:[%s275 + $0x48] sm:$0xff]
        %v337 = vld [vmem:[%s275 + $0x50] sm:$0xff]
        %v338 = vld [vmem:[%s275 + $0x58] sm:$0xff]
        %v339 = vld [vmem:[%s275 + $0x60] sm:$0xff]
        %v340 = vld [vmem:[%s275 + $0x68] sm:$0xff]
        %v341 = vld [vmem:[%s275 + $0x70] sm:$0xff]
        %v342 = vld [vmem:[%s275 + $0x78] sm:$0xff]
        %v343 = vld [vmem:[%s314] sm:$0x3]
        %v345 = vlaneseq
        %v346 = vshrl.u32 %v345, 7
        %v347 = vsub.s32 0, %v346
        %v348 = vrot.slane %v343, %v347
        %v349 = vlaneseq
        %v350 = vshrl.u32 %v349, 7
        %v351 = vsub.s32 1, %v350
        %v352 = vrot.slane %v343, %v351
        %v363 = vunpack.c.l.b16 %v319
        %v364 = vunpack.c.l.b16 %v320
        %v365 = vunpack.c.l.b16 %v321
        %v366 = vunpack.c.l.b16 %v322
        %v367 = vunpack.c.l.b16 %v323
        %v368 = vunpack.c.l.b16 %v324
        %v369 = vunpack.c.l.b16 %v325
        %v370 = vunpack.c.l.b16 %v326
        %v371 = vpack.c.b16 %v364, %v363
        %v372 = vpack.c.b16 %v366, %v365
        %v373 = vpack.c.b16 %v368, %v367
        %v374 = vpack.c.b16 %v370, %v369
        %v395 = vunpack.c.l.b16 %v327
        %v396 = vunpack.c.h.b16 %v327
        %v397 = vunpack.c.l.b16 %v328
        %v398 = vunpack.c.h.b16 %v328
        %v399 = vunpack.c.l.b16 %v329
        %v400 = vunpack.c.h.b16 %v329
        %v401 = vunpack.c.l.b16 %v330
        %v402 = vunpack.c.h.b16 %v330
        %v403 = vunpack.c.l.b16 %v331
        %v404 = vunpack.c.h.b16 %v331
        %v405 = vunpack.c.l.b16 %v332
        %v406 = vunpack.c.h.b16 %v332
        %v407 = vunpack.c.l.b16 %v333
        %v408 = vunpack.c.h.b16 %v333
        %v409 = vunpack.c.l.b16 %v334
        %v410 = vunpack.c.h.b16 %v334
        %v411 = vunpack.c.l.b16 %v335
        %v412 = vunpack.c.h.b16 %v335
        %v413 = vunpack.c.l.b16 %v336
        %v414 = vunpack.c.h.b16 %v336
        %v415 = vunpack.c.l.b16 %v337
        %v416 = vunpack.c.h.b16 %v337
        %v417 = vunpack.c.l.b16 %v338
        %v418 = vunpack.c.h.b16 %v338
        %v419 = vunpack.c.l.b16 %v339
        %v420 = vunpack.c.h.b16 %v339
        %v421 = vunpack.c.l.b16 %v340
        %v422 = vunpack.c.h.b16 %v340
        %v423 = vunpack.c.l.b16 %v341
        %v424 = vunpack.c.h.b16 %v341
        %v425 = vunpack.c.l.b16 %v342
        %v426 = vunpack.c.h.b16 %v342
        %v427 = vpack.c.b16 %v397, %v395
        %v428 = vpack.c.b16 %v398, %v396
        %v429 = vpack.c.b16 %v401, %v399
        %v430 = vpack.c.b16 %v402, %v400
        %v431 = vpack.c.b16 %v405, %v403
        %v432 = vpack.c.b16 %v406, %v404
        %v433 = vpack.c.b16 %v409, %v407
        %v434 = vpack.c.b16 %v410, %v408
        %v435 = vpack.c.b16 %v413, %v411
        %v436 = vpack.c.b16 %v414, %v412
        %v437 = vpack.c.b16 %v417, %v415
        %v438 = vpack.c.b16 %v418, %v416
        %v439 = vpack.c.b16 %v421, %v419
        %v440 = vpack.c.b16 %v422, %v420
        %v441 = vpack.c.b16 %v425, %v423
        %v442 = vpack.c.b16 %v426, %v424
        %459 = vmatprep.subr.bf16.mxu0 %v428
        %460 = vmatpush1.bf16.msra.mxu0 %v427
        %461 = vmatprep.subr.bf16.mxu0 %v430
        %462 = vmatpush1.bf16.msra.mxu0 %v429
        %463 = vmatprep.subr.bf16.mxu0 %v432
        %464 = vmatpush1.bf16.msra.mxu0 %v431
        %465 = vmatprep.subr.bf16.mxu0 %v434
        %466 = vmatpush1.bf16.msra.mxu0 %v433
        %467 = vmatprep.subr.bf16.mxu0 %v436
        %468 = vmatpush1.bf16.msra.mxu0 %v435
        %469 = vmatprep.subr.bf16.mxu0 %v438
        %470 = vmatpush1.bf16.msra.mxu0 %v437
        %471 = vmatprep.subr.bf16.mxu0 %v440
        %472 = vmatpush1.bf16.msra.mxu0 %v439
        %473 = vmatprep.subr.bf16.mxu0 %v442
        %474 = vmatpush1.bf16.msra.mxu0 %v441
        %475 = vmatprep.subr.bf16.mxu0 0
        %476 = vmatpush1.bf16.msra.mxu0 0
        %477 = vmatprep.subr.bf16.mxu0 0
        %478 = vmatpush1.bf16.msra.mxu0 0
        %479 = vmatprep.subr.bf16.mxu0 0
        %480 = vmatpush1.bf16.msra.mxu0 0
        %481 = vmatprep.subr.bf16.mxu0 0
        %482 = vmatpush1.bf16.msra.mxu0 0
        %483 = vmatprep.subr.bf16.mxu0 0
        %484 = vmatpush1.bf16.msra.mxu0 0
        %485 = vmatprep.subr.bf16.mxu0 0
        %486 = vmatpush1.bf16.msra.mxu0 0
        %487 = vmatprep.subr.bf16.mxu0 0
        %488 = vmatpush1.bf16.msra.mxu0 0
        %489 = vmatprep.subr.bf16.mxu0 0
        %490 = vmatpush1.bf16.msra.mxu0 0
        %491 = vmatprep.mubr.bf16.mxu0 0
        %492 = vmatmul.mubr.bf16.gmra.mrb[0].mxu0 %v371
        %v493 = vpop.f32.mrb[0].mxu0
        %v494 = vadd.f32 %v348, %v493
        %v495 = vpop.f32.mrb[0].mxu0
        %v496 = vadd.f32 %v352, %v495
        %v497 = vpop.f32.mrb[0].mxu0
        %v498 = vadd.f32 %v348, %v497
        %v499 = vpop.f32.mrb[0].mxu0
        %v500 = vadd.f32 %v352, %v499
        %501 = vmatprep.mubr.bf16.mxu0 0
        %502 = vmatmul.mubr.bf16.gmra.mrb[0].mxu0 %v372
        %v503 = vpop.f32.mrb[0].mxu0
        %v504 = vadd.f32 %v348, %v503
        %v505 = vpop.f32.mrb[0].mxu0
        %v506 = vadd.f32 %v352, %v505
        %v507 = vpop.f32.mrb[0].mxu0
        %v508 = vadd.f32 %v348, %v507
        %v509 = vpop.f32.mrb[0].mxu0
        %v510 = vadd.f32 %v352, %v509
        %511 = vmatprep.mubr.bf16.mxu0 0
        %512 = vmatmul.mubr.bf16.gmra.mrb[0].mxu0 %v373
        %v513 = vpop.f32.mrb[0].mxu0
        %v514 = vadd.f32 %v348, %v513
        %v515 = vpop.f32.mrb[0].mxu0
        %v516 = vadd.f32 %v352, %v515
        %v517 = vpop.f32.mrb[0].mxu0
        %v518 = vadd.f32 %v348, %v517
        %v519 = vpop.f32.mrb[0].mxu0
        %v520 = vadd.f32 %v352, %v519
        %521 = vmatprep.mubr.bf16.mxu0 0
        %522 = vmatmul.mubr.bf16.gmra.mrb[0].mxu0 %v374
        %v523 = vpop.f32.mrb[0].mxu0
        %v524 = vadd.f32 %v348, %v523
        %v525 = vpop.f32.mrb[0].mxu0
        %v526 = vadd.f32 %v352, %v525
        %v527 = vpop.f32.mrb[0].mxu0
        %v528 = vadd.f32 %v348, %v527
        %v529 = vpop.f32.mrb[0].mxu0
        %v530 = vadd.f32 %v352, %v529
        %531 = vdwg.mxu0
        %532 = vst [vmem:[%s303] sm:$0xff] %v494
        %533 = vst [vmem:[%s303 + $0x8] sm:$0xff] %v496
        %534 = vst [vmem:[%s303 + $0x10] sm:$0xff] %v498
        %535 = vst [vmem:[%s303 + $0x18] sm:$0xff] %v500
        %536 = vst [vmem:[%s303 + $0x20] sm:$0xff] %v504
        %537 = vst [vmem:[%s303 + $0x28] sm:$0xff] %v506
        %538 = vst [vmem:[%s303 + $0x30] sm:$0xff] %v508
        %539 = vst [vmem:[%s303 + $0x38] sm:$0xff] %v510
        %540 = vst [vmem:[%s303 + $0x40] sm:$0xff] %v514
        %541 = vst [vmem:[%s303 + $0x48] sm:$0xff] %v516
        %542 = vst [vmem:[%s303 + $0x50] sm:$0xff] %v518
        %543 = vst [vmem:[%s303 + $0x58] sm:$0xff] %v520
        %544 = vst [vmem:[%s303 + $0x60] sm:$0xff] %v524
        %545 = vst [vmem:[%s303 + $0x68] sm:$0xff] %v526
        %546 = vst [vmem:[%s303 + $0x70] sm:$0xff] %v528
        %547 = vst [vmem:[%s303 + $0x78] sm:$0xff] %v530
        %s548 = sand.u32 %s114, 1
        %s549 = sand.u32 %s114, 1
        %s550 = smul.addr %s549, 128
        %s551 = scalar_lea.vmem [#allocation3], %s550
        // Predicated region
        $region71: #{lstm_forward.7} parent=65 // pred_check
          %p552 = pneg %p124
        $region72: #{lstm_forward.7} parent=65 // pred_check_branch
          %554 = sbr.rel (%p552) target = $region74
        $region73: #{lstm_forward.7} parent=65 // pred_region
          %s555 = smul.u32 8, %s18
          %s556 = smul.u32 2, %s19
          %s557 = smul.addr %s555, 4
          %s558 = sadd.s32 %s556, %s557
          %s559 = smul.addr %s558, 8
          %s560 = scalar_lea.vmem %s3, %s559
          // Predicated region
          $region75: #{lstm_forward.7} parent=73 // pred_check
            _
          $region76: #{lstm_forward.7} parent=73 // pred_check_branch
            %562 = sbr.rel (0) target = $region78
          $region77: #{lstm_forward.7} parent=73 // pred_region
            // Predicated region
            $region79: #{lstm_forward.7} parent=77 // pred_check
              _
            $region80: #{lstm_forward.7} parent=77 // pred_check_branch
              %564 = sbr.rel (0) target = $region82
            $region81: #{lstm_forward.7} parent=77 // pred_region
              loop: start=0, step=1, limit=1
              $region83: #{lstm_forward.7} parent=81 // loop_pre_header
                _
              $region84: #{lstm_forward.7} parent=81 // loop_header
                %s566 = sphi 0, %s570
                %p567 = scmp.ge.s32.totalorder %s566, 1
                %s571 = sphi %s551, %s551
                %s572 = sphi %s560, %s560
              $region85: #{lstm_forward.7} parent=81 // loop_header_branch
                %569 = sbr.rel (%p567) target = $region89
              $region86: #{lstm_forward.7} parent=81 // loop_body
                %v573 = vld [vmem:[%s571] sm:$0xff]
                %574 = vst [vmem:[%s572] sm:$0xff] %v573
                %v575 = vld [vmem:[%s571 + $0x8] sm:$0xff]
                %576 = vst [vmem:[%s572 + $0x8] sm:$0xff] %v575
                %v577 = vld [vmem:[%s571 + $0x10] sm:$0xff]
                %578 = vst [vmem:[%s572 + $0x20] sm:$0xff] %v577
                %v579 = vld [vmem:[%s571 + $0x18] sm:$0xff]
                %580 = vst [vmem:[%s572 + $0x28] sm:$0xff] %v579
                %v581 = vld [vmem:[%s571 + $0x20] sm:$0xff]
                %582 = vst [vmem:[%s572 + $0x40] sm:$0xff] %v581
                %v583 = vld [vmem:[%s571 + $0x28] sm:$0xff]
                %584 = vst [vmem:[%s572 + $0x48] sm:$0xff] %v583
                %v585 = vld [vmem:[%s571 + $0x30] sm:$0xff]
                %586 = vst [vmem:[%s572 + $0x60] sm:$0xff] %v585
                %v587 = vld [vmem:[%s571 + $0x38] sm:$0xff]
                %588 = vst [vmem:[%s572 + $0x68] sm:$0xff] %v587
                %v589 = vld [vmem:[%s571 + $0x40] sm:$0xff]
                %590 = vst [vmem:[%s572 + $0x80] sm:$0xff] %v589
                %v591 = vld [vmem:[%s571 + $0x48] sm:$0xff]
                %592 = vst [vmem:[%s572 + $0x88] sm:$0xff] %v591
                %v593 = vld [vmem:[%s571 + $0x50] sm:$0xff]
                %594 = vst [vmem:[%s572 + $0xa0] sm:$0xff] %v593
                %v595 = vld [vmem:[%s571 + $0x58] sm:$0xff]
                %596 = vst [vmem:[%s572 + $0xa8] sm:$0xff] %v595
                %v597 = vld [vmem:[%s571 + $0x60] sm:$0xff]
                %598 = vst [vmem:[%s572 + $0xc0] sm:$0xff] %v597
                %v599 = vld [vmem:[%s571 + $0x68] sm:$0xff]
                %600 = vst [vmem:[%s572 + $0xc8] sm:$0xff] %v599
                %v601 = vld [vmem:[%s571 + $0x70] sm:$0xff]
                %602 = vst [vmem:[%s572 + $0xe0] sm:$0xff] %v601
                %v603 = vld [vmem:[%s571 + $0x78] sm:$0xff]
                %604 = vst [vmem:[%s572 + $0xe8] sm:$0xff] %v603
              $region87: #{lstm_forward.7} parent=81 // loop_footer
                %s570 = sadd.s32 1, %s566
              $region88: #{lstm_forward.7} parent=81 // loop_footer_branch
                %565 = sbr.rel target = $region84
              $region89: #{lstm_forward.7} parent=81 // loop_exit
                _
            $region82: #{lstm_forward.7} parent=77 // pred_fallthru
              _
            // Predicated region
            $region90: #{lstm_forward.7} parent=77 // pred_check
              _
            $region91: #{lstm_forward.7} parent=77 // pred_check_branch
              %606 = sbr.rel target = $region93
            $region92: #{lstm_forward.7} parent=77 // pred_region
              _
            $region93: #{lstm_forward.7} parent=77 // pred_fallthru
              _
          $region78: #{lstm_forward.7} parent=73 // pred_fallthru
            _
          %607 = vnop
        $region74: #{lstm_forward.7} parent=65 // pred_fallthru
          _
      $region66: #{lstm_forward.7} parent=5 // pred_fallthru
        _
      %p608 = scmp.le.s32.totalorder 2, %s9
      // Predicated region
      $region94: #{lstm_forward.7} parent=5 // pred_check
        %p609 = pneg %p608
      $region95: #{lstm_forward.7} parent=5 // pred_check_branch
        %611 = sbr.rel (%p609) target = $region97
      $region96: #{lstm_forward.7} parent=5 // pred_region
        %s612 = ssub.s32 %s9, 2
        // Predicated region
        $region98: #{lstm_forward.7} parent=96 // pred_check
          %p613 = pneg %p130
        $region99: #{lstm_forward.7} parent=96 // pred_check_branch
          %615 = sbr.rel (%p613) target = $region101
        $region100: #{lstm_forward.7} parent=96 // pred_region
          %s616 = sand.u32 %s115, 1
          %s617 = sand.u32 %s115, 1
          %s618 = smul.addr %s617, 128
          %s619 = scalar_lea.vmem [#allocation3], %s618
        $region101: #{lstm_forward.7} parent=96 // pred_fallthru
          _
      $region97: #{lstm_forward.7} parent=5 // pred_fallthru
        _
    $region6: #{lstm_forward.7} parent=1 // loop_footer
      %s13 = sadd.s32 1, %s9
    $region7: #{lstm_forward.7} parent=1 // loop_footer_branch
      %8 = sbr.rel target = $region3
    $region8: #{lstm_forward.7} parent=1 // loop_exit
      _

// kernel: lstm_forward.9
$region0: #{lstm_forward.9}
  #allocation0 [shape = 'u32[]', space=smem, size = 0x4, offset = 0x4, fixed_abs, tag = 'smem constant byte address 0x4 - core index']
  #allocation1 [shape = 'u32[144,128]{1,0:T(1,128)}', space=vmem, size = 0x12000, scoped, tag = 'internal scratch']
  %s0 = inlined_call_operand.vmem [shape: bf16[64,128], index: 0, kind: input, shape index: {}]
  %s1 = inlined_call_operand.vmem [shape: bf16[128,128], index: 1, kind: input, shape index: {}]
  %s2 = inlined_call_operand.vmem [shape: f32[1,128], index: 2, kind: input, shape index: {}]
  %s3 = inlined_call_operand.vmem [shape: f32[64,128], index: 3, kind: output, shape index: {}]
  %s4 = sld [smem:[#allocation0]]
  $region22: #{lstm_forward.9} parent=0
    _
  %s6 = ssub.s32 1, %s4
  %s7 = scalar_select 0, %s6, %s4
  // Predicated region
  $region2: #{lstm_forward.9} parent=0 // pred_check
    _
  $region3: #{lstm_forward.9} parent=0 // pred_check_branch
    %9 = sbr.rel (0) target = $region5
  $region4: #{lstm_forward.9} parent=0 // pred_region
    _
  $region5: #{lstm_forward.9} parent=0 // pred_fallthru
    _
  // Predicated region
  $region6: #{lstm_forward.9} parent=0 // pred_check
    _
  $region7: #{lstm_forward.9} parent=0 // pred_check_branch
    %11 = sbr.rel (0) target = $region9
  $region8: #{lstm_forward.9} parent=0 // pred_region
    _
  $region9: #{lstm_forward.9} parent=0 // pred_fallthru
    _
  // Predicated region
  $region10: #{lstm_forward.9} parent=0 // pred_check
    _
  $region11: #{lstm_forward.9} parent=0 // pred_check_branch
    %13 = sbr.rel (0) target = $region13
  $region12: #{lstm_forward.9} parent=0 // pred_region
    _
  $region13: #{lstm_forward.9} parent=0 // pred_fallthru
    _
  %v15 = vld [vmem:[%s0] sm:$0xf]
  %v16 = vld [vmem:[%s0 + $0x4] sm:$0xf]
  %v17 = vld [vmem:[%s0 + $0x8] sm:$0xf]
  %v18 = vld [vmem:[%s0 + $0xc] sm:$0xf]
  %v19 = vld [vmem:[%s0 + $0x10] sm:$0xf]
  %v20 = vld [vmem:[%s0 + $0x14] sm:$0xf]
  %v21 = vld [vmem:[%s0 + $0x18] sm:$0xf]
  %v22 = vld [vmem:[%s0 + $0x1c] sm:$0xf]
  %v23 = vld [vmem:[%s1] sm:$0xf]
  %v24 = vld [vmem:[%s1 + $0x4] sm:$0xf]
  %v25 = vld [vmem:[%s1 + $0x8] sm:$0xf]
  %v26 = vld [vmem:[%s1 + $0xc] sm:$0xf]
  %v27 = vld [vmem:[%s1 + $0x10] sm:$0xf]
  %v28 = vld [vmem:[%s1 + $0x14] sm:$0xf]
  %v29 = vld [vmem:[%s1 + $0x18] sm:$0xf]
  %v30 = vld [vmem:[%s1 + $0x1c] sm:$0xf]
  %v31 = vld [vmem:[%s1 + $0x20] sm:$0xf]
  %v32 = vld [vmem:[%s1 + $0x24] sm:$0xf]
  %v33 = vld [vmem:[%s1 + $0x28] sm:$0xf]
  %v34 = vld [vmem:[%s1 + $0x2c] sm:$0xf]
  %v35 = vld [vmem:[%s1 + $0x30] sm:$0xf]
  %v36 = vld [vmem:[%s1 + $0x34] sm:$0xf]
  %v37 = vld [vmem:[%s1 + $0x38] sm:$0xf]
  %v38 = vld [vmem:[%s1 + $0x3c] sm:$0xf]
  %v39 = vld [vmem:[%s2] sm:$0x1]
  %v41 = vlaneseq
  %v42 = vshrl.u32 %v41, 7
  %v43 = vsub.s32 0, %v42
  %v44 = vrot.slane %v39, %v43
  %v54 = vunpack.c.l.b16 %v15
  %v55 = vunpack.c.l.b16 %v16
  %v56 = vunpack.c.l.b16 %v17
  %v57 = vunpack.c.l.b16 %v18
  %v58 = vunpack.c.l.b16 %v19
  %v59 = vunpack.c.l.b16 %v20
  %v60 = vunpack.c.l.b16 %v21
  %v61 = vunpack.c.l.b16 %v22
  %v62 = vpack.c.b16 %v55, %v54
  %v63 = vpack.c.b16 %v57, %v56
  %v64 = vpack.c.b16 %v59, %v58
  %v65 = vpack.c.b16 %v61, %v60
  %v86 = vunpack.c.l.b16 %v23
  %v87 = vunpack.c.l.b16 %v24
  %v88 = vunpack.c.l.b16 %v25
  %v89 = vunpack.c.l.b16 %v26
  %v90 = vunpack.c.l.b16 %v27
  %v91 = vunpack.c.l.b16 %v28
  %v92 = vunpack.c.l.b16 %v29
  %v93 = vunpack.c.l.b16 %v30
  %v94 = vunpack.c.l.b16 %v31
  %v95 = vunpack.c.l.b16 %v32
  %v96 = vunpack.c.l.b16 %v33
  %v97 = vunpack.c.l.b16 %v34
  %v98 = vunpack.c.l.b16 %v35
  %v99 = vunpack.c.l.b16 %v36
  %v100 = vunpack.c.l.b16 %v37
  %v101 = vunpack.c.l.b16 %v38
  %v102 = vpack.c.b16 %v87, %v86
  %v103 = vpack.c.b16 %v89, %v88
  %v104 = vpack.c.b16 %v91, %v90
  %v105 = vpack.c.b16 %v93, %v92
  %v106 = vpack.c.b16 %v95, %v94
  %v107 = vpack.c.b16 %v97, %v96
  %v108 = vpack.c.b16 %v99, %v98
  %v109 = vpack.c.b16 %v101, %v100
  %118 = vmatprep.subr.bf16.mxu0 0
  %119 = vmatpush1.bf16.msra.mxu0 %v102
  %120 = vmatprep.subr.bf16.mxu0 0
  %121 = vmatpush1.bf16.msra.mxu0 %v103
  %122 = vmatprep.subr.bf16.mxu0 0
  %123 = vmatpush1.bf16.msra.mxu0 %v104
  %124 = vmatprep.subr.bf16.mxu0 0
  %125 = vmatpush1.bf16.msra.mxu0 %v105
  %126 = vmatprep.subr.bf16.mxu0 0
  %127 = vmatpush1.bf16.msra.mxu0 %v106
  %128 = vmatprep.subr.bf16.mxu0 0
  %129 = vmatpush1.bf16.msra.mxu0 %v107
  %130 = vmatprep.subr.bf16.mxu0 0
  %131 = vmatpush1.bf16.msra.mxu0 %v108
  %132 = vmatprep.subr.bf16.mxu0 0
  %133 = vmatpush1.bf16.msra.mxu0 %v109
  %134 = vmatprep.subr.bf16.mxu0 0
  %135 = vmatpush1.bf16.msra.mxu0 0
  %136 = vmatprep.subr.bf16.mxu0 0
  %137 = vmatpush1.bf16.msra.mxu0 0
  %138 = vmatprep.subr.bf16.mxu0 0
  %139 = vmatpush1.bf16.msra.mxu0 0
  %140 = vmatprep.subr.bf16.mxu0 0
  %141 = vmatpush1.bf16.msra.mxu0 0
  %142 = vmatprep.subr.bf16.mxu0 0
  %143 = vmatpush1.bf16.msra.mxu0 0
  %144 = vmatprep.subr.bf16.mxu0 0
  %145 = vmatpush1.bf16.msra.mxu0 0
  %146 = vmatprep.subr.bf16.mxu0 0
  %147 = vmatpush1.bf16.msra.mxu0 0
  %148 = vmatprep.subr.bf16.mxu0 0
  %149 = vmatpush1.bf16.msra.mxu0 0
  %150 = vmatprep.mubr.bf16.mxu0 0
  %151 = vmatmul.mubr.bf16.gmra.mrb[0].mxu0 %v62
  %v152 = vpop.f32.mrb[0].mxu0
  %v153 = vadd.f32 %v44, %v152
  %v154 = vpop.f32.mrb[0].mxu0
  %v155 = vpop.f32.mrb[0].mxu0
  %v156 = vadd.f32 %v44, %v155
  %v157 = vpop.f32.mrb[0].mxu0
  %158 = vmatprep.mubr.bf16.mxu0 0
  %159 = vmatmul.mubr.bf16.gmra.mrb[0].mxu0 %v63
  %v160 = vpop.f32.mrb[0].mxu0
  %v161 = vadd.f32 %v44, %v160
  %v162 = vpop.f32.mrb[0].mxu0
  %v163 = vpop.f32.mrb[0].mxu0
  %v164 = vadd.f32 %v44, %v163
  %v165 = vpop.f32.mrb[0].mxu0
  %166 = vmatprep.mubr.bf16.mxu0 0
  %167 = vmatmul.mubr.bf16.gmra.mrb[0].mxu0 %v64
  %v168 = vpop.f32.mrb[0].mxu0
  %v169 = vadd.f32 %v44, %v168
  %v170 = vpop.f32.mrb[0].mxu0
  %v171 = vpop.f32.mrb[0].mxu0
  %v172 = vadd.f32 %v44, %v171
  %v173 = vpop.f32.mrb[0].mxu0
  %174 = vmatprep.mubr.bf16.mxu0 0
  %175 = vmatmul.mubr.bf16.gmra.mrb[0].mxu0 %v65
  %v176 = vpop.f32.mrb[0].mxu0
  %v177 = vadd.f32 %v44, %v176
  %v178 = vpop.f32.mrb[0].mxu0
  %v179 = vpop.f32.mrb[0].mxu0
  %v180 = vadd.f32 %v44, %v179
  %v181 = vpop.f32.mrb[0].mxu0
  %182 = vdwg.mxu0
  %183 = vst [vmem:[%s3] sm:$0xff] %v153
  %184 = vst [vmem:[%s3 + $0x8] sm:$0xff] %v156
  %185 = vst [vmem:[%s3 + $0x10] sm:$0xff] %v161
  %186 = vst [vmem:[%s3 + $0x18] sm:$0xff] %v164
  %187 = vst [vmem:[%s3 + $0x20] sm:$0xff] %v169
  %188 = vst [vmem:[%s3 + $0x28] sm:$0xff] %v172
  %189 = vst [vmem:[%s3 + $0x30] sm:$0xff] %v177
  %190 = vst [vmem:[%s3 + $0x38] sm:$0xff] %v180
  // Predicated region
  $region14: #{lstm_forward.9} parent=0 // pred_check
    _
  $region15: #{lstm_forward.9} parent=0 // pred_check_branch
    %192 = sbr.rel (0) target = $region17
  $region16: #{lstm_forward.9} parent=0 // pred_region
    _
  $region17: #{lstm_forward.9} parent=0 // pred_fallthru
    _
  // Predicated region
  $region18: #{lstm_forward.9} parent=0 // pred_check
    _
  $region19: #{lstm_forward.9} parent=0 // pred_check_branch
    %194 = sbr.rel (0) target = $region21
  $region20: #{lstm_forward.9} parent=0 // pred_region
    _
  $region21: #{lstm_forward.9} parent=0 // pred_fallthru
    _

// kernel: lstm_forward.6
$region0: #{lstm_forward.6}
  #allocation0 [shape = 'u32[]', space=smem, size = 0x4, offset = 0x4, fixed_abs, tag = 'smem constant byte address 0x4 - core index']
  #allocation1 [shape = 'u32[144,128]{1,0:T(1,128)}', space=vmem, size = 0x12000, scoped, tag = 'internal scratch']
  #allocation2 [shape = 'f32[8,128]{1,0:T(8,128)}', space=vmem, size = 0x1000, scoped, tag = 'scratch operand']
  #allocation3 [shape = 'f32[8,128]{1,0:T(8,128)}', space=vmem, size = 0x1000, scoped, tag = 'scratch operand']
  %s0 = inlined_call_operand.vmem [shape: f32[8,8,512], index: 0, kind: input, shape index: {}]
  %s1 = inlined_call_operand.vmem [shape: bf16[128,512], index: 1, kind: input, shape index: {}]
  %s2 = inlined_call_operand.vmem [shape: f32[8,128], index: 2, kind: input, shape index: {}]
  %s3 = inlined_call_operand.vmem [shape: f32[8,128], index: 3, kind: input, shape index: {}]
  %s4 = inlined_call_operand.vmem [shape: bf16[8,8,128], index: 4, kind: output, shape index: {}]
  %s5 = sld [smem:[#allocation0]]
  $region30: #{lstm_forward.6} parent=0
    _
  %s7 = ssub.s32 1, %s5
  %s8 = scalar_select 0, %s7, %s5
  // Predicated region
  $region2: #{lstm_forward.6} parent=0 // pred_check
    _
  $region3: #{lstm_forward.6} parent=0 // pred_check_branch
    %10 = sbr.rel (0) target = $region5
  $region4: #{lstm_forward.6} parent=0 // pred_region
    _
  $region5: #{lstm_forward.6} parent=0 // pred_fallthru
    _
  // Predicated region
  $region6: #{lstm_forward.6} parent=0 // pred_check
    _
  $region7: #{lstm_forward.6} parent=0 // pred_check_branch
    %12 = sbr.rel (0) target = $region9
  $region8: #{lstm_forward.6} parent=0 // pred_region
    _
  $region9: #{lstm_forward.6} parent=0 // pred_fallthru
    _
  // Predicated region
  $region10: #{lstm_forward.6} parent=0 // pred_check
    _
  $region11: #{lstm_forward.6} parent=0 // pred_check_branch
    %14 = sbr.rel (0) target = $region13
  $region12: #{lstm_forward.6} parent=0 // pred_region
    _
  $region13: #{lstm_forward.6} parent=0 // pred_fallthru
    _
  // Predicated region
  $region14: #{lstm_forward.6} parent=0 // pred_check
    _
  $region15: #{lstm_forward.6} parent=0 // pred_check_branch
    %16 = sbr.rel (0) target = $region17
  $region16: #{lstm_forward.6} parent=0 // pred_region
    _
  $region17: #{lstm_forward.6} parent=0 // pred_fallthru
    _
  %p18 = scmp.eq.s32.totalorder 0, 0
  // Predicated region
  $region18: #{lstm_forward.6} parent=0 // pred_check
    %p19 = pneg %p18
  $region19: #{lstm_forward.6} parent=0 // pred_check_branch
    %21 = sbr.rel (%p19) target = $region21
  $region20: #{lstm_forward.6} parent=0 // pred_region
    %v22 = vld [vmem:[%s2] sm:$0xff]
    %23 = vst [vmem:[#allocation2] sm:$0xff] %v22
    %v24 = vld [vmem:[%s3] sm:$0xff]
    %25 = vst [vmem:[#allocation3] sm:$0xff] %v24
  $region21: #{lstm_forward.6} parent=0 // pred_fallthru
    _
  %v26 = vld [vmem:[#allocation2] sm:$0xff]
  %v27 = vld [vmem:[#allocation3] sm:$0xff]
  %v28 = vld [vmem:[%s0] sm:$0xff]
  %v29 = vld [vmem:[%s0 + $0x8] sm:$0xff]
  %v30 = vld [vmem:[%s0 + $0x10] sm:$0xff]
  %v31 = vld [vmem:[%s0 + $0x18] sm:$0xff]
  %v32 = vpack.c.bf16 %v26, %v26
  %v33 = vld [vmem:[%s1] sm:$0xff]
  %v34 = vld [vmem:[%s1 + $0x8] sm:$0xff]
  %v35 = vld [vmem:[%s1 + $0x10] sm:$0xff]
  %v36 = vld [vmem:[%s1 + $0x18] sm:$0xff]
  %v37 = vld [vmem:[%s1 + $0x20] sm:$0xff]
  %v38 = vld [vmem:[%s1 + $0x28] sm:$0xff]
  %v39 = vld [vmem:[%s1 + $0x30] sm:$0xff]
  %v40 = vld [vmem:[%s1 + $0x38] sm:$0xff]
  %v41 = vld [vmem:[%s1 + $0x40] sm:$0xff]
  %v42 = vld [vmem:[%s1 + $0x48] sm:$0xff]
  %v43 = vld [vmem:[%s1 + $0x50] sm:$0xff]
  %v44 = vld [vmem:[%s1 + $0x58] sm:$0xff]
  %v45 = vld [vmem:[%s1 + $0x60] sm:$0xff]
  %v46 = vld [vmem:[%s1 + $0x68] sm:$0xff]
  %v47 = vld [vmem:[%s1 + $0x70] sm:$0xff]
  %v48 = vld [vmem:[%s1 + $0x78] sm:$0xff]
  %v49 = vld [vmem:[%s1 + $0x80] sm:$0xff]
  %v50 = vld [vmem:[%s1 + $0x88] sm:$0xff]
  %v51 = vld [vmem:[%s1 + $0x90] sm:$0xff]
  %v52 = vld [vmem:[%s1 + $0x98] sm:$0xff]
  %v53 = vld [vmem:[%s1 + $0xa0] sm:$0xff]
  %v54 = vld [vmem:[%s1 + $0xa8] sm:$0xff]
  %v55 = vld [vmem:[%s1 + $0xb0] sm:$0xff]
  %v56 = vld [vmem:[%s1 + $0xb8] sm:$0xff]
  %v57 = vld [vmem:[%s1 + $0xc0] sm:$0xff]
  %v58 = vld [vmem:[%s1 + $0xc8] sm:$0xff]
  %v59 = vld [vmem:[%s1 + $0xd0] sm:$0xff]
  %v60 = vld [vmem:[%s1 + $0xd8] sm:$0xff]
  %v61 = vld [vmem:[%s1 + $0xe0] sm:$0xff]
  %v62 = vld [vmem:[%s1 + $0xe8] sm:$0xff]
  %v63 = vld [vmem:[%s1 + $0xf0] sm:$0xff]
  %v64 = vld [vmem:[%s1 + $0xf8] sm:$0xff]
  %v97 = vunpack.c.l.b16 %v33
  %v98 = vunpack.c.h.b16 %v33
  %v99 = vunpack.c.l.b16 %v34
  %v100 = vunpack.c.h.b16 %v34
  %v101 = vunpack.c.l.b16 %v35
  %v102 = vunpack.c.h.b16 %v35
  %v103 = vunpack.c.l.b16 %v36
  %v104 = vunpack.c.h.b16 %v36
  %v105 = vunpack.c.l.b16 %v37
  %v106 = vunpack.c.h.b16 %v37
  %v107 = vunpack.c.l.b16 %v38
  %v108 = vunpack.c.h.b16 %v38
  %v109 = vunpack.c.l.b16 %v39
  %v110 = vunpack.c.h.b16 %v39
  %v111 = vunpack.c.l.b16 %v40
  %v112 = vunpack.c.h.b16 %v40
  %v113 = vunpack.c.l.b16 %v41
  %v114 = vunpack.c.h.b16 %v41
  %v115 = vunpack.c.l.b16 %v42
  %v116 = vunpack.c.h.b16 %v42
  %v117 = vunpack.c.l.b16 %v43
  %v118 = vunpack.c.h.b16 %v43
  %v119 = vunpack.c.l.b16 %v44
  %v120 = vunpack.c.h.b16 %v44
  %v121 = vunpack.c.l.b16 %v45
  %v122 = vunpack.c.h.b16 %v45
  %v123 = vunpack.c.l.b16 %v46
  %v124 = vunpack.c.h.b16 %v46
  %v125 = vunpack.c.l.b16 %v47
  %v126 = vunpack.c.h.b16 %v47
  %v127 = vunpack.c.l.b16 %v48
  %v128 = vunpack.c.h.b16 %v48
  %v129 = vunpack.c.l.b16 %v49
  %v130 = vunpack.c.h.b16 %v49
  %v131 = vunpack.c.l.b16 %v50
  %v132 = vunpack.c.h.b16 %v50
  %v133 = vunpack.c.l.b16 %v51
  %v134 = vunpack.c.h.b16 %v51
  %v135 = vunpack.c.l.b16 %v52
  %v136 = vunpack.c.h.b16 %v52
  %v137 = vunpack.c.l.b16 %v53
  %v138 = vunpack.c.h.b16 %v53
  %v139 = vunpack.c.l.b16 %v54
  %v140 = vunpack.c.h.b16 %v54
  %v141 = vunpack.c.l.b16 %v55
  %v142 = vunpack.c.h.b16 %v55
  %v143 = vunpack.c.l.b16 %v56
  %v144 = vunpack.c.h.b16 %v56
  %v145 = vunpack.c.l.b16 %v57
  %v146 = vunpack.c.h.b16 %v57
  %v147 = vunpack.c.l.b16 %v58
  %v148 = vunpack.c.h.b16 %v58
  %v149 = vunpack.c.l.b16 %v59
  %v150 = vunpack.c.h.b16 %v59
  %v151 = vunpack.c.l.b16 %v60
  %v152 = vunpack.c.h.b16 %v60
  %v153 = vunpack.c.l.b16 %v61
  %v154 = vunpack.c.h.b16 %v61
  %v155 = vunpack.c.l.b16 %v62
  %v156 = vunpack.c.h.b16 %v62
  %v157 = vunpack.c.l.b16 %v63
  %v158 = vunpack.c.h.b16 %v63
  %v159 = vunpack.c.l.b16 %v64
  %v160 = vunpack.c.h.b16 %v64
  %v161 = vpack.c.b16 %v101, %v97
  %v162 = vpack.c.b16 %v102, %v98
  %v163 = vpack.c.b16 %v103, %v99
  %v164 = vpack.c.b16 %v104, %v100
  %v165 = vpack.c.b16 %v109, %v105
  %v166 = vpack.c.b16 %v110, %v106
  %v167 = vpack.c.b16 %v111, %v107
  %v168 = vpack.c.b16 %v112, %v108
  %v169 = vpack.c.b16 %v117, %v113
  %v170 = vpack.c.b16 %v118, %v114
  %v171 = vpack.c.b16 %v119, %v115
  %v172 = vpack.c.b16 %v120, %v116
  %v173 = vpack.c.b16 %v125, %v121
  %v174 = vpack.c.b16 %v126, %v122
  %v175 = vpack.c.b16 %v127, %v123
  %v176 = vpack.c.b16 %v128, %v124
  %v177 = vpack.c.b16 %v133, %v129
  %v178 = vpack.c.b16 %v134, %v130
  %v179 = vpack.c.b16 %v135, %v131
  %v180 = vpack.c.b16 %v136, %v132
  %v181 = vpack.c.b16 %v141, %v137
  %v182 = vpack.c.b16 %v142, %v138
  %v183 = vpack.c.b16 %v143, %v139
  %v184 = vpack.c.b16 %v144, %v140
  %v185 = vpack.c.b16 %v149, %v145
  %v186 = vpack.c.b16 %v150, %v146
  %v187 = vpack.c.b16 %v151, %v147
  %v188 = vpack.c.b16 %v152, %v148
  %v189 = vpack.c.b16 %v157, %v153
  %v190 = vpack.c.b16 %v158, %v154
  %v191 = vpack.c.b16 %v159, %v155
  %v192 = vpack.c.b16 %v160, %v156
  %225 = vmatprep.subr.bf16.mxu0 %v162
  %226 = vmatpush1.bf16.msra.mxu0 %v161
  %227 = vmatprep.subr.bf16.mxu0 %v166
  %228 = vmatpush1.bf16.msra.mxu0 %v165
  %229 = vmatprep.subr.bf16.mxu0 %v170
  %230 = vmatpush1.bf16.msra.mxu0 %v169
  %231 = vmatprep.subr.bf16.mxu0 %v174
  %232 = vmatpush1.bf16.msra.mxu0 %v173
  %233 = vmatprep.subr.bf16.mxu0 %v178
  %234 = vmatpush1.bf16.msra.mxu0 %v177
  %235 = vmatprep.subr.bf16.mxu0 %v182
  %236 = vmatpush1.bf16.msra.mxu0 %v181
  %237 = vmatprep.subr.bf16.mxu0 %v186
  %238 = vmatpush1.bf16.msra.mxu0 %v185
  %239 = vmatprep.subr.bf16.mxu0 %v190
  %240 = vmatpush1.bf16.msra.mxu0 %v189
  %241 = vmatprep.subr.bf16.mxu0 0
  %242 = vmatpush1.bf16.msra.mxu0 0
  %243 = vmatprep.subr.bf16.mxu0 0
  %244 = vmatpush1.bf16.msra.mxu0 0
  %245 = vmatprep.subr.bf16.mxu0 0
  %246 = vmatpush1.bf16.msra.mxu0 0
  %247 = vmatprep.subr.bf16.mxu0 0
  %248 = vmatpush1.bf16.msra.mxu0 0
  %249 = vmatprep.subr.bf16.mxu0 0
  %250 = vmatpush1.bf16.msra.mxu0 0
  %251 = vmatprep.subr.bf16.mxu0 0
  %252 = vmatpush1.bf16.msra.mxu0 0
  %253 = vmatprep.subr.bf16.mxu0 0
  %254 = vmatpush1.bf16.msra.mxu0 0
  %255 = vmatprep.subr.bf16.mxu0 0
  %256 = vmatpush1.bf16.msra.mxu0 0
  %257 = vmatprep.mubr.bf16.mxu0 0
  %258 = vmatmul.mubr.bf16.gmra.mrb[0].mxu0 %v32
  %v259 = vpop.f32.mrb[0].mxu0
  %v260 = vadd.f32 0.0, %v259
  %v261 = vpop.f32.mrb[0].mxu0
  %v262 = vadd.f32 0.0, %v261
  %v263 = vpop.f32.mrb[0].mxu0
  %v264 = vpop.f32.mrb[0].mxu0
  %265 = vdwg.mxu0
  %266 = vmatprep.subr.bf16.mxu0 %v164
  %267 = vmatpush1.bf16.msra.mxu0 %v163
  %268 = vmatprep.subr.bf16.mxu0 %v168
  %269 = vmatpush1.bf16.msra.mxu0 %v167
  %270 = vmatprep.subr.bf16.mxu0 %v172
  %271 = vmatpush1.bf16.msra.mxu0 %v171
  %272 = vmatprep.subr.bf16.mxu0 %v176
  %273 = vmatpush1.bf16.msra.mxu0 %v175
  %274 = vmatprep.subr.bf16.mxu0 %v180
  %275 = vmatpush1.bf16.msra.mxu0 %v179
  %276 = vmatprep.subr.bf16.mxu0 %v184
  %277 = vmatpush1.bf16.msra.mxu0 %v183
  %278 = vmatprep.subr.bf16.mxu0 %v188
  %279 = vmatpush1.bf16.msra.mxu0 %v187
  %280 = vmatprep.subr.bf16.mxu0 %v192
  %281 = vmatpush1.bf16.msra.mxu0 %v191
  %282 = vmatprep.subr.bf16.mxu0 0
  %283 = vmatpush1.bf16.msra.mxu0 0
  %284 = vmatprep.subr.bf16.mxu0 0
  %285 = vmatpush1.bf16.msra.mxu0 0
  %286 = vmatprep.subr.bf16.mxu0 0
  %287 = vmatpush1.bf16.msra.mxu0 0
  %288 = vmatprep.subr.bf16.mxu0 0
  %289 = vmatpush1.bf16.msra.mxu0 0
  %290 = vmatprep.subr.bf16.mxu0 0
  %291 = vmatpush1.bf16.msra.mxu0 0
  %292 = vmatprep.subr.bf16.mxu0 0
  %293 = vmatpush1.bf16.msra.mxu0 0
  %294 = vmatprep.subr.bf16.mxu0 0
  %295 = vmatpush1.bf16.msra.mxu0 0
  %296 = vmatprep.subr.bf16.mxu0 0
  %297 = vmatpush1.bf16.msra.mxu0 0
  %298 = vmatprep.mubr.bf16.mxu0 0
  %299 = vmatmul.mubr.bf16.gmra.mrb[0].mxu0 %v32
  %v300 = vpop.f32.mrb[0].mxu0
  %v301 = vadd.f32 0.0, %v300
  %v302 = vpop.f32.mrb[0].mxu0
  %v303 = vadd.f32 0.0, %v302
  %v304 = vpop.f32.mrb[0].mxu0
  %v305 = vpop.f32.mrb[0].mxu0
  %306 = vdwg.mxu0
  %v307 = vadd.f32 %v28, %v260
  %v308 = vadd.f32 %v29, %v262
  %v309 = vadd.f32 %v30, %v301
  %v310 = vadd.f32 %v31, %v303
  %v311 = vxor.u32 %v307, 2147483648
  %v312 = vmul.f32 %v311, 1.442695
  %v313 = vpow.pop %v312
  %v314 = vadd.f32 %v313, 1.0
  %v315 = vrcp.pop %v314
  %v316 = vmul.f32 1.0, %v315
  %v317 = vxor.u32 %v308, 2147483648
  %v318 = vmul.f32 %v317, 1.442695
  %v319 = vpow.pop %v318
  %v320 = vadd.f32 %v319, 1.0
  %v321 = vrcp.pop %v320
  %v322 = vmul.f32 1.0, %v321
  %v323 = vtanh.pop %v309
  %v324 = vxor.u32 %v310, 2147483648
  %v325 = vmul.f32 %v324, 1.442695
  %v326 = vpow.pop %v325
  %v327 = vadd.f32 %v326, 1.0
  %v328 = vrcp.pop %v327
  %v329 = vmul.f32 1.0, %v328
  %v330 = vmul.f32 %v322, %v27
  %v331 = vmul.f32 %v316, %v323
  %v332 = vadd.f32 %v330, %v331
  %v333 = vtanh.pop %v332
  %v334 = vmul.f32 %v329, %v333
  %v335 = vpack.c.bf16 %v334, %v334
  %336 = vst [vmem:[%s4] sm:$0xf] %v335
  %s337 = scalar_lea.vmem %s0, 32
  %v338 = vld [vmem:[%s337] sm:$0xff]
  %v339 = vld [vmem:[%s337 + $0x8] sm:$0xff]
  %v340 = vld [vmem:[%s337 + $0x10] sm:$0xff]
  %v341 = vld [vmem:[%s337 + $0x18] sm:$0xff]
  %v342 = vld [vmem:[%s1] sm:$0xff]
  %v343 = vld [vmem:[%s1 + $0x8] sm:$0xff]
  %v344 = vld [vmem:[%s1 + $0x10] sm:$0xff]
  %v345 = vld [vmem:[%s1 + $0x18] sm:$0xff]
  %v346 = vld [vmem:[%s1 + $0x20] sm:$0xff]
  %v347 = vld [vmem:[%s1 + $0x28] sm:$0xff]
  %v348 = vld [vmem:[%s1 + $0x30] sm:$0xff]
  %v349 = vld [vmem:[%s1 + $0x38] sm:$0xff]
  %v350 = vld [vmem:[%s1 + $0x40] sm:$0xff]
  %v351 = vld [vmem:[%s1 + $0x48] sm:$0xff]
  %v352 = vld [vmem:[%s1 + $0x50] sm:$0xff]
  %v353 = vld [vmem:[%s1 + $0x58] sm:$0xff]
  %v354 = vld [vmem:[%s1 + $0x60] sm:$0xff]
  %v355 = vld [vmem:[%s1 + $0x68] sm:$0xff]
  %v356 = vld [vmem:[%s1 + $0x70] sm:$0xff]
  %v357 = vld [vmem:[%s1 + $0x78] sm:$0xff]
  %v358 = vld [vmem:[%s1 + $0x80] sm:$0xff]
  %v359 = vld [vmem:[%s1 + $0x88] sm:$0xff]
  %v360 = vld [vmem:[%s1 + $0x90] sm:$0xff]
  %v361 = vld [vmem:[%s1 + $0x98] sm:$0xff]
  %v362 = vld [vmem:[%s1 + $0xa0] sm:$0xff]
  %v363 = vld [vmem:[%s1 + $0xa8] sm:$0xff]
  %v364 = vld [vmem:[%s1 + $0xb0] sm:$0xff]
  %v365 = vld [vmem:[%s1 + $0xb8] sm:$0xff]
  %v366 = vld [vmem:[%s1 + $0xc0] sm:$0xff]
  %v367 = vld [vmem:[%s1 + $0xc8] sm:$0xff]
  %v368 = vld [vmem:[%s1 + $0xd0] sm:$0xff]
  %v369 = vld [vmem:[%s1 + $0xd8] sm:$0xff]
  %v370 = vld [vmem:[%s1 + $0xe0] sm:$0xff]
  %v371 = vld [vmem:[%s1 + $0xe8] sm:$0xff]
  %v372 = vld [vmem:[%s1 + $0xf0] sm:$0xff]
  %v373 = vld [vmem:[%s1 + $0xf8] sm:$0xff]
  %v406 = vunpack.c.l.b16 %v342
  %v407 = vunpack.c.h.b16 %v342
  %v408 = vunpack.c.l.b16 %v343
  %v409 = vunpack.c.h.b16 %v343
  %v410 = vunpack.c.l.b16 %v344
  %v411 = vunpack.c.h.b16 %v344
  %v412 = vunpack.c.l.b16 %v345
  %v413 = vunpack.c.h.b16 %v345
  %v414 = vunpack.c.l.b16 %v346
  %v415 = vunpack.c.h.b16 %v346
  %v416 = vunpack.c.l.b16 %v347
  %v417 = vunpack.c.h.b16 %v347
  %v418 = vunpack.c.l.b16 %v348
  %v419 = vunpack.c.h.b16 %v348
  %v420 = vunpack.c.l.b16 %v349
  %v421 = vunpack.c.h.b16 %v349
  %v422 = vunpack.c.l.b16 %v350
  %v423 = vunpack.c.h.b16 %v350
  %v424 = vunpack.c.l.b16 %v351
  %v425 = vunpack.c.h.b16 %v351
  %v426 = vunpack.c.l.b16 %v352
  %v427 = vunpack.c.h.b16 %v352
  %v428 = vunpack.c.l.b16 %v353
  %v429 = vunpack.c.h.b16 %v353
  %v430 = vunpack.c.l.b16 %v354
  %v431 = vunpack.c.h.b16 %v354
  %v432 = vunpack.c.l.b16 %v355
  %v433 = vunpack.c.h.b16 %v355
  %v434 = vunpack.c.l.b16 %v356
  %v435 = vunpack.c.h.b16 %v356
  %v436 = vunpack.c.l.b16 %v357
  %v437 = vunpack.c.h.b16 %v357
  %v438 = vunpack.c.l.b16 %v358
  %v439 = vunpack.c.h.b16 %v358
  %v440 = vunpack.c.l.b16 %v359
  %v441 = vunpack.c.h.b16 %v359
  %v442 = vunpack.c.l.b16 %v360
  %v443 = vunpack.c.h.b16 %v360
  %v444 = vunpack.c.l.b16 %v361
  %v445 = vunpack.c.h.b16 %v361
  %v446 = vunpack.c.l.b16 %v362
  %v447 = vunpack.c.h.b16 %v362
  %v448 = vunpack.c.l.b16 %v363
  %v449 = vunpack.c.h.b16 %v363
  %v450 = vunpack.c.l.b16 %v364
  %v451 = vunpack.c.h.b16 %v364
  %v452 = vunpack.c.l.b16 %v365
  %v453 = vunpack.c.h.b16 %v365
  %v454 = vunpack.c.l.b16 %v366
  %v455 = vunpack.c.h.b16 %v366
  %v456 = vunpack.c.l.b16 %v367
  %v457 = vunpack.c.h.b16 %v367
  %v458 = vunpack.c.l.b16 %v368
  %v459 = vunpack.c.h.b16 %v368
  %v460 = vunpack.c.l.b16 %v369
  %v461 = vunpack.c.h.b16 %v369
  %v462 = vunpack.c.l.b16 %v370
  %v463 = vunpack.c.h.b16 %v370
  %v464 = vunpack.c.l.b16 %v371
  %v465 = vunpack.c.h.b16 %v371
  %v466 = vunpack.c.l.b16 %v372
  %v467 = vunpack.c.h.b16 %v372
  %v468 = vunpack.c.l.b16 %v373
  %v469 = vunpack.c.h.b16 %v373
  %v470 = vpack.c.b16 %v410, %v406
  %v471 = vpack.c.b16 %v411, %v407
  %v472 = vpack.c.b16 %v412, %v408
  %v473 = vpack.c.b16 %v413, %v409
  %v474 = vpack.c.b16 %v418, %v414
  %v475 = vpack.c.b16 %v419, %v415
  %v476 = vpack.c.b16 %v420, %v416
  %v477 = vpack.c.b16 %v421, %v417
  %v478 = vpack.c.b16 %v426, %v422
  %v479 = vpack.c.b16 %v427, %v423
  %v480 = vpack.c.b16 %v428, %v424
  %v481 = vpack.c.b16 %v429, %v425
  %v482 = vpack.c.b16 %v434, %v430
  %v483 = vpack.c.b16 %v435, %v431
  %v484 = vpack.c.b16 %v436, %v432
  %v485 = vpack.c.b16 %v437, %v433
  %v486 = vpack.c.b16 %v442, %v438
  %v487 = vpack.c.b16 %v443, %v439
  %v488 = vpack.c.b16 %v444, %v440
  %v489 = vpack.c.b16 %v445, %v441
  %v490 = vpack.c.b16 %v450, %v446
  %v491 = vpack.c.b16 %v451, %v447
  %v492 = vpack.c.b16 %v452, %v448
  %v493 = vpack.c.b16 %v453, %v449
  %v494 = vpack.c.b16 %v458, %v454
  %v495 = vpack.c.b16 %v459, %v455
  %v496 = vpack.c.b16 %v460, %v456
  %v497 = vpack.c.b16 %v461, %v457
  %v498 = vpack.c.b16 %v466, %v462
  %v499 = vpack.c.b16 %v467, %v463
  %v500 = vpack.c.b16 %v468, %v464
  %v501 = vpack.c.b16 %v469, %v465
  %534 = vmatprep.subr.bf16.mxu0 %v471
  %535 = vmatpush1.bf16.msra.mxu0 %v470
  %536 = vmatprep.subr.bf16.mxu0 %v475
  %537 = vmatpush1.bf16.msra.mxu0 %v474
  %538 = vmatprep.subr.bf16.mxu0 %v479
  %539 = vmatpush1.bf16.msra.mxu0 %v478
  %540 = vmatprep.subr.bf16.mxu0 %v483
  %541 = vmatpush1.bf16.msra.mxu0 %v482
  %542 = vmatprep.subr.bf16.mxu0 %v487
  %543 = vmatpush1.bf16.msra.mxu0 %v486
  %544 = vmatprep.subr.bf16.mxu0 %v491
  %545 = vmatpush1.bf16.msra.mxu0 %v490
  %546 = vmatprep.subr.bf16.mxu0 %v495
  %547 = vmatpush1.bf16.msra.mxu0 %v494
  %548 = vmatprep.subr.bf16.mxu0 %v499
  %549 = vmatpush1.bf16.msra.mxu0 %v498
  %550 = vmatprep.subr.bf16.mxu0 0
  %551 = vmatpush1.bf16.msra.mxu0 0
  %552 = vmatprep.subr.bf16.mxu0 0
  %553 = vmatpush1.bf16.msra.mxu0 0
  %554 = vmatprep.subr.bf16.mxu0 0
  %555 = vmatpush1.bf16.msra.mxu0 0
  %556 = vmatprep.subr.bf16.mxu0 0
  %557 = vmatpush1.bf16.msra.mxu0 0
  %558 = vmatprep.subr.bf16.mxu0 0
  %559 = vmatpush1.bf16.msra.mxu0 0
  %560 = vmatprep.subr.bf16.mxu0 0
  %561 = vmatpush1.bf16.msra.mxu0 0
  %562 = vmatprep.subr.bf16.mxu0 0
  %563 = vmatpush1.bf16.msra.mxu0 0
  %564 = vmatprep.subr.bf16.mxu0 0
  %565 = vmatpush1.bf16.msra.mxu0 0
  %566 = vmatprep.mubr.bf16.mxu0 0
  %567 = vmatmul.mubr.bf16.gmra.mrb[0].mxu0 %v335
  %v568 = vpop.f32.mrb[0].mxu0
  %v569 = vadd.f32 0.0, %v568
  %v570 = vpop.f32.mrb[0].mxu0
  %v571 = vadd.f32 0.0, %v570
  %v572 = vpop.f32.mrb[0].mxu0
  %v573 = vpop.f32.mrb[0].mxu0
  %574 = vdwg.mxu0
  %575 = vmatprep.subr.bf16.mxu0 %v473
  %576 = vmatpush1.bf16.msra.mxu0 %v472
  %577 = vmatprep.subr.bf16.mxu0 %v477
  %578 = vmatpush1.bf16.msra.mxu0 %v476
  %579 = vmatprep.subr.bf16.mxu0 %v481
  %580 = vmatpush1.bf16.msra.mxu0 %v480
  %581 = vmatprep.subr.bf16.mxu0 %v485
  %582 = vmatpush1.bf16.msra.mxu0 %v484
  %583 = vmatprep.subr.bf16.mxu0 %v489
  %584 = vmatpush1.bf16.msra.mxu0 %v488
  %585 = vmatprep.subr.bf16.mxu0 %v493
  %586 = vmatpush1.bf16.msra.mxu0 %v492
  %587 = vmatprep.subr.bf16.mxu0 %v497
  %588 = vmatpush1.bf16.msra.mxu0 %v496
  %589 = vmatprep.subr.bf16.mxu0 %v501
  %590 = vmatpush1.bf16.msra.mxu0 %v500
  %591 = vmatprep.subr.bf16.mxu0 0
  %592 = vmatpush1.bf16.msra.mxu0 0
  %593 = vmatprep.subr.bf16.mxu0 0
  %594 = vmatpush1.bf16.msra.mxu0 0
  %595 = vmatprep.subr.bf16.mxu0 0
  %596 = vmatpush1.bf16.msra.mxu0 0
  %597 = vmatprep.subr.bf16.mxu0 0
  %598 = vmatpush1.bf16.msra.mxu0 0
  %599 = vmatprep.subr.bf16.mxu0 0
  %600 = vmatpush1.bf16.msra.mxu0 0
  %601 = vmatprep.subr.bf16.mxu0 0
  %602 = vmatpush1.bf16.msra.mxu0 0
  %603 = vmatprep.subr.bf16.mxu0 0
  %604 = vmatpush1.bf16.msra.mxu0 0
  %605 = vmatprep.subr.bf16.mxu0 0
  %606 = vmatpush1.bf16.msra.mxu0 0
  %607 = vmatprep.mubr.bf16.mxu0 0
  %608 = vmatmul.mubr.bf16.gmra.mrb[0].mxu0 %v335
  %v609 = vpop.f32.mrb[0].mxu0
  %v610 = vadd.f32 0.0, %v609
  %v611 = vpop.f32.mrb[0].mxu0
  %v612 = vadd.f32 0.0, %v611
  %v613 = vpop.f32.mrb[0].mxu0
  %v614 = vpop.f32.mrb[0].mxu0
  %615 = vdwg.mxu0
  %v616 = vadd.f32 %v338, %v569
  %v617 = vadd.f32 %v339, %v571
  %v618 = vadd.f32 %v340, %v610
  %v619 = vadd.f32 %v341, %v612
  %v620 = vxor.u32 %v616, 2147483648
  %v621 = vmul.f32 %v620, 1.442695
  %v622 = vpow.pop %v621
  %v623 = vadd.f32 %v622, 1.0
  %v624 = vrcp.pop %v623
  %v625 = vmul.f32 1.0, %v624
  %v626 = vxor.u32 %v617, 2147483648
  %v627 = vmul.f32 %v626, 1.442695
  %v628 = vpow.pop %v627
  %v629 = vadd.f32 %v628, 1.0
  %v630 = vrcp.pop %v629
  %v631 = vmul.f32 1.0, %v630
  %v632 = vtanh.pop %v618
  %v633 = vxor.u32 %v619, 2147483648
  %v634 = vmul.f32 %v633, 1.442695
  %v635 = vpow.pop %v634
  %v636 = vadd.f32 %v635, 1.0
  %v637 = vrcp.pop %v636
  %v638 = vmul.f32 1.0, %v637
  %v639 = vmul.f32 %v631, %v332
  %v640 = vmul.f32 %v625, %v632
  %v641 = vadd.f32 %v639, %v640
  %v642 = vtanh.pop %v641
  %v643 = vmul.f32 %v638, %v642
  %v644 = vpack.c.bf16 %v643, %v643
  %s645 = scalar_lea.vmem %s4, 4
  %646 = vst [vmem:[%s645] sm:$0xf] %v644
  %s647 = scalar_lea.vmem %s0, 64
  %v648 = vld [vmem:[%s647] sm:$0xff]
  %v649 = vld [vmem:[%s647 + $0x8] sm:$0xff]
  %v650 = vld [vmem:[%s647 + $0x10] sm:$0xff]
  %v651 = vld [vmem:[%s647 + $0x18] sm:$0xff]
  %v652 = vld [vmem:[%s1] sm:$0xff]
  %v653 = vld [vmem:[%s1 + $0x8] sm:$0xff]
  %v654 = vld [vmem:[%s1 + $0x10] sm:$0xff]
  %v655 = vld [vmem:[%s1 + $0x18] sm:$0xff]
  %v656 = vld [vmem:[%s1 + $0x20] sm:$0xff]
  %v657 = vld [vmem:[%s1 + $0x28] sm:$0xff]
  %v658 = vld [vmem:[%s1 + $0x30] sm:$0xff]
  %v659 = vld [vmem:[%s1 + $0x38] sm:$0xff]
  %v660 = vld [vmem:[%s1 + $0x40] sm:$0xff]
  %v661 = vld [vmem:[%s1 + $0x48] sm:$0xff]
  %v662 = vld [vmem:[%s1 + $0x50] sm:$0xff]
  %v663 = vld [vmem:[%s1 + $0x58] sm:$0xff]
  %v664 = vld [vmem:[%s1 + $0x60] sm:$0xff]
  %v665 = vld [vmem:[%s1 + $0x68] sm:$0xff]
  %v666 = vld [vmem:[%s1 + $0x70] sm:$0xff]
  %v667 = vld [vmem:[%s1 + $0x78] sm:$0xff]
  %v668 = vld [vmem:[%s1 + $0x80] sm:$0xff]
  %v669 = vld [vmem:[%s1 + $0x88] sm:$0xff]
  %v670 = vld [vmem:[%s1 + $0x90] sm:$0xff]
  %v671 = vld [vmem:[%s1 + $0x98] sm:$0xff]
  %v672 = vld [vmem:[%s1 + $0xa0] sm:$0xff]
  %v673 = vld [vmem:[%s1 + $0xa8] sm:$0xff]
  %v674 = vld [vmem:[%s1 + $0xb0] sm:$0xff]
  %v675 = vld [vmem:[%s1 + $0xb8] sm:$0xff]
  %v676 = vld [vmem:[%s1 + $0xc0] sm:$0xff]
  %v677 = vld [vmem:[%s1 + $0xc8] sm:$0xff]
  %v678 = vld [vmem:[%s1 + $0xd0] sm:$0xff]
  %v679 = vld [vmem:[%s1 + $0xd8] sm:$0xff]
  %v680 = vld [vmem:[%s1 + $0xe0] sm:$0xff]
  %v681 = vld [vmem:[%s1 + $0xe8] sm:$0xff]
  %v682 = vld [vmem:[%s1 + $0xf0] sm:$0xff]
  %v683 = vld [vmem:[%s1 + $0xf8] sm:$0xff]
  %v716 = vunpack.c.l.b16 %v652
  %v717 = vunpack.c.h.b16 %v652
  %v718 = vunpack.c.l.b16 %v653
  %v719 = vunpack.c.h.b16 %v653
  %v720 = vunpack.c.l.b16 %v654
  %v721 = vunpack.c.h.b16 %v654
  %v722 = vunpack.c.l.b16 %v655
  %v723 = vunpack.c.h.b16 %v655
  %v724 = vunpack.c.l.b16 %v656
  %v725 = vunpack.c.h.b16 %v656
  %v726 = vunpack.c.l.b16 %v657
  %v727 = vunpack.c.h.b16 %v657
  %v728 = vunpack.c.l.b16 %v658
  %v729 = vunpack.c.h.b16 %v658
  %v730 = vunpack.c.l.b16 %v659
  %v731 = vunpack.c.h.b16 %v659
  %v732 = vunpack.c.l.b16 %v660
  %v733 = vunpack.c.h.b16 %v660
  %v734 = vunpack.c.l.b16 %v661
  %v735 = vunpack.c.h.b16 %v661
  %v736 = vunpack.c.l.b16 %v662
  %v737 = vunpack.c.h.b16 %v662
  %v738 = vunpack.c.l.b16 %v663
  %v739 = vunpack.c.h.b16 %v663
  %v740 = vunpack.c.l.b16 %v664
  %v741 = vunpack.c.h.b16 %v664
  %v742 = vunpack.c.l.b16 %v665
  %v743 = vunpack.c.h.b16 %v665
  %v744 = vunpack.c.l.b16 %v666
  %v745 = vunpack.c.h.b16 %v666
  %v746 = vunpack.c.l.b16 %v667
  %v747 = vunpack.c.h.b16 %v667
  %v748 = vunpack.c.l.b16 %v668
  %v749 = vunpack.c.h.b16 %v668
  %v750 = vunpack.c.l.b16 %v669
  %v751 = vunpack.c.h.b16 %v669
  %v752 = vunpack.c.l.b16 %v670
  %v753 = vunpack.c.h.b16 %v670
  %v754 = vunpack.c.l.b16 %v671
  %v755 = vunpack.c.h.b16 %v671
  %v756 = vunpack.c.l.b16 %v672
  %v757 = vunpack.c.h.b16 %v672
  %v758 = vunpack.c.l.b16 %v673
  %v759 = vunpack.c.h.b16 %v673
  %v760 = vunpack.c.l.b16 %v674
  %v761 = vunpack.c.h.b16 %v674
  %v762 = vunpack.c.l.b16 %v675
  %v763 = vunpack.c.h.b16 %v675
  %v764 = vunpack.c.l.b16 %v676
  %v765 = vunpack.c.h.b16 %v676
  %v766 = vunpack.c.l.b16 %v677
  %v767 = vunpack.c.h.b16 %v677
  %v768 = vunpack.c.l.b16 %v678
  %v769 = vunpack.c.h.b16 %v678
  %v770 = vunpack.c.l.b16 %v679
  %v771 = vunpack.c.h.b16 %v679
  %v772 = vunpack.c.l.b16 %v680
  %v773 = vunpack.c.h.b16 %v680
  %v774 = vunpack.c.l.b16 %v681
  %v775 = vunpack.c.h.b16 %v681
  %v776 = vunpack.c.l.b16 %v682
  %v777 = vunpack.c.h.b16 %v682
  %v778 = vunpack.c.l.b16 %v683
  %v779 = vunpack.c.h.b16 %v683
  %v780 = vpack.c.b16 %v720, %v716
  %v781 = vpack.c.b16 %v721, %v717
  %v782 = vpack.c.b16 %v722, %v718
  %v783 = vpack.c.b16 %v723, %v719
  %v784 = vpack.c.b16 %v728, %v724
  %v785 = vpack.c.b16 %v729, %v725
  %v786 = vpack.c.b16 %v730, %v726
  %v787 = vpack.c.b16 %v731, %v727
  %v788 = vpack.c.b16 %v736, %v732
  %v789 = vpack.c.b16 %v737, %v733
  %v790 = vpack.c.b16 %v738, %v734
  %v791 = vpack.c.b16 %v739, %v735
  %v792 = vpack.c.b16 %v744, %v740
  %v793 = vpack.c.b16 %v745, %v741
  %v794 = vpack.c.b16 %v746, %v742
  %v795 = vpack.c.b16 %v747, %v743
  %v796 = vpack.c.b16 %v752, %v748
  %v797 = vpack.c.b16 %v753, %v749
  %v798 = vpack.c.b16 %v754, %v750
  %v799 = vpack.c.b16 %v755, %v751
  %v800 = vpack.c.b16 %v760, %v756
  %v801 = vpack.c.b16 %v761, %v757
  %v802 = vpack.c.b16 %v762, %v758
  %v803 = vpack.c.b16 %v763, %v759
  %v804 = vpack.c.b16 %v768, %v764
  %v805 = vpack.c.b16 %v769, %v765
  %v806 = vpack.c.b16 %v770, %v766
  %v807 = vpack.c.b16 %v771, %v767
  %v808 = vpack.c.b16 %v776, %v772
  %v809 = vpack.c.b16 %v777, %v773
  %v810 = vpack.c.b16 %v778, %v774
  %v811 = vpack.c.b16 %v779, %v775
  %844 = vmatprep.subr.bf16.mxu0 %v781
  %845 = vmatpush1.bf16.msra.mxu0 %v780
  %846 = vmatprep.subr.bf16.mxu0 %v785
  %847 = vmatpush1.bf16.msra.mxu0 %v784
  %848 = vmatprep.subr.bf16.mxu0 %v789
  %849 = vmatpush1.bf16.msra.mxu0 %v788
  %850 = vmatprep.subr.bf16.mxu0 %v793
  %851 = vmatpush1.bf16.msra.mxu0 %v792
  %852 = vmatprep.subr.bf16.mxu0 %v797
  %853 = vmatpush1.bf16.msra.mxu0 %v796
  %854 = vmatprep.subr.bf16.mxu0 %v801
  %855 = vmatpush1.bf16.msra.mxu0 %v800
  %856 = vmatprep.subr.bf16.mxu0 %v805
  %857 = vmatpush1.bf16.msra.mxu0 %v804
  %858 = vmatprep.subr.bf16.mxu0 %v809
  %859 = vmatpush1.bf16.msra.mxu0 %v808
  %860 = vmatprep.subr.bf16.mxu0 0
  %861 = vmatpush1.bf16.msra.mxu0 0
  %862 = vmatprep.subr.bf16.mxu0 0
  %863 = vmatpush1.bf16.msra.mxu0 0
  %864 = vmatprep.subr.bf16.mxu0 0
  %865 = vmatpush1.bf16.msra.mxu0 0
  %866 = vmatprep.subr.bf16.mxu0 0
  %867 = vmatpush1.bf16.msra.mxu0 0
  %868 = vmatprep.subr.bf16.mxu0 0
  %869 = vmatpush1.bf16.msra.mxu0 0
  %870 = vmatprep.subr.bf16.mxu0 0
  %871 = vmatpush1.bf16.msra.mxu0 0
  %872 = vmatprep.subr.bf16.mxu0 0
  %873 = vmatpush1.bf16.msra.mxu0 0
  %874 = vmatprep.subr.bf16.mxu0 0
  %875 = vmatpush1.bf16.msra.mxu0 0
  %876 = vmatprep.mubr.bf16.mxu0 0
  %877 = vmatmul.mubr.bf16.gmra.mrb[0].mxu0 %v644
  %v878 = vpop.f32.mrb[0].mxu0
  %v879 = vadd.f32 0.0, %v878
  %v880 = vpop.f32.mrb[0].mxu0
  %v881 = vadd.f32 0.0, %v880
  %v882 = vpop.f32.mrb[0].mxu0
  %v883 = vpop.f32.mrb[0].mxu0
  %884 = vdwg.mxu0
  %885 = vmatprep.subr.bf16.mxu0 %v783
  %886 = vmatpush1.bf16.msra.mxu0 %v782
  %887 = vmatprep.subr.bf16.mxu0 %v787
  %888 = vmatpush1.bf16.msra.mxu0 %v786
  %889 = vmatprep.subr.bf16.mxu0 %v791
  %890 = vmatpush1.bf16.msra.mxu0 %v790
  %891 = vmatprep.subr.bf16.mxu0 %v795
  %892 = vmatpush1.bf16.msra.mxu0 %v794
  %893 = vmatprep.subr.bf16.mxu0 %v799
  %894 = vmatpush1.bf16.msra.mxu0 %v798
  %895 = vmatprep.subr.bf16.mxu0 %v803
  %896 = vmatpush1.bf16.msra.mxu0 %v802
  %897 = vmatprep.subr.bf16.mxu0 %v807
  %898 = vmatpush1.bf16.msra.mxu0 %v806
  %899 = vmatprep.subr.bf16.mxu0 %v811
  %900 = vmatpush1.bf16.msra.mxu0 %v810
  %901 = vmatprep.subr.bf16.mxu0 0
  %902 = vmatpush1.bf16.msra.mxu0 0
  %903 = vmatprep.subr.bf16.mxu0 0
  %904 = vmatpush1.bf16.msra.mxu0 0
  %905 = vmatprep.subr.bf16.mxu0 0
  %906 = vmatpush1.bf16.msra.mxu0 0
  %907 = vmatprep.subr.bf16.mxu0 0
  %908 = vmatpush1.bf16.msra.mxu0 0
  %909 = vmatprep.subr.bf16.mxu0 0
  %910 = vmatpush1.bf16.msra.mxu0 0
  %911 = vmatprep.subr.bf16.mxu0 0
  %912 = vmatpush1.bf16.msra.mxu0 0
  %913 = vmatprep.subr.bf16.mxu0 0
  %914 = vmatpush1.bf16.msra.mxu0 0
  %915 = vmatprep.subr.bf16.mxu0 0
  %916 = vmatpush1.bf16.msra.mxu0 0
  %917 = vmatprep.mubr.bf16.mxu0 0
  %918 = vmatmul.mubr.bf16.gmra.mrb[0].mxu0 %v644
  %v919 = vpop.f32.mrb[0].mxu0
  %v920 = vadd.f32 0.0, %v919
  %v921 = vpop.f32.mrb[0].mxu0
  %v922 = vadd.f32 0.0, %v921
  %v923 = vpop.f32.mrb[0].mxu0
  %v924 = vpop.f32.mrb[0].mxu0
  %925 = vdwg.mxu0
  %v926 = vadd.f32 %v648, %v879
  %v927 = vadd.f32 %v649, %v881
  %v928 = vadd.f32 %v650, %v920
  %v929 = vadd.f32 %v651, %v922
  %v930 = vxor.u32 %v926, 2147483648
  %v931 = vmul.f32 %v930, 1.442695
  %v932 = vpow.pop %v931
  %v933 = vadd.f32 %v932, 1.0
  %v934 = vrcp.pop %v933
  %v935 = vmul.f32 1.0, %v934
  %v936 = vxor.u32 %v927, 2147483648
  %v937 = vmul.f32 %v936, 1.442695
  %v938 = vpow.pop %v937
  %v939 = vadd.f32 %v938, 1.0
  %v940 = vrcp.pop %v939
  %v941 = vmul.f32 1.0, %v940
  %v942 = vtanh.pop %v928
  %v943 = vxor.u32 %v929, 2147483648
  %v944 = vmul.f32 %v943, 1.442695
  %v945 = vpow.pop %v944
  %v946 = vadd.f32 %v945, 1.0
  %v947 = vrcp.pop %v946
  %v948 = vmul.f32 1.0, %v947
  %v949 = vmul.f32 %v941, %v641
  %v950 = vmul.f32 %v935, %v942
  %v951 = vadd.f32 %v949, %v950
  %v952 = vtanh.pop %v951
  %v953 = vmul.f32 %v948, %v952
  %v954 = vpack.c.bf16 %v953, %v953
  %s955 = scalar_lea.vmem %s4, 8
  %956 = vst [vmem:[%s955] sm:$0xf] %v954
  %s957 = scalar_lea.vmem %s0, 96
  %v958 = vld [vmem:[%s957] sm:$0xff]
  %v959 = vld [vmem:[%s957 + $0x8] sm:$0xff]
  %v960 = vld [vmem:[%s957 + $0x10] sm:$0xff]
  %v961 = vld [vmem:[%s957 + $0x18] sm:$0xff]
  %v962 = vld [vmem:[%s1] sm:$0xff]
  %v963 = vld [vmem:[%s1 + $0x8] sm:$0xff]
  %v964 = vld [vmem:[%s1 + $0x10] sm:$0xff]
  %v965 = vld [vmem:[%s1 + $0x18] sm:$0xff]
  %v966 = vld [vmem:[%s1 + $0x20] sm:$0xff]
  %v967 = vld [vmem:[%s1 + $0x28] sm:$0xff]
  %v968 = vld [vmem:[%s1 + $0x30] sm:$0xff]
  %v969 = vld [vmem:[%s1 + $0x38] sm:$0xff]
  %v970 = vld [vmem:[%s1 + $0x40] sm:$0xff]
  %v971 = vld [vmem:[%s1 + $0x48] sm:$0xff]
  %v972 = vld [vmem:[%s1 + $0x50] sm:$0xff]
  %v973 = vld [vmem:[%s1 + $0x58] sm:$0xff]
  %v974 = vld [vmem:[%s1 + $0x60] sm:$0xff]
  %v975 = vld [vmem:[%s1 + $0x68] sm:$0xff]
  %v976 = vld [vmem:[%s1 + $0x70] sm:$0xff]
  %v977 = vld [vmem:[%s1 + $0x78] sm:$0xff]
  %v978 = vld [vmem:[%s1 + $0x80] sm:$0xff]
  %v979 = vld [vmem:[%s1 + $0x88] sm:$0xff]
  %v980 = vld [vmem:[%s1 + $0x90] sm:$0xff]
  %v981 = vld [vmem:[%s1 + $0x98] sm:$0xff]
  %v982 = vld [vmem:[%s1 + $0xa0] sm:$0xff]
  %v983 = vld [vmem:[%s1 + $0xa8] sm:$0xff]
  %v984 = vld [vmem:[%s1 + $0xb0] sm:$0xff]
  %v985 = vld [vmem:[%s1 + $0xb8] sm:$0xff]
  %v986 = vld [vmem:[%s1 + $0xc0] sm:$0xff]
  %v987 = vld [vmem:[%s1 + $0xc8] sm:$0xff]
  %v988 = vld [vmem:[%s1 + $0xd0] sm:$0xff]
  %v989 = vld [vmem:[%s1 + $0xd8] sm:$0xff]
  %v990 = vld [vmem:[%s1 + $0xe0] sm:$0xff]
  %v991 = vld [vmem:[%s1 + $0xe8] sm:$0xff]
  %v992 = vld [vmem:[%s1 + $0xf0] sm:$0xff]
  %v993 = vld [vmem:[%s1 + $0xf8] sm:$0xff]
  %v1026 = vunpack.c.l.b16 %v962
  %v1027 = vunpack.c.h.b16 %v962
  %v1028 = vunpack.c.l.b16 %v963
  %v1029 = vunpack.c.h.b16 %v963
  %v1030 = vunpack.c.l.b16 %v964
  %v1031 = vunpack.c.h.b16 %v964
  %v1032 = vunpack.c.l.b16 %v965
  %v1033 = vunpack.c.h.b16 %v965
  %v1034 = vunpack.c.l.b16 %v966
  %v1035 = vunpack.c.h.b16 %v966
  %v1036 = vunpack.c.l.b16 %v967
  %v1037 = vunpack.c.h.b16 %v967
  %v1038 = vunpack.c.l.b16 %v968
  %v1039 = vunpack.c.h.b16 %v968
  %v1040 = vunpack.c.l.b16 %v969
  %v1041 = vunpack.c.h.b16 %v969
  %v1042 = vunpack.c.l.b16 %v970
  %v1043 = vunpack.c.h.b16 %v970
  %v1044 = vunpack.c.l.b16 %v971
  %v1045 = vunpack.c.h.b16 %v971
  %v1046 = vunpack.c.l.b16 %v972
  %v1047 = vunpack.c.h.b16 %v972
  %v1048 = vunpack.c.l.b16 %v973
  %v1049 = vunpack.c.h.b16 %v973
  %v1050 = vunpack.c.l.b16 %v974
  %v1051 = vunpack.c.h.b16 %v974
  %v1052 = vunpack.c.l.b16 %v975
  %v1053 = vunpack.c.h.b16 %v975
  %v1054 = vunpack.c.l.b16 %v976
  %v1055 = vunpack.c.h.b16 %v976
  %v1056 = vunpack.c.l.b16 %v977
  %v1057 = vunpack.c.h.b16 %v977
  %v1058 = vunpack.c.l.b16 %v978
  %v1059 = vunpack.c.h.b16 %v978
  %v1060 = vunpack.c.l.b16 %v979
  %v1061 = vunpack.c.h.b16 %v979
  %v1062 = vunpack.c.l.b16 %v980
  %v1063 = vunpack.c.h.b16 %v980
  %v1064 = vunpack.c.l.b16 %v981
  %v1065 = vunpack.c.h.b16 %v981
  %v1066 = vunpack.c.l.b16 %v982
  %v1067 = vunpack.c.h.b16 %v982
  %v1068 = vunpack.c.l.b16 %v983
  %v1069 = vunpack.c.h.b16 %v983
  %v1070 = vunpack.c.l.b16 %v984
  %v1071 = vunpack.c.h.b16 %v984
  %v1072 = vunpack.c.l.b16 %v985
  %v1073 = vunpack.c.h.b16 %v985
  %v1074 = vunpack.c.l.b16 %v986
  %v1075 = vunpack.c.h.b16 %v986
  %v1076 = vunpack.c.l.b16 %v987
  %v1077 = vunpack.c.h.b16 %v987
  %v1078 = vunpack.c.l.b16 %v988
  %v1079 = vunpack.c.h.b16 %v988
  %v1080 = vunpack.c.l.b16 %v989
  %v1081 = vunpack.c.h.b16 %v989
  %v1082 = vunpack.c.l.b16 %v990
  %v1083 = vunpack.c.h.b16 %v990
  %v1084 = vunpack.c.l.b16 %v991
  %v1085 = vunpack.c.h.b16 %v991
  %v1086 = vunpack.c.l.b16 %v992
  %v1087 = vunpack.c.h.b16 %v992
  %v1088 = vunpack.c.l.b16 %v993
  %v1089 = vunpack.c.h.b16 %v993
  %v1090 = vpack.c.b16 %v1030, %v1026
  %v1091 = vpack.c.b16 %v1031, %v1027
  %v1092 = vpack.c.b16 %v1032, %v1028
  %v1093 = vpack.c.b16 %v1033, %v1029
  %v1094 = vpack.c.b16 %v1038, %v1034
  %v1095 = vpack.c.b16 %v1039, %v1035
  %v1096 = vpack.c.b16 %v1040, %v1036
  %v1097 = vpack.c.b16 %v1041, %v1037
  %v1098 = vpack.c.b16 %v1046, %v1042
  %v1099 = vpack.c.b16 %v1047, %v1043
  %v1100 = vpack.c.b16 %v1048, %v1044
  %v1101 = vpack.c.b16 %v1049, %v1045
  %v1102 = vpack.c.b16 %v1054, %v1050
  %v1103 = vpack.c.b16 %v1055, %v1051
  %v1104 = vpack.c.b16 %v1056, %v1052
  %v1105 = vpack.c.b16 %v1057, %v1053
  %v1106 = vpack.c.b16 %v1062, %v1058
  %v1107 = vpack.c.b16 %v1063, %v1059
  %v1108 = vpack.c.b16 %v1064, %v1060
  %v1109 = vpack.c.b16 %v1065, %v1061
  %v1110 = vpack.c.b16 %v1070, %v1066
  %v1111 = vpack.c.b16 %v1071, %v1067
  %v1112 = vpack.c.b16 %v1072, %v1068
  %v1113 = vpack.c.b16 %v1073, %v1069
  %v1114 = vpack.c.b16 %v1078, %v1074
  %v1115 = vpack.c.b16 %v1079, %v1075
  %v1116 = vpack.c.b16 %v1080, %v1076
  %v1117 = vpack.c.b16 %v1081, %v1077
  %v1118 = vpack.c.b16 %v1086, %v1082
  %v1119 = vpack.c.b16 %v1087, %v1083
  %v1120 = vpack.c.b16 %v1088, %v1084
  %v1121 = vpack.c.b16 %v1089, %v1085
  %1154 = vmatprep.subr.bf16.mxu0 %v1091
  %1155 = vmatpush1.bf16.msra.mxu0 %v1090
  %1156 = vmatprep.subr.bf16.mxu0 %v1095
  %1157 = vmatpush1.bf16.msra.mxu0 %v1094
  %1158 = vmatprep.subr.bf16.mxu0 %v1099
  %1159 = vmatpush1.bf16.msra.mxu0 %v1098
  %1160 = vmatprep.subr.bf16.mxu0 %v1103
  %1161 = vmatpush1.bf16.msra.mxu0 %v1102
  %1162 = vmatprep.subr.bf16.mxu0 %v1107
  %1163 = vmatpush1.bf16.msra.mxu0 %v1106
  %1164 = vmatprep.subr.bf16.mxu0 %v1111
  %1165 = vmatpush1.bf16.msra.mxu0 %v1110
  %1166 = vmatprep.subr.bf16.mxu0 %v1115
  %1167 = vmatpush1.bf16.msra.mxu0 %v1114
  %1168 = vmatprep.subr.bf16.mxu0 %v1119
  %1169 = vmatpush1.bf16.msra.mxu0 %v1118
  %1170 = vmatprep.subr.bf16.mxu0 0
  %1171 = vmatpush1.bf16.msra.mxu0 0
  %1172 = vmatprep.subr.bf16.mxu0 0
  %1173 = vmatpush1.bf16.msra.mxu0 0
  %1174 = vmatprep.subr.bf16.mxu0 0
  %1175 = vmatpush1.bf16.msra.mxu0 0
  %1176 = vmatprep.subr.bf16.mxu0 0
  %1177 = vmatpush1.bf16.msra.mxu0 0
  %1178 = vmatprep.subr.bf16.mxu0 0
  %1179 = vmatpush1.bf16.msra.mxu0 0
  %1180 = vmatprep.subr.bf16.mxu0 0
  %1181 = vmatpush1.bf16.msra.mxu0 0
  %1182 = vmatprep.subr.bf16.mxu0 0
  %1183 = vmatpush1.bf16.msra.mxu0 0
  %1184 = vmatprep.subr.bf16.mxu0 0
  %1185 = vmatpush1.bf16.msra.mxu0 0
  %1186 = vmatprep.mubr.bf16.mxu0 0
  %1187 = vmatmul.mubr.bf16.gmra.mrb[0].mxu0 %v954
  %v1188 = vpop.f32.mrb[0].mxu0
  %v1189 = vadd.f32 0.0, %v1188
  %v1190 = vpop.f32.mrb[0].mxu0
  %v1191 = vadd.f32 0.0, %v1190
  %v1192 = vpop.f32.mrb[0].mxu0
  %v1193 = vpop.f32.mrb[0].mxu0
  %1194 = vdwg.mxu0
  %1195 = vmatprep.subr.bf16.mxu0 %v1093
  %1196 = vmatpush1.bf16.msra.mxu0 %v1092
  %1197 = vmatprep.subr.bf16.mxu0 %v1097
  %1198 = vmatpush1.bf16.msra.mxu0 %v1096
  %1199 = vmatprep.subr.bf16.mxu0 %v1101
  %1200 = vmatpush1.bf16.msra.mxu0 %v1100
  %1201 = vmatprep.subr.bf16.mxu0 %v1105
  %1202 = vmatpush1.bf16.msra.mxu0 %v1104
  %1203 = vmatprep.subr.bf16.mxu0 %v1109
  %1204 = vmatpush1.bf16.msra.mxu0 %v1108
  %1205 = vmatprep.subr.bf16.mxu0 %v1113
  %1206 = vmatpush1.bf16.msra.mxu0 %v1112
  %1207 = vmatprep.subr.bf16.mxu0 %v1117
  %1208 = vmatpush1.bf16.msra.mxu0 %v1116
  %1209 = vmatprep.subr.bf16.mxu0 %v1121
  %1210 = vmatpush1.bf16.msra.mxu0 %v1120
  %1211 = vmatprep.subr.bf16.mxu0 0
  %1212 = vmatpush1.bf16.msra.mxu0 0
  %1213 = vmatprep.subr.bf16.mxu0 0
  %1214 = vmatpush1.bf16.msra.mxu0 0
  %1215 = vmatprep.subr.bf16.mxu0 0
  %1216 = vmatpush1.bf16.msra.mxu0 0
  %1217 = vmatprep.subr.bf16.mxu0 0
  %1218 = vmatpush1.bf16.msra.mxu0 0
  %1219 = vmatprep.subr.bf16.mxu0 0
  %1220 = vmatpush1.bf16.msra.mxu0 0
  %1221 = vmatprep.subr.bf16.mxu0 0
  %1222 = vmatpush1.bf16.msra.mxu0 0
  %1223 = vmatprep.subr.bf16.mxu0 0
  %1224 = vmatpush1.bf16.msra.mxu0 0
  %1225 = vmatprep.subr.bf16.mxu0 0
  %1226 = vmatpush1.bf16.msra.mxu0 0
  %1227 = vmatprep.mubr.bf16.mxu0 0
  %1228 = vmatmul.mubr.bf16.gmra.mrb[0].mxu0 %v954
  %v1229 = vpop.f32.mrb[0].mxu0
  %v1230 = vadd.f32 0.0, %v1229
  %v1231 = vpop.f32.mrb[0].mxu0
  %v1232 = vadd.f32 0.0, %v1231
  %v1233 = vpop.f32.mrb[0].mxu0
  %v1234 = vpop.f32.mrb[0].mxu0
  %1235 = vdwg.mxu0
  %v1236 = vadd.f32 %v958, %v1189
  %v1237 = vadd.f32 %v959, %v1191
  %v1238 = vadd.f32 %v960, %v1230
  %v1239 = vadd.f32 %v961, %v1232
  %v1240 = vxor.u32 %v1236, 2147483648
  %v1241 = vmul.f32 %v1240, 1.442695
  %v1242 = vpow.pop %v1241
  %v1243 = vadd.f32 %v1242, 1.0
  %v1244 = vrcp.pop %v1243
  %v1245 = vmul.f32 1.0, %v1244
  %v1246 = vxor.u32 %v1237, 2147483648
  %v1247 = vmul.f32 %v1246, 1.442695
  %v1248 = vpow.pop %v1247
  %v1249 = vadd.f32 %v1248, 1.0
  %v1250 = vrcp.pop %v1249
  %v1251 = vmul.f32 1.0, %v1250
  %v1252 = vtanh.pop %v1238
  %v1253 = vxor.u32 %v1239, 2147483648
  %v1254 = vmul.f32 %v1253, 1.442695
  %v1255 = vpow.pop %v1254
  %v1256 = vadd.f32 %v1255, 1.0
  %v1257 = vrcp.pop %v1256
  %v1258 = vmul.f32 1.0, %v1257
  %v1259 = vmul.f32 %v1251, %v951
  %v1260 = vmul.f32 %v1245, %v1252
  %v1261 = vadd.f32 %v1259, %v1260
  %v1262 = vtanh.pop %v1261
  %v1263 = vmul.f32 %v1258, %v1262
  %v1264 = vpack.c.bf16 %v1263, %v1263
  %s1265 = scalar_lea.vmem %s4, 12
  %1266 = vst [vmem:[%s1265] sm:$0xf] %v1264
  %s1267 = scalar_lea.vmem %s0, 128
  %v1268 = vld [vmem:[%s1267] sm:$0xff]
  %v1269 = vld [vmem:[%s1267 + $0x8] sm:$0xff]
  %v1270 = vld [vmem:[%s1267 + $0x10] sm:$0xff]
  %v1271 = vld [vmem:[%s1267 + $0x18] sm:$0xff]
  %v1272 = vld [vmem:[%s1] sm:$0xff]
  %v1273 = vld [vmem:[%s1 + $0x8] sm:$0xff]
  %v1274 = vld [vmem:[%s1 + $0x10] sm:$0xff]
  %v1275 = vld [vmem:[%s1 + $0x18] sm:$0xff]
  %v1276 = vld [vmem:[%s1 + $0x20] sm:$0xff]
  %v1277 = vld [vmem:[%s1 + $0x28] sm:$0xff]
  %v1278 = vld [vmem:[%s1 + $0x30] sm:$0xff]
  %v1279 = vld [vmem:[%s1 + $0x38] sm:$0xff]
  %v1280 = vld [vmem:[%s1 + $0x40] sm:$0xff]
  %v1281 = vld [vmem:[%s1 + $0x48] sm:$0xff]
  %v1282 = vld [vmem:[%s1 + $0x50] sm:$0xff]
  %v1283 = vld [vmem:[%s1 + $0x58] sm:$0xff]
  %v1284 = vld [vmem:[%s1 + $0x60] sm:$0xff]
  %v1285 = vld [vmem:[%s1 + $0x68] sm:$0xff]
  %v1286 = vld [vmem:[%s1 + $0x70] sm:$0xff]
  %v1287 = vld [vmem:[%s1 + $0x78] sm:$0xff]
  %v1288 = vld [vmem:[%s1 + $0x80] sm:$0xff]
  %v1289 = vld [vmem:[%s1 + $0x88] sm:$0xff]
  %v1290 = vld [vmem:[%s1 + $0x90] sm:$0xff]
  %v1291 = vld [vmem:[%s1 + $0x98] sm:$0xff]
  %v1292 = vld [vmem:[%s1 + $0xa0] sm:$0xff]
  %v1293 = vld [vmem:[%s1 + $0xa8] sm:$0xff]
  %v1294 = vld [vmem:[%s1 + $0xb0] sm:$0xff]
  %v1295 = vld [vmem:[%s1 + $0xb8] sm:$0xff]
  %v1296 = vld [vmem:[%s1 + $0xc0] sm:$0xff]
  %v1297 = vld [vmem:[%s1 + $0xc8] sm:$0xff]
  %v1298 = vld [vmem:[%s1 + $0xd0] sm:$0xff]
  %v1299 = vld [vmem:[%s1 + $0xd8] sm:$0xff]
  %v1300 = vld [vmem:[%s1 + $0xe0] sm:$0xff]
  %v1301 = vld [vmem:[%s1 + $0xe8] sm:$0xff]
  %v1302 = vld [vmem:[%s1 + $0xf0] sm:$0xff]
  %v1303 = vld [vmem:[%s1 + $0xf8] sm:$0xff]
  %v1336 = vunpack.c.l.b16 %v1272
  %v1337 = vunpack.c.h.b16 %v1272
  %v1338 = vunpack.c.l.b16 %v1273
  %v1339 = vunpack.c.h.b16 %v1273
  %v1340 = vunpack.c.l.b16 %v1274
  %v1341 = vunpack.c.h.b16 %v1274
  %v1342 = vunpack.c.l.b16 %v1275
  %v1343 = vunpack.c.h.b16 %v1275
  %v1344 = vunpack.c.l.b16 %v1276
  %v1345 = vunpack.c.h.b16 %v1276
  %v1346 = vunpack.c.l.b16 %v1277
  %v1347 = vunpack.c.h.b16 %v1277
  %v1348 = vunpack.c.l.b16 %v1278
  %v1349 = vunpack.c.h.b16 %v1278
  %v1350 = vunpack.c.l.b16 %v1279
  %v1351 = vunpack.c.h.b16 %v1279
  %v1352 = vunpack.c.l.b16 %v1280
  %v1353 = vunpack.c.h.b16 %v1280
  %v1354 = vunpack.c.l.b16 %v1281
  %v1355 = vunpack.c.h.b16 %v1281
  %v1356 = vunpack.c.l.b16 %v1282
  %v1357 = vunpack.c.h.b16 %v1282
  %v1358 = vunpack.c.l.b16 %v1283
  %v1359 = vunpack.c.h.b16 %v1283
  %v1360 = vunpack.c.l.b16 %v1284
  %v1361 = vunpack.c.h.b16 %v1284
  %v1362 = vunpack.c.l.b16 %v1285
  %v1363 = vunpack.c.h.b16 %v1285
  %v1364 = vunpack.c.l.b16 %v1286
  %v1365 = vunpack.c.h.b16 %v1286
  %v1366 = vunpack.c.l.b16 %v1287
  %v1367 = vunpack.c.h.b16 %v1287
  %v1368 = vunpack.c.l.b16 %v1288
  %v1369 = vunpack.c.h.b16 %v1288
  %v1370 = vunpack.c.l.b16 %v1289
  %v1371 = vunpack.c.h.b16 %v1289
  %v1372 = vunpack.c.l.b16 %v1290
  %v1373 = vunpack.c.h.b16 %v1290
  %v1374 = vunpack.c.l.b16 %v1291
  %v1375 = vunpack.c.h.b16 %v1291
  %v1376 = vunpack.c.l.b16 %v1292
  %v1377 = vunpack.c.h.b16 %v1292
  %v1378 = vunpack.c.l.b16 %v1293
  %v1379 = vunpack.c.h.b16 %v1293
  %v1380 = vunpack.c.l.b16 %v1294
  %v1381 = vunpack.c.h.b16 %v1294
  %v1382 = vunpack.c.l.b16 %v1295
  %v1383 = vunpack.c.h.b16 %v1295
  %v1384 = vunpack.c.l.b16 %v1296
  %v1385 = vunpack.c.h.b16 %v1296
  %v1386 = vunpack.c.l.b16 %v1297
  %v1387 = vunpack.c.h.b16 %v1297
  %v1388 = vunpack.c.l.b16 %v1298
  %v1389 = vunpack.c.h.b16 %v1298
  %v1390 = vunpack.c.l.b16 %v1299
  %v1391 = vunpack.c.h.b16 %v1299
  %v1392 = vunpack.c.l.b16 %v1300
  %v1393 = vunpack.c.h.b16 %v1300
  %v1394 = vunpack.c.l.b16 %v1301
  %v1395 = vunpack.c.h.b16 %v1301
  %v1396 = vunpack.c.l.b16 %v1302
  %v1397 = vunpack.c.h.b16 %v1302
  %v1398 = vunpack.c.l.b16 %v1303
  %v1399 = vunpack.c.h.b16 %v1303
  %v1400 = vpack.c.b16 %v1340, %v1336
  %v1401 = vpack.c.b16 %v1341, %v1337
  %v1402 = vpack.c.b16 %v1342, %v1338
  %v1403 = vpack.c.b16 %v1343, %v1339
  %v1404 = vpack.c.b16 %v1348, %v1344
  %v1405 = vpack.c.b16 %v1349, %v1345
  %v1406 = vpack.c.b16 %v1350, %v1346
  %v1407 = vpack.c.b16 %v1351, %v1347
  %v1408 = vpack.c.b16 %v1356, %v1352
  %v1409 = vpack.c.b16 %v1357, %v1353
  %v1410 = vpack.c.b16 %v1358, %v1354
  %v1411 = vpack.c.b16 %v1359, %v1355
  %v1412 = vpack.c.b16 %v1364, %v1360
  %v1413 = vpack.c.b16 %v1365, %v1361
  %v1414 = vpack.c.b16 %v1366, %v1362
  %v1415 = vpack.c.b16 %v1367, %v1363
  %v1416 = vpack.c.b16 %v1372, %v1368
  %v1417 = vpack.c.b16 %v1373, %v1369
  %v1418 = vpack.c.b16 %v1374, %v1370
  %v1419 = vpack.c.b16 %v1375, %v1371
  %v1420 = vpack.c.b16 %v1380, %v1376
  %v1421 = vpack.c.b16 %v1381, %v1377
  %v1422 = vpack.c.b16 %v1382, %v1378
  %v1423 = vpack.c.b16 %v1383, %v1379
  %v1424 = vpack.c.b16 %v1388, %v1384
  %v1425 = vpack.c.b16 %v1389, %v1385
  %v1426 = vpack.c.b16 %v1390, %v1386
  %v1427 = vpack.c.b16 %v1391, %v1387
  %v1428 = vpack.c.b16 %v1396, %v1392
  %v1429 = vpack.c.b16 %v1397, %v1393
  %v1430 = vpack.c.b16 %v1398, %v1394
  %v1431 = vpack.c.b16 %v1399, %v1395
  %1464 = vmatprep.subr.bf16.mxu0 %v1401
  %1465 = vmatpush1.bf16.msra.mxu0 %v1400
  %1466 = vmatprep.subr.bf16.mxu0 %v1405
  %1467 = vmatpush1.bf16.msra.mxu0 %v1404
  %1468 = vmatprep.subr.bf16.mxu0 %v1409
  %1469 = vmatpush1.bf16.msra.mxu0 %v1408
  %1470 = vmatprep.subr.bf16.mxu0 %v1413
  %1471 = vmatpush1.bf16.msra.mxu0 %v1412
  %1472 = vmatprep.subr.bf16.mxu0 %v1417
  %1473 = vmatpush1.bf16.msra.mxu0 %v1416
  %1474 = vmatprep.subr.bf16.mxu0 %v1421
  %1475 = vmatpush1.bf16.msra.mxu0 %v1420
  %1476 = vmatprep.subr.bf16.mxu0 %v1425
  %1477 = vmatpush1.bf16.msra.mxu0 %v1424
  %1478 = vmatprep.subr.bf16.mxu0 %v1429
  %1479 = vmatpush1.bf16.msra.mxu0 %v1428
  %1480 = vmatprep.subr.bf16.mxu0 0
  %1481 = vmatpush1.bf16.msra.mxu0 0
  %1482 = vmatprep.subr.bf16.mxu0 0
  %1483 = vmatpush1.bf16.msra.mxu0 0
  %1484 = vmatprep.subr.bf16.mxu0 0
  %1485 = vmatpush1.bf16.msra.mxu0 0
  %1486 = vmatprep.subr.bf16.mxu0 0
  %1487 = vmatpush1.bf16.msra.mxu0 0
  %1488 = vmatprep.subr.bf16.mxu0 0
  %1489 = vmatpush1.bf16.msra.mxu0 0
  %1490 = vmatprep.subr.bf16.mxu0 0
  %1491 = vmatpush1.bf16.msra.mxu0 0
  %1492 = vmatprep.subr.bf16.mxu0 0
  %1493 = vmatpush1.bf16.msra.mxu0 0
  %1494 = vmatprep.subr.bf16.mxu0 0
  %1495 = vmatpush1.bf16.msra.mxu0 0
  %1496 = vmatprep.mubr.bf16.mxu0 0
  %1497 = vmatmul.mubr.bf16.gmra.mrb[0].mxu0 %v1264
  %v1498 = vpop.f32.mrb[0].mxu0
  %v1499 = vadd.f32 0.0, %v1498
  %v1500 = vpop.f32.mrb[0].mxu0
  %v1501 = vadd.f32 0.0, %v1500
  %v1502 = vpop.f32.mrb[0].mxu0
  %v1503 = vpop.f32.mrb[0].mxu0
  %1504 = vdwg.mxu0
  %1505 = vmatprep.subr.bf16.mxu0 %v1403
  %1506 = vmatpush1.bf16.msra.mxu0 %v1402
  %1507 = vmatprep.subr.bf16.mxu0 %v1407
  %1508 = vmatpush1.bf16.msra.mxu0 %v1406
  %1509 = vmatprep.subr.bf16.mxu0 %v1411
  %1510 = vmatpush1.bf16.msra.mxu0 %v1410
  %1511 = vmatprep.subr.bf16.mxu0 %v1415
  %1512 = vmatpush1.bf16.msra.mxu0 %v1414
  %1513 = vmatprep.subr.bf16.mxu0 %v1419
  %1514 = vmatpush1.bf16.msra.mxu0 %v1418
  %1515 = vmatprep.subr.bf16.mxu0 %v1423
  %1516 = vmatpush1.bf16.msra.mxu0 %v1422
  %1517 = vmatprep.subr.bf16.mxu0 %v1427
  %1518 = vmatpush1.bf16.msra.mxu0 %v1426
  %1519 = vmatprep.subr.bf16.mxu0 %v1431
  %1520 = vmatpush1.bf16.msra.mxu0 %v1430
  %1521 = vmatprep.subr.bf16.mxu0 0
  %1522 = vmatpush1.bf16.msra.mxu0 0
  %1523 = vmatprep.subr.bf16.mxu0 0
  %1524 = vmatpush1.bf16.msra.mxu0 0
  %1525 = vmatprep.subr.bf16.mxu0 0
  %1526 = vmatpush1.bf16.msra.mxu0 0
  %1527 = vmatprep.subr.bf16.mxu0 0
  %1528 = vmatpush1.bf16.msra.mxu0 0
  %1529 = vmatprep.subr.bf16.mxu0 0
  %1530 = vmatpush1.bf16.msra.mxu0 0
  %1531 = vmatprep.subr.bf16.mxu0 0
  %1532 = vmatpush1.bf16.msra.mxu0 0
  %1533 = vmatprep.subr.bf16.mxu0 0
  %1534 = vmatpush1.bf16.msra.mxu0 0
  %1535 = vmatprep.subr.bf16.mxu0 0
  %1536 = vmatpush1.bf16.msra.mxu0 0
  %1537 = vmatprep.mubr.bf16.mxu0 0
  %1538 = vmatmul.mubr.bf16.gmra.mrb[0].mxu0 %v1264
  %v1539 = vpop.f32.mrb[0].mxu0
  %v1540 = vadd.f32 0.0, %v1539
  %v1541 = vpop.f32.mrb[0].mxu0
  %v1542 = vadd.f32 0.0, %v1541
  %v1543 = vpop.f32.mrb[0].mxu0
  %v1544 = vpop.f32.mrb[0].mxu0
  %1545 = vdwg.mxu0
  %v1546 = vadd.f32 %v1268, %v1499
  %v1547 = vadd.f32 %v1269, %v1501
  %v1548 = vadd.f32 %v1270, %v1540
  %v1549 = vadd.f32 %v1271, %v1542
  %v1550 = vxor.u32 %v1546, 2147483648
  %v1551 = vmul.f32 %v1550, 1.442695
  %v1552 = vpow.pop %v1551
  %v1553 = vadd.f32 %v1552, 1.0
  %v1554 = vrcp.pop %v1553
  %v1555 = vmul.f32 1.0, %v1554
  %v1556 = vxor.u32 %v1547, 2147483648
  %v1557 = vmul.f32 %v1556, 1.442695
  %v1558 = vpow.pop %v1557
  %v1559 = vadd.f32 %v1558, 1.0
  %v1560 = vrcp.pop %v1559
  %v1561 = vmul.f32 1.0, %v1560
  %v1562 = vtanh.pop %v1548
  %v1563 = vxor.u32 %v1549, 2147483648
  %v1564 = vmul.f32 %v1563, 1.442695
  %v1565 = vpow.pop %v1564
  %v1566 = vadd.f32 %v1565, 1.0
  %v1567 = vrcp.pop %v1566
  %v1568 = vmul.f32 1.0, %v1567
  %v1569 = vmul.f32 %v1561, %v1261
  %v1570 = vmul.f32 %v1555, %v1562
  %v1571 = vadd.f32 %v1569, %v1570
  %v1572 = vtanh.pop %v1571
  %v1573 = vmul.f32 %v1568, %v1572
  %v1574 = vpack.c.bf16 %v1573, %v1573
  %s1575 = scalar_lea.vmem %s4, 16
  %1576 = vst [vmem:[%s1575] sm:$0xf] %v1574
  %s1577 = scalar_lea.vmem %s0, 160
  %v1578 = vld [vmem:[%s1577] sm:$0xff]
  %v1579 = vld [vmem:[%s1577 + $0x8] sm:$0xff]
  %v1580 = vld [vmem:[%s1577 + $0x10] sm:$0xff]
  %v1581 = vld [vmem:[%s1577 + $0x18] sm:$0xff]
  %v1582 = vld [vmem:[%s1] sm:$0xff]
  %v1583 = vld [vmem:[%s1 + $0x8] sm:$0xff]
  %v1584 = vld [vmem:[%s1 + $0x10] sm:$0xff]
  %v1585 = vld [vmem:[%s1 + $0x18] sm:$0xff]
  %v1586 = vld [vmem:[%s1 + $0x20] sm:$0xff]
  %v1587 = vld [vmem:[%s1 + $0x28] sm:$0xff]
  %v1588 = vld [vmem:[%s1 + $0x30] sm:$0xff]
  %v1589 = vld [vmem:[%s1 + $0x38] sm:$0xff]
  %v1590 = vld [vmem:[%s1 + $0x40] sm:$0xff]
  %v1591 = vld [vmem:[%s1 + $0x48] sm:$0xff]
  %v1592 = vld [vmem:[%s1 + $0x50] sm:$0xff]
  %v1593 = vld [vmem:[%s1 + $0x58] sm:$0xff]
  %v1594 = vld [vmem:[%s1 + $0x60] sm:$0xff]
  %v1595 = vld [vmem:[%s1 + $0x68] sm:$0xff]
  %v1596 = vld [vmem:[%s1 + $0x70] sm:$0xff]
  %v1597 = vld [vmem:[%s1 + $0x78] sm:$0xff]
  %v1598 = vld [vmem:[%s1 + $0x80] sm:$0xff]
  %v1599 = vld [vmem:[%s1 + $0x88] sm:$0xff]
  %v1600 = vld [vmem:[%s1 + $0x90] sm:$0xff]
  %v1601 = vld [vmem:[%s1 + $0x98] sm:$0xff]
  %v1602 = vld [vmem:[%s1 + $0xa0] sm:$0xff]
  %v1603 = vld [vmem:[%s1 + $0xa8] sm:$0xff]
  %v1604 = vld [vmem:[%s1 + $0xb0] sm:$0xff]
  %v1605 = vld [vmem:[%s1 + $0xb8] sm:$0xff]
  %v1606 = vld [vmem:[%s1 + $0xc0] sm:$0xff]
  %v1607 = vld [vmem:[%s1 + $0xc8] sm:$0xff]
  %v1608 = vld [vmem:[%s1 + $0xd0] sm:$0xff]
  %v1609 = vld [vmem:[%s1 + $0xd8] sm:$0xff]
  %v1610 = vld [vmem:[%s1 + $0xe0] sm:$0xff]
  %v1611 = vld [vmem:[%s1 + $0xe8] sm:$0xff]
  %v1612 = vld [vmem:[%s1 + $0xf0] sm:$0xff]
  %v1613 = vld [vmem:[%s1 + $0xf8] sm:$0xff]
  %v1646 = vunpack.c.l.b16 %v1582
  %v1647 = vunpack.c.h.b16 %v1582
  %v1648 = vunpack.c.l.b16 %v1583
  %v1649 = vunpack.c.h.b16 %v1583
  %v1650 = vunpack.c.l.b16 %v1584
  %v1651 = vunpack.c.h.b16 %v1584
  %v1652 = vunpack.c.l.b16 %v1585
  %v1653 = vunpack.c.h.b16 %v1585
  %v1654 = vunpack.c.l.b16 %v1586
  %v1655 = vunpack.c.h.b16 %v1586
  %v1656 = vunpack.c.l.b16 %v1587
  %v1657 = vunpack.c.h.b16 %v1587
  %v1658 = vunpack.c.l.b16 %v1588
  %v1659 = vunpack.c.h.b16 %v1588
  %v1660 = vunpack.c.l.b16 %v1589
  %v1661 = vunpack.c.h.b16 %v1589
  %v1662 = vunpack.c.l.b16 %v1590
  %v1663 = vunpack.c.h.b16 %v1590
  %v1664 = vunpack.c.l.b16 %v1591
  %v1665 = vunpack.c.h.b16 %v1591
  %v1666 = vunpack.c.l.b16 %v1592
  %v1667 = vunpack.c.h.b16 %v1592
  %v1668 = vunpack.c.l.b16 %v1593
  %v1669 = vunpack.c.h.b16 %v1593
  %v1670 = vunpack.c.l.b16 %v1594
  %v1671 = vunpack.c.h.b16 %v1594
  %v1672 = vunpack.c.l.b16 %v1595
  %v1673 = vunpack.c.h.b16 %v1595
  %v1674 = vunpack.c.l.b16 %v1596
  %v1675 = vunpack.c.h.b16 %v1596
  %v1676 = vunpack.c.l.b16 %v1597
  %v1677 = vunpack.c.h.b16 %v1597
  %v1678 = vunpack.c.l.b16 %v1598
  %v1679 = vunpack.c.h.b16 %v1598
  %v1680 = vunpack.c.l.b16 %v1599
  %v1681 = vunpack.c.h.b16 %v1599
  %v1682 = vunpack.c.l.b16 %v1600
  %v1683 = vunpack.c.h.b16 %v1600
  %v1684 = vunpack.c.l.b16 %v1601
  %v1685 = vunpack.c.h.b16 %v1601
  %v1686 = vunpack.c.l.b16 %v1602
  %v1687 = vunpack.c.h.b16 %v1602
  %v1688 = vunpack.c.l.b16 %v1603
  %v1689 = vunpack.c.h.b16 %v1603
  %v1690 = vunpack.c.l.b16 %v1604
  %v1691 = vunpack.c.h.b16 %v1604
  %v1692 = vunpack.c.l.b16 %v1605
  %v1693 = vunpack.c.h.b16 %v1605
  %v1694 = vunpack.c.l.b16 %v1606
  %v1695 = vunpack.c.h.b16 %v1606
  %v1696 = vunpack.c.l.b16 %v1607
  %v1697 = vunpack.c.h.b16 %v1607
  %v1698 = vunpack.c.l.b16 %v1608
  %v1699 = vunpack.c.h.b16 %v1608
  %v1700 = vunpack.c.l.b16 %v1609
  %v1701 = vunpack.c.h.b16 %v1609
  %v1702 = vunpack.c.l.b16 %v1610
  %v1703 = vunpack.c.h.b16 %v1610
  %v1704 = vunpack.c.l.b16 %v1611
  %v1705 = vunpack.c.h.b16 %v1611
  %v1706 = vunpack.c.l.b16 %v1612
  %v1707 = vunpack.c.h.b16 %v1612
  %v1708 = vunpack.c.l.b16 %v1613
  %v1709 = vunpack.c.h.b16 %v1613
  %v1710 = vpack.c.b16 %v1650, %v1646
  %v1711 = vpack.c.b16 %v1651, %v1647
  %v1712 = vpack.c.b16 %v1652, %v1648
  %v1713 = vpack.c.b16 %v1653, %v1649
  %v1714 = vpack.c.b16 %v1658, %v1654
  %v1715 = vpack.c.b16 %v1659, %v1655
  %v1716 = vpack.c.b16 %v1660, %v1656
  %v1717 = vpack.c.b16 %v1661, %v1657
  %v1718 = vpack.c.b16 %v1666, %v1662
  %v1719 = vpack.c.b16 %v1667, %v1663
  %v1720 = vpack.c.b16 %v1668, %v1664
  %v1721 = vpack.c.b16 %v1669, %v1665
  %v1722 = vpack.c.b16 %v1674, %v1670
  %v1723 = vpack.c.b16 %v1675, %v1671
  %v1724 = vpack.c.b16 %v1676, %v1672
  %v1725 = vpack.c.b16 %v1677, %v1673
  %v1726 = vpack.c.b16 %v1682, %v1678
  %v1727 = vpack.c.b16 %v1683, %v1679
  %v1728 = vpack.c.b16 %v1684, %v1680
  %v1729 = vpack.c.b16 %v1685, %v1681
  %v1730 = vpack.c.b16 %v1690, %v1686
  %v1731 = vpack.c.b16 %v1691, %v1687
  %v1732 = vpack.c.b16 %v1692, %v1688
  %v1733 = vpack.c.b16 %v1693, %v1689
  %v1734 = vpack.c.b16 %v1698, %v1694
  %v1735 = vpack.c.b16 %v1699, %v1695
  %v1736 = vpack.c.b16 %v1700, %v1696
  %v1737 = vpack.c.b16 %v1701, %v1697
  %v1738 = vpack.c.b16 %v1706, %v1702
  %v1739 = vpack.c.b16 %v1707, %v1703
  %v1740 = vpack.c.b16 %v1708, %v1704
  %v1741 = vpack.c.b16 %v1709, %v1705
  %1774 = vmatprep.subr.bf16.mxu0 %v1711
  %1775 = vmatpush1.bf16.msra.mxu0 %v1710
  %1776 = vmatprep.subr.bf16.mxu0 %v1715
  %1777 = vmatpush1.bf16.msra.mxu0 %v1714
  %1778 = vmatprep.subr.bf16.mxu0 %v1719
  %1779 = vmatpush1.bf16.msra.mxu0 %v1718
  %1780 = vmatprep.subr.bf16.mxu0 %v1723
  %1781 = vmatpush1.bf16.msra.mxu0 %v1722
  %1782 = vmatprep.subr.bf16.mxu0 %v1727
  %1783 = vmatpush1.bf16.msra.mxu0 %v1726
  %1784 = vmatprep.subr.bf16.mxu0 %v1731
  %1785 = vmatpush1.bf16.msra.mxu0 %v1730
  %1786 = vmatprep.subr.bf16.mxu0 %v1735
  %1787 = vmatpush1.bf16.msra.mxu0 %v1734
  %1788 = vmatprep.subr.bf16.mxu0 %v1739
  %1789 = vmatpush1.bf16.msra.mxu0 %v1738
  %1790 = vmatprep.subr.bf16.mxu0 0
  %1791 = vmatpush1.bf16.msra.mxu0 0
  %1792 = vmatprep.subr.bf16.mxu0 0
  %1793 = vmatpush1.bf16.msra.mxu0 0
  %1794 = vmatprep.subr.bf16.mxu0 0
  %1795 = vmatpush1.bf16.msra.mxu0 0
  %1796 = vmatprep.subr.bf16.mxu0 0
  %1797 = vmatpush1.bf16.msra.mxu0 0
  %1798 = vmatprep.subr.bf16.mxu0 0
  %1799 = vmatpush1.bf16.msra.mxu0 0
  %1800 = vmatprep.subr.bf16.mxu0 0
  %1801 = vmatpush1.bf16.msra.mxu0 0
  %1802 = vmatprep.subr.bf16.mxu0 0
  %1803 = vmatpush1.bf16.msra.mxu0 0
  %1804 = vmatprep.subr.bf16.mxu0 0
  %1805 = vmatpush1.bf16.msra.mxu0 0
  %1806 = vmatprep.mubr.bf16.mxu0 0
  %1807 = vmatmul.mubr.bf16.gmra.mrb[0].mxu0 %v1574
  %v1808 = vpop.f32.mrb[0].mxu0
  %v1809 = vadd.f32 0.0, %v1808
  %v1810 = vpop.f32.mrb[0].mxu0
  %v1811 = vadd.f32 0.0, %v1810
  %v1812 = vpop.f32.mrb[0].mxu0
  %v1813 = vpop.f32.mrb[0].mxu0
  %1814 = vdwg.mxu0
  %1815 = vmatprep.subr.bf16.mxu0 %v1713
  %1816 = vmatpush1.bf16.msra.mxu0 %v1712
  %1817 = vmatprep.subr.bf16.mxu0 %v1717
  %1818 = vmatpush1.bf16.msra.mxu0 %v1716
  %1819 = vmatprep.subr.bf16.mxu0 %v1721
  %1820 = vmatpush1.bf16.msra.mxu0 %v1720
  %1821 = vmatprep.subr.bf16.mxu0 %v1725
  %1822 = vmatpush1.bf16.msra.mxu0 %v1724
  %1823 = vmatprep.subr.bf16.mxu0 %v1729
  %1824 = vmatpush1.bf16.msra.mxu0 %v1728
  %1825 = vmatprep.subr.bf16.mxu0 %v1733
  %1826 = vmatpush1.bf16.msra.mxu0 %v1732
  %1827 = vmatprep.subr.bf16.mxu0 %v1737
  %1828 = vmatpush1.bf16.msra.mxu0 %v1736
  %1829 = vmatprep.subr.bf16.mxu0 %v1741
  %1830 = vmatpush1.bf16.msra.mxu0 %v1740
  %1831 = vmatprep.subr.bf16.mxu0 0
  %1832 = vmatpush1.bf16.msra.mxu0 0
  %1833 = vmatprep.subr.bf16.mxu0 0
  %1834 = vmatpush1.bf16.msra.mxu0 0
  %1835 = vmatprep.subr.bf16.mxu0 0
  %1836 = vmatpush1.bf16.msra.mxu0 0
  %1837 = vmatprep.subr.bf16.mxu0 0
  %1838 = vmatpush1.bf16.msra.mxu0 0
  %1839 = vmatprep.subr.bf16.mxu0 0
  %1840 = vmatpush1.bf16.msra.mxu0 0
  %1841 = vmatprep.subr.bf16.mxu0 0
  %1842 = vmatpush1.bf16.msra.mxu0 0
  %1843 = vmatprep.subr.bf16.mxu0 0
  %1844 = vmatpush1.bf16.msra.mxu0 0
  %1845 = vmatprep.subr.bf16.mxu0 0
  %1846 = vmatpush1.bf16.msra.mxu0 0
  %1847 = vmatprep.mubr.bf16.mxu0 0
  %1848 = vmatmul.mubr.bf16.gmra.mrb[0].mxu0 %v1574
  %v1849 = vpop.f32.mrb[0].mxu0
  %v1850 = vadd.f32 0.0, %v1849
  %v1851 = vpop.f32.mrb[0].mxu0
  %v1852 = vadd.f32 0.0, %v1851
  %v1853 = vpop.f32.mrb[0].mxu0
  %v1854 = vpop.f32.mrb[0].mxu0
  %1855 = vdwg.mxu0
  %v1856 = vadd.f32 %v1578, %v1809
  %v1857 = vadd.f32 %v1579, %v1811
  %v1858 = vadd.f32 %v1580, %v1850
  %v1859 = vadd.f32 %v1581, %v1852
  %v1860 = vxor.u32 %v1856, 2147483648
  %v1861 = vmul.f32 %v1860, 1.442695
  %v1862 = vpow.pop %v1861
  %v1863 = vadd.f32 %v1862, 1.0
  %v1864 = vrcp.pop %v1863
  %v1865 = vmul.f32 1.0, %v1864
  %v1866 = vxor.u32 %v1857, 2147483648
  %v1867 = vmul.f32 %v1866, 1.442695
  %v1868 = vpow.pop %v1867
  %v1869 = vadd.f32 %v1868, 1.0
  %v1870 = vrcp.pop %v1869
  %v1871 = vmul.f32 1.0, %v1870
  %v1872 = vtanh.pop %v1858
  %v1873 = vxor.u32 %v1859, 2147483648
  %v1874 = vmul.f32 %v1873, 1.442695
  %v1875 = vpow.pop %v1874
  %v1876 = vadd.f32 %v1875, 1.0
  %v1877 = vrcp.pop %v1876
  %v1878 = vmul.f32 1.0, %v1877
  %v1879 = vmul.f32 %v1871, %v1571
  %v1880 = vmul.f32 %v1865, %v1872
  %v1881 = vadd.f32 %v1879, %v1880
  %v1882 = vtanh.pop %v1881
  %v1883 = vmul.f32 %v1878, %v1882
  %v1884 = vpack.c.bf16 %v1883, %v1883
  %s1885 = scalar_lea.vmem %s4, 20
  %1886 = vst [vmem:[%s1885] sm:$0xf] %v1884
  %s1887 = scalar_lea.vmem %s0, 192
  %v1888 = vld [vmem:[%s1887] sm:$0xff]
  %v1889 = vld [vmem:[%s1887 + $0x8] sm:$0xff]
  %v1890 = vld [vmem:[%s1887 + $0x10] sm:$0xff]
  %v1891 = vld [vmem:[%s1887 + $0x18] sm:$0xff]
  %v1892 = vld [vmem:[%s1] sm:$0xff]
  %v1893 = vld [vmem:[%s1 + $0x8] sm:$0xff]
  %v1894 = vld [vmem:[%s1 + $0x10] sm:$0xff]
  %v1895 = vld [vmem:[%s1 + $0x18] sm:$0xff]
  %v1896 = vld [vmem:[%s1 + $0x20] sm:$0xff]
  %v1897 = vld [vmem:[%s1 + $0x28] sm:$0xff]
  %v1898 = vld [vmem:[%s1 + $0x30] sm:$0xff]
  %v1899 = vld [vmem:[%s1 + $0x38] sm:$0xff]
  %v1900 = vld [vmem:[%s1 + $0x40] sm:$0xff]
  %v1901 = vld [vmem:[%s1 + $0x48] sm:$0xff]
  %v1902 = vld [vmem:[%s1 + $0x50] sm:$0xff]
  %v1903 = vld [vmem:[%s1 + $0x58] sm:$0xff]
  %v1904 = vld [vmem:[%s1 + $0x60] sm:$0xff]
  %v1905 = vld [vmem:[%s1 + $0x68] sm:$0xff]
  %v1906 = vld [vmem:[%s1 + $0x70] sm:$0xff]
  %v1907 = vld [vmem:[%s1 + $0x78] sm:$0xff]
  %v1908 = vld [vmem:[%s1 + $0x80] sm:$0xff]
  %v1909 = vld [vmem:[%s1 + $0x88] sm:$0xff]
  %v1910 = vld [vmem:[%s1 + $0x90] sm:$0xff]
  %v1911 = vld [vmem:[%s1 + $0x98] sm:$0xff]
  %v1912 = vld [vmem:[%s1 + $0xa0] sm:$0xff]
  %v1913 = vld [vmem:[%s1 + $0xa8] sm:$0xff]
  %v1914 = vld [vmem:[%s1 + $0xb0] sm:$0xff]
  %v1915 = vld [vmem:[%s1 + $0xb8] sm:$0xff]
  %v1916 = vld [vmem:[%s1 + $0xc0] sm:$0xff]
  %v1917 = vld [vmem:[%s1 + $0xc8] sm:$0xff]
  %v1918 = vld [vmem:[%s1 + $0xd0] sm:$0xff]
  %v1919 = vld [vmem:[%s1 + $0xd8] sm:$0xff]
  %v1920 = vld [vmem:[%s1 + $0xe0] sm:$0xff]
  %v1921 = vld [vmem:[%s1 + $0xe8] sm:$0xff]
  %v1922 = vld [vmem:[%s1 + $0xf0] sm:$0xff]
  %v1923 = vld [vmem:[%s1 + $0xf8] sm:$0xff]
  %v1956 = vunpack.c.l.b16 %v1892
  %v1957 = vunpack.c.h.b16 %v1892
  %v1958 = vunpack.c.l.b16 %v1893
  %v1959 = vunpack.c.h.b16 %v1893
  %v1960 = vunpack.c.l.b16 %v1894
  %v1961 = vunpack.c.h.b16 %v1894
  %v1962 = vunpack.c.l.b16 %v1895
  %v1963 = vunpack.c.h.b16 %v1895
  %v1964 = vunpack.c.l.b16 %v1896
  %v1965 = vunpack.c.h.b16 %v1896
  %v1966 = vunpack.c.l.b16 %v1897
  %v1967 = vunpack.c.h.b16 %v1897
  %v1968 = vunpack.c.l.b16 %v1898
  %v1969 = vunpack.c.h.b16 %v1898
  %v1970 = vunpack.c.l.b16 %v1899
  %v1971 = vunpack.c.h.b16 %v1899
  %v1972 = vunpack.c.l.b16 %v1900
  %v1973 = vunpack.c.h.b16 %v1900
  %v1974 = vunpack.c.l.b16 %v1901
  %v1975 = vunpack.c.h.b16 %v1901
  %v1976 = vunpack.c.l.b16 %v1902
  %v1977 = vunpack.c.h.b16 %v1902
  %v1978 = vunpack.c.l.b16 %v1903
  %v1979 = vunpack.c.h.b16 %v1903
  %v1980 = vunpack.c.l.b16 %v1904
  %v1981 = vunpack.c.h.b16 %v1904
  %v1982 = vunpack.c.l.b16 %v1905
  %v1983 = vunpack.c.h.b16 %v1905
  %v1984 = vunpack.c.l.b16 %v1906
  %v1985 = vunpack.c.h.b16 %v1906
  %v1986 = vunpack.c.l.b16 %v1907
  %v1987 = vunpack.c.h.b16 %v1907
  %v1988 = vunpack.c.l.b16 %v1908
  %v1989 = vunpack.c.h.b16 %v1908
  %v1990 = vunpack.c.l.b16 %v1909
  %v1991 = vunpack.c.h.b16 %v1909
  %v1992 = vunpack.c.l.b16 %v1910
  %v1993 = vunpack.c.h.b16 %v1910
  %v1994 = vunpack.c.l.b16 %v1911
  %v1995 = vunpack.c.h.b16 %v1911
  %v1996 = vunpack.c.l.b16 %v1912
  %v1997 = vunpack.c.h.b16 %v1912
  %v1998 = vunpack.c.l.b16 %v1913
  %v1999 = vunpack.c.h.b16 %v1913
  %v2000 = vunpack.c.l.b16 %v1914
  %v2001 = vunpack.c.h.b16 %v1914
  %v2002 = vunpack.c.l.b16 %v1915
  %v2003 = vunpack.c.h.b16 %v1915
  %v2004 = vunpack.c.l.b16 %v1916
  %v2005 = vunpack.c.h.b16 %v1916
  %v2006 = vunpack.c.l.b16 %v1917
  %v2007 = vunpack.c.h.b16 %v1917
  %v2008 = vunpack.c.l.b16 %v1918
  %v2009 = vunpack.c.h.b16 %v1918
  %v2010 = vunpack.c.l.b16 %v1919
  %v2011 = vunpack.c.h.b16 %v1919
  %v2012 = vunpack.c.l.b16 %v1920
  %v2013 = vunpack.c.h.b16 %v1920
  %v2014 = vunpack.c.l.b16 %v1921
  %v2015 = vunpack.c.h.b16 %v1921
  %v2016 = vunpack.c.l.b16 %v1922
  %v2017 = vunpack.c.h.b16 %v1922
  %v2018 = vunpack.c.l.b16 %v1923
  %v2019 = vunpack.c.h.b16 %v1923
  %v2020 = vpack.c.b16 %v1960, %v1956
  %v2021 = vpack.c.b16 %v1961, %v1957
  %v2022 = vpack.c.b16 %v1962, %v1958
  %v2023 = vpack.c.b16 %v1963, %v1959
  %v2024 = vpack.c.b16 %v1968, %v1964
  %v2025 = vpack.c.b16 %v1969, %v1965
  %v2026 = vpack.c.b16 %v1970, %v1966
  %v2027 = vpack.c.b16 %v1971, %v1967
  %v2028 = vpack.c.b16 %v1976, %v1972
  %v2029 = vpack.c.b16 %v1977, %v1973
  %v2030 = vpack.c.b16 %v1978, %v1974
  %v2031 = vpack.c.b16 %v1979, %v1975
  %v2032 = vpack.c.b16 %v1984, %v1980
  %v2033 = vpack.c.b16 %v1985, %v1981
  %v2034 = vpack.c.b16 %v1986, %v1982
  %v2035 = vpack.c.b16 %v1987, %v1983
  %v2036 = vpack.c.b16 %v1992, %v1988
  %v2037 = vpack.c.b16 %v1993, %v1989
  %v2038 = vpack.c.b16 %v1994, %v1990
  %v2039 = vpack.c.b16 %v1995, %v1991
  %v2040 = vpack.c.b16 %v2000, %v1996
  %v2041 = vpack.c.b16 %v2001, %v1997
  %v2042 = vpack.c.b16 %v2002, %v1998
  %v2043 = vpack.c.b16 %v2003, %v1999
  %v2044 = vpack.c.b16 %v2008, %v2004
  %v2045 = vpack.c.b16 %v2009, %v2005
  %v2046 = vpack.c.b16 %v2010, %v2006
  %v2047 = vpack.c.b16 %v2011, %v2007
  %v2048 = vpack.c.b16 %v2016, %v2012
  %v2049 = vpack.c.b16 %v2017, %v2013
  %v2050 = vpack.c.b16 %v2018, %v2014
  %v2051 = vpack.c.b16 %v2019, %v2015
  %2084 = vmatprep.subr.bf16.mxu0 %v2021
  %2085 = vmatpush1.bf16.msra.mxu0 %v2020
  %2086 = vmatprep.subr.bf16.mxu0 %v2025
  %2087 = vmatpush1.bf16.msra.mxu0 %v2024
  %2088 = vmatprep.subr.bf16.mxu0 %v2029
  %2089 = vmatpush1.bf16.msra.mxu0 %v2028
  %2090 = vmatprep.subr.bf16.mxu0 %v2033
  %2091 = vmatpush1.bf16.msra.mxu0 %v2032
  %2092 = vmatprep.subr.bf16.mxu0 %v2037
  %2093 = vmatpush1.bf16.msra.mxu0 %v2036
  %2094 = vmatprep.subr.bf16.mxu0 %v2041
  %2095 = vmatpush1.bf16.msra.mxu0 %v2040
  %2096 = vmatprep.subr.bf16.mxu0 %v2045
  %2097 = vmatpush1.bf16.msra.mxu0 %v2044
  %2098 = vmatprep.subr.bf16.mxu0 %v2049
  %2099 = vmatpush1.bf16.msra.mxu0 %v2048
  %2100 = vmatprep.subr.bf16.mxu0 0
  %2101 = vmatpush1.bf16.msra.mxu0 0
  %2102 = vmatprep.subr.bf16.mxu0 0
  %2103 = vmatpush1.bf16.msra.mxu0 0
  %2104 = vmatprep.subr.bf16.mxu0 0
  %2105 = vmatpush1.bf16.msra.mxu0 0
  %2106 = vmatprep.subr.bf16.mxu0 0
  %2107 = vmatpush1.bf16.msra.mxu0 0
  %2108 = vmatprep.subr.bf16.mxu0 0
  %2109 = vmatpush1.bf16.msra.mxu0 0
  %2110 = vmatprep.subr.bf16.mxu0 0
  %2111 = vmatpush1.bf16.msra.mxu0 0
  %2112 = vmatprep.subr.bf16.mxu0 0
  %2113 = vmatpush1.bf16.msra.mxu0 0
  %2114 = vmatprep.subr.bf16.mxu0 0
  %2115 = vmatpush1.bf16.msra.mxu0 0
  %2116 = vmatprep.mubr.bf16.mxu0 0
  %2117 = vmatmul.mubr.bf16.gmra.mrb[0].mxu0 %v1884
  %v2118 = vpop.f32.mrb[0].mxu0
  %v2119 = vadd.f32 0.0, %v2118
  %v2120 = vpop.f32.mrb[0].mxu0
  %v2121 = vadd.f32 0.0, %v2120
  %v2122 = vpop.f32.mrb[0].mxu0
  %v2123 = vpop.f32.mrb[0].mxu0
  %2124 = vdwg.mxu0
  %2125 = vmatprep.subr.bf16.mxu0 %v2023
  %2126 = vmatpush1.bf16.msra.mxu0 %v2022
  %2127 = vmatprep.subr.bf16.mxu0 %v2027
  %2128 = vmatpush1.bf16.msra.mxu0 %v2026
  %2129 = vmatprep.subr.bf16.mxu0 %v2031
  %2130 = vmatpush1.bf16.msra.mxu0 %v2030
  %2131 = vmatprep.subr.bf16.mxu0 %v2035
  %2132 = vmatpush1.bf16.msra.mxu0 %v2034
  %2133 = vmatprep.subr.bf16.mxu0 %v2039
  %2134 = vmatpush1.bf16.msra.mxu0 %v2038
  %2135 = vmatprep.subr.bf16.mxu0 %v2043
  %2136 = vmatpush1.bf16.msra.mxu0 %v2042
  %2137 = vmatprep.subr.bf16.mxu0 %v2047
  %2138 = vmatpush1.bf16.msra.mxu0 %v2046
  %2139 = vmatprep.subr.bf16.mxu0 %v2051
  %2140 = vmatpush1.bf16.msra.mxu0 %v2050
  %2141 = vmatprep.subr.bf16.mxu0 0
  %2142 = vmatpush1.bf16.msra.mxu0 0
  %2143 = vmatprep.subr.bf16.mxu0 0
  %2144 = vmatpush1.bf16.msra.mxu0 0
  %2145 = vmatprep.subr.bf16.mxu0 0
  %2146 = vmatpush1.bf16.msra.mxu0 0
  %2147 = vmatprep.subr.bf16.mxu0 0
  %2148 = vmatpush1.bf16.msra.mxu0 0
  %2149 = vmatprep.subr.bf16.mxu0 0
  %2150 = vmatpush1.bf16.msra.mxu0 0
  %2151 = vmatprep.subr.bf16.mxu0 0
  %2152 = vmatpush1.bf16.msra.mxu0 0
  %2153 = vmatprep.subr.bf16.mxu0 0
  %2154 = vmatpush1.bf16.msra.mxu0 0
  %2155 = vmatprep.subr.bf16.mxu0 0
  %2156 = vmatpush1.bf16.msra.mxu0 0
  %2157 = vmatprep.mubr.bf16.mxu0 0
  %2158 = vmatmul.mubr.bf16.gmra.mrb[0].mxu0 %v1884
  %v2159 = vpop.f32.mrb[0].mxu0
  %v2160 = vadd.f32 0.0, %v2159
  %v2161 = vpop.f32.mrb[0].mxu0
  %v2162 = vadd.f32 0.0, %v2161
  %v2163 = vpop.f32.mrb[0].mxu0
  %v2164 = vpop.f32.mrb[0].mxu0
  %2165 = vdwg.mxu0
  %v2166 = vadd.f32 %v1888, %v2119
  %v2167 = vadd.f32 %v1889, %v2121
  %v2168 = vadd.f32 %v1890, %v2160
  %v2169 = vadd.f32 %v1891, %v2162
  %v2170 = vxor.u32 %v2166, 2147483648
  %v2171 = vmul.f32 %v2170, 1.442695
  %v2172 = vpow.pop %v2171
  %v2173 = vadd.f32 %v2172, 1.0
  %v2174 = vrcp.pop %v2173
  %v2175 = vmul.f32 1.0, %v2174
  %v2176 = vxor.u32 %v2167, 2147483648
  %v2177 = vmul.f32 %v2176, 1.442695
  %v2178 = vpow.pop %v2177
  %v2179 = vadd.f32 %v2178, 1.0
  %v2180 = vrcp.pop %v2179
  %v2181 = vmul.f32 1.0, %v2180
  %v2182 = vtanh.pop %v2168
  %v2183 = vxor.u32 %v2169, 2147483648
  %v2184 = vmul.f32 %v2183, 1.442695
  %v2185 = vpow.pop %v2184
  %v2186 = vadd.f32 %v2185, 1.0
  %v2187 = vrcp.pop %v2186
  %v2188 = vmul.f32 1.0, %v2187
  %v2189 = vmul.f32 %v2181, %v1881
  %v2190 = vmul.f32 %v2175, %v2182
  %v2191 = vadd.f32 %v2189, %v2190
  %v2192 = vtanh.pop %v2191
  %v2193 = vmul.f32 %v2188, %v2192
  %v2194 = vpack.c.bf16 %v2193, %v2193
  %s2195 = scalar_lea.vmem %s4, 24
  %2196 = vst [vmem:[%s2195] sm:$0xf] %v2194
  %s2197 = scalar_lea.vmem %s0, 224
  %v2198 = vld [vmem:[%s2197] sm:$0xff]
  %v2199 = vld [vmem:[%s2197 + $0x8] sm:$0xff]
  %v2200 = vld [vmem:[%s2197 + $0x10] sm:$0xff]
  %v2201 = vld [vmem:[%s2197 + $0x18] sm:$0xff]
  %v2202 = vld [vmem:[%s1] sm:$0xff]
  %v2203 = vld [vmem:[%s1 + $0x8] sm:$0xff]
  %v2204 = vld [vmem:[%s1 + $0x10] sm:$0xff]
  %v2205 = vld [vmem:[%s1 + $0x18] sm:$0xff]
  %v2206 = vld [vmem:[%s1 + $0x20] sm:$0xff]
  %v2207 = vld [vmem:[%s1 + $0x28] sm:$0xff]
  %v2208 = vld [vmem:[%s1 + $0x30] sm:$0xff]
  %v2209 = vld [vmem:[%s1 + $0x38] sm:$0xff]
  %v2210 = vld [vmem:[%s1 + $0x40] sm:$0xff]
  %v2211 = vld [vmem:[%s1 + $0x48] sm:$0xff]
  %v2212 = vld [vmem:[%s1 + $0x50] sm:$0xff]
  %v2213 = vld [vmem:[%s1 + $0x58] sm:$0xff]
  %v2214 = vld [vmem:[%s1 + $0x60] sm:$0xff]
  %v2215 = vld [vmem:[%s1 + $0x68] sm:$0xff]
  %v2216 = vld [vmem:[%s1 + $0x70] sm:$0xff]
  %v2217 = vld [vmem:[%s1 + $0x78] sm:$0xff]
  %v2218 = vld [vmem:[%s1 + $0x80] sm:$0xff]
  %v2219 = vld [vmem:[%s1 + $0x88] sm:$0xff]
  %v2220 = vld [vmem:[%s1 + $0x90] sm:$0xff]
  %v2221 = vld [vmem:[%s1 + $0x98] sm:$0xff]
  %v2222 = vld [vmem:[%s1 + $0xa0] sm:$0xff]
  %v2223 = vld [vmem:[%s1 + $0xa8] sm:$0xff]
  %v2224 = vld [vmem:[%s1 + $0xb0] sm:$0xff]
  %v2225 = vld [vmem:[%s1 + $0xb8] sm:$0xff]
  %v2226 = vld [vmem:[%s1 + $0xc0] sm:$0xff]
  %v2227 = vld [vmem:[%s1 + $0xc8] sm:$0xff]
  %v2228 = vld [vmem:[%s1 + $0xd0] sm:$0xff]
  %v2229 = vld [vmem:[%s1 + $0xd8] sm:$0xff]
  %v2230 = vld [vmem:[%s1 + $0xe0] sm:$0xff]
  %v2231 = vld [vmem:[%s1 + $0xe8] sm:$0xff]
  %v2232 = vld [vmem:[%s1 + $0xf0] sm:$0xff]
  %v2233 = vld [vmem:[%s1 + $0xf8] sm:$0xff]
  %v2266 = vunpack.c.l.b16 %v2202
  %v2267 = vunpack.c.h.b16 %v2202
  %v2268 = vunpack.c.l.b16 %v2203
  %v2269 = vunpack.c.h.b16 %v2203
  %v2270 = vunpack.c.l.b16 %v2204
  %v2271 = vunpack.c.h.b16 %v2204
  %v2272 = vunpack.c.l.b16 %v2205
  %v2273 = vunpack.c.h.b16 %v2205
  %v2274 = vunpack.c.l.b16 %v2206
  %v2275 = vunpack.c.h.b16 %v2206
  %v2276 = vunpack.c.l.b16 %v2207
  %v2277 = vunpack.c.h.b16 %v2207
  %v2278 = vunpack.c.l.b16 %v2208
  %v2279 = vunpack.c.h.b16 %v2208
  %v2280 = vunpack.c.l.b16 %v2209
  %v2281 = vunpack.c.h.b16 %v2209
  %v2282 = vunpack.c.l.b16 %v2210
  %v2283 = vunpack.c.h.b16 %v2210
  %v2284 = vunpack.c.l.b16 %v2211
  %v2285 = vunpack.c.h.b16 %v2211
  %v2286 = vunpack.c.l.b16 %v2212
  %v2287 = vunpack.c.h.b16 %v2212
  %v2288 = vunpack.c.l.b16 %v2213
  %v2289 = vunpack.c.h.b16 %v2213
  %v2290 = vunpack.c.l.b16 %v2214
  %v2291 = vunpack.c.h.b16 %v2214
  %v2292 = vunpack.c.l.b16 %v2215
  %v2293 = vunpack.c.h.b16 %v2215
  %v2294 = vunpack.c.l.b16 %v2216
  %v2295 = vunpack.c.h.b16 %v2216
  %v2296 = vunpack.c.l.b16 %v2217
  %v2297 = vunpack.c.h.b16 %v2217
  %v2298 = vunpack.c.l.b16 %v2218
  %v2299 = vunpack.c.h.b16 %v2218
  %v2300 = vunpack.c.l.b16 %v2219
  %v2301 = vunpack.c.h.b16 %v2219
  %v2302 = vunpack.c.l.b16 %v2220
  %v2303 = vunpack.c.h.b16 %v2220
  %v2304 = vunpack.c.l.b16 %v2221
  %v2305 = vunpack.c.h.b16 %v2221
  %v2306 = vunpack.c.l.b16 %v2222
  %v2307 = vunpack.c.h.b16 %v2222
  %v2308 = vunpack.c.l.b16 %v2223
  %v2309 = vunpack.c.h.b16 %v2223
  %v2310 = vunpack.c.l.b16 %v2224
  %v2311 = vunpack.c.h.b16 %v2224
  %v2312 = vunpack.c.l.b16 %v2225
  %v2313 = vunpack.c.h.b16 %v2225
  %v2314 = vunpack.c.l.b16 %v2226
  %v2315 = vunpack.c.h.b16 %v2226
  %v2316 = vunpack.c.l.b16 %v2227
  %v2317 = vunpack.c.h.b16 %v2227
  %v2318 = vunpack.c.l.b16 %v2228
  %v2319 = vunpack.c.h.b16 %v2228
  %v2320 = vunpack.c.l.b16 %v2229
  %v2321 = vunpack.c.h.b16 %v2229
  %v2322 = vunpack.c.l.b16 %v2230
  %v2323 = vunpack.c.h.b16 %v2230
  %v2324 = vunpack.c.l.b16 %v2231
  %v2325 = vunpack.c.h.b16 %v2231
  %v2326 = vunpack.c.l.b16 %v2232
  %v2327 = vunpack.c.h.b16 %v2232
  %v2328 = vunpack.c.l.b16 %v2233
  %v2329 = vunpack.c.h.b16 %v2233
  %v2330 = vpack.c.b16 %v2270, %v2266
  %v2331 = vpack.c.b16 %v2271, %v2267
  %v2332 = vpack.c.b16 %v2272, %v2268
  %v2333 = vpack.c.b16 %v2273, %v2269
  %v2334 = vpack.c.b16 %v2278, %v2274
  %v2335 = vpack.c.b16 %v2279, %v2275
  %v2336 = vpack.c.b16 %v2280, %v2276
  %v2337 = vpack.c.b16 %v2281, %v2277
  %v2338 = vpack.c.b16 %v2286, %v2282
  %v2339 = vpack.c.b16 %v2287, %v2283
  %v2340 = vpack.c.b16 %v2288, %v2284
  %v2341 = vpack.c.b16 %v2289, %v2285
  %v2342 = vpack.c.b16 %v2294, %v2290
  %v2343 = vpack.c.b16 %v2295, %v2291
  %v2344 = vpack.c.b16 %v2296, %v2292
  %v2345 = vpack.c.b16 %v2297, %v2293
  %v2346 = vpack.c.b16 %v2302, %v2298
  %v2347 = vpack.c.b16 %v2303, %v2299
  %v2348 = vpack.c.b16 %v2304, %v2300
  %v2349 = vpack.c.b16 %v2305, %v2301
  %v2350 = vpack.c.b16 %v2310, %v2306
  %v2351 = vpack.c.b16 %v2311, %v2307
  %v2352 = vpack.c.b16 %v2312, %v2308
  %v2353 = vpack.c.b16 %v2313, %v2309
  %v2354 = vpack.c.b16 %v2318, %v2314
  %v2355 = vpack.c.b16 %v2319, %v2315
  %v2356 = vpack.c.b16 %v2320, %v2316
  %v2357 = vpack.c.b16 %v2321, %v2317
  %v2358 = vpack.c.b16 %v2326, %v2322
  %v2359 = vpack.c.b16 %v2327, %v2323
  %v2360 = vpack.c.b16 %v2328, %v2324
  %v2361 = vpack.c.b16 %v2329, %v2325
  %2394 = vmatprep.subr.bf16.mxu0 %v2331
  %2395 = vmatpush1.bf16.msra.mxu0 %v2330
  %2396 = vmatprep.subr.bf16.mxu0 %v2335
  %2397 = vmatpush1.bf16.msra.mxu0 %v2334
  %2398 = vmatprep.subr.bf16.mxu0 %v2339
  %2399 = vmatpush1.bf16.msra.mxu0 %v2338
  %2400 = vmatprep.subr.bf16.mxu0 %v2343
  %2401 = vmatpush1.bf16.msra.mxu0 %v2342
  %2402 = vmatprep.subr.bf16.mxu0 %v2347
  %2403 = vmatpush1.bf16.msra.mxu0 %v2346
  %2404 = vmatprep.subr.bf16.mxu0 %v2351
  %2405 = vmatpush1.bf16.msra.mxu0 %v2350
  %2406 = vmatprep.subr.bf16.mxu0 %v2355
  %2407 = vmatpush1.bf16.msra.mxu0 %v2354
  %2408 = vmatprep.subr.bf16.mxu0 %v2359
  %2409 = vmatpush1.bf16.msra.mxu0 %v2358
  %2410 = vmatprep.subr.bf16.mxu0 0
  %2411 = vmatpush1.bf16.msra.mxu0 0
  %2412 = vmatprep.subr.bf16.mxu0 0
  %2413 = vmatpush1.bf16.msra.mxu0 0
  %2414 = vmatprep.subr.bf16.mxu0 0
  %2415 = vmatpush1.bf16.msra.mxu0 0
  %2416 = vmatprep.subr.bf16.mxu0 0
  %2417 = vmatpush1.bf16.msra.mxu0 0
  %2418 = vmatprep.subr.bf16.mxu0 0
  %2419 = vmatpush1.bf16.msra.mxu0 0
  %2420 = vmatprep.subr.bf16.mxu0 0
  %2421 = vmatpush1.bf16.msra.mxu0 0
  %2422 = vmatprep.subr.bf16.mxu0 0
  %2423 = vmatpush1.bf16.msra.mxu0 0
  %2424 = vmatprep.subr.bf16.mxu0 0
  %2425 = vmatpush1.bf16.msra.mxu0 0
  %2426 = vmatprep.mubr.bf16.mxu0 0
  %2427 = vmatmul.mubr.bf16.gmra.mrb[0].mxu0 %v2194
  %v2428 = vpop.f32.mrb[0].mxu0
  %v2429 = vadd.f32 0.0, %v2428
  %v2430 = vpop.f32.mrb[0].mxu0
  %v2431 = vadd.f32 0.0, %v2430
  %v2432 = vpop.f32.mrb[0].mxu0
  %v2433 = vpop.f32.mrb[0].mxu0
  %2434 = vdwg.mxu0
  %2435 = vmatprep.subr.bf16.mxu0 %v2333
  %2436 = vmatpush1.bf16.msra.mxu0 %v2332
  %2437 = vmatprep.subr.bf16.mxu0 %v2337
  %2438 = vmatpush1.bf16.msra.mxu0 %v2336
  %2439 = vmatprep.subr.bf16.mxu0 %v2341
  %2440 = vmatpush1.bf16.msra.mxu0 %v2340
  %2441 = vmatprep.subr.bf16.mxu0 %v2345
  %2442 = vmatpush1.bf16.msra.mxu0 %v2344
  %2443 = vmatprep.subr.bf16.mxu0 %v2349
  %2444 = vmatpush1.bf16.msra.mxu0 %v2348
  %2445 = vmatprep.subr.bf16.mxu0 %v2353
  %2446 = vmatpush1.bf16.msra.mxu0 %v2352
  %2447 = vmatprep.subr.bf16.mxu0 %v2357
  %2448 = vmatpush1.bf16.msra.mxu0 %v2356
  %2449 = vmatprep.subr.bf16.mxu0 %v2361
  %2450 = vmatpush1.bf16.msra.mxu0 %v2360
  %2451 = vmatprep.subr.bf16.mxu0 0
  %2452 = vmatpush1.bf16.msra.mxu0 0
  %2453 = vmatprep.subr.bf16.mxu0 0
  %2454 = vmatpush1.bf16.msra.mxu0 0
  %2455 = vmatprep.subr.bf16.mxu0 0
  %2456 = vmatpush1.bf16.msra.mxu0 0
  %2457 = vmatprep.subr.bf16.mxu0 0
  %2458 = vmatpush1.bf16.msra.mxu0 0
  %2459 = vmatprep.subr.bf16.mxu0 0
  %2460 = vmatpush1.bf16.msra.mxu0 0
  %2461 = vmatprep.subr.bf16.mxu0 0
  %2462 = vmatpush1.bf16.msra.mxu0 0
  %2463 = vmatprep.subr.bf16.mxu0 0
  %2464 = vmatpush1.bf16.msra.mxu0 0
  %2465 = vmatprep.subr.bf16.mxu0 0
  %2466 = vmatpush1.bf16.msra.mxu0 0
  %2467 = vmatprep.mubr.bf16.mxu0 0
  %2468 = vmatmul.mubr.bf16.gmra.mrb[0].mxu0 %v2194
  %v2469 = vpop.f32.mrb[0].mxu0
  %v2470 = vadd.f32 0.0, %v2469
  %v2471 = vpop.f32.mrb[0].mxu0
  %v2472 = vadd.f32 0.0, %v2471
  %v2473 = vpop.f32.mrb[0].mxu0
  %v2474 = vpop.f32.mrb[0].mxu0
  %2475 = vdwg.mxu0
  %v2476 = vadd.f32 %v2198, %v2429
  %v2477 = vadd.f32 %v2199, %v2431
  %v2478 = vadd.f32 %v2200, %v2470
  %v2479 = vadd.f32 %v2201, %v2472
  %v2480 = vxor.u32 %v2476, 2147483648
  %v2481 = vmul.f32 %v2480, 1.442695
  %v2482 = vpow.pop %v2481
  %v2483 = vadd.f32 %v2482, 1.0
  %v2484 = vrcp.pop %v2483
  %v2485 = vmul.f32 1.0, %v2484
  %v2486 = vxor.u32 %v2477, 2147483648
  %v2487 = vmul.f32 %v2486, 1.442695
  %v2488 = vpow.pop %v2487
  %v2489 = vadd.f32 %v2488, 1.0
  %v2490 = vrcp.pop %v2489
  %v2491 = vmul.f32 1.0, %v2490
  %v2492 = vtanh.pop %v2478
  %v2493 = vxor.u32 %v2479, 2147483648
  %v2494 = vmul.f32 %v2493, 1.442695
  %v2495 = vpow.pop %v2494
  %v2496 = vadd.f32 %v2495, 1.0
  %v2497 = vrcp.pop %v2496
  %v2498 = vmul.f32 1.0, %v2497
  %v2499 = vmul.f32 %v2491, %v2191
  %v2500 = vmul.f32 %v2485, %v2492
  %v2501 = vadd.f32 %v2499, %v2500
  %v2502 = vtanh.pop %v2501
  %v2503 = vmul.f32 %v2498, %v2502
  %v2504 = vpack.c.bf16 %v2503, %v2503
  %s2505 = scalar_lea.vmem %s4, 28
  %2506 = vst [vmem:[%s2505] sm:$0xf] %v2504
  %2507 = vst [vmem:[#allocation2] sm:$0xff] %v2503
  %2508 = vst [vmem:[#allocation3] sm:$0xff] %v2501
  // Predicated region
  $region22: #{lstm_forward.6} parent=0 // pred_check
    _
  $region23: #{lstm_forward.6} parent=0 // pred_check_branch
    %2510 = sbr.rel (0) target = $region25
  $region24: #{lstm_forward.6} parent=0 // pred_region
    _
  $region25: #{lstm_forward.6} parent=0 // pred_fallthru
    _
  // Predicated region
  $region26: #{lstm_forward.6} parent=0 // pred_check
    _
  $region27: #{lstm_forward.6} parent=0 // pred_check_branch
    %2512 = sbr.rel (0) target = $region29
  $region28: #{lstm_forward.6} parent=0 // pred_region
    _
  $region29: #{lstm_forward.6} parent=0 // pred_fallthru
    _

</llo_original>
